<compile_context>
chip_gen: v7x
topology: tpu7x:2x2x1
jax: 0.10.0
libtpu: 0.0.40
codegen_flags: <defaults>
</compile_context>

<pallas_src>
import functools

import jax
import jax.numpy as jnp
from jax.experimental import pallas as pl


def _round_up(n, m):
    return ((n + m - 1) // m) * m


# --------------------------- fused LSTMNet kernel -----------------------------
def _lstm_net_kernel(x_ref, w_ref, b_ref, wfc_ref, bfc_ref, h0_ref, c0_ref,
                     y_ref, hN_ref, cN_ref, *, n_layers, seq_len, hp):
    """Fused multi-layer LSTM recurrence + ReLU + Linear head.

    x_ref   : (T, Bp, Hp)      zero-padded input sequence, seq-major
    w_ref   : (L, 2*Hp, 4*Hp)  packed [W_ih^T ; W_hh^T]; gate g occupies
                               lanes [g*Hp, g*Hp + H) of the 4*Hp axis
    b_ref   : (L, 1, 4*Hp)     packed b_ih + b_hh (same gate layout)
    wfc_ref : (Hp, Op)         packed fc weight (W_fc^T, zero padded)
    bfc_ref : (1, Op)
    h0_ref, c0_ref : (L, Bp, Hp)
    outputs: y (Bp, Op), hN/cN (L, Bp, Hp)
    """
    Hp = hp

    def lstm_cell(gates, c_prev):
        # PyTorch gate order: input, forget, cell(g), output; each gate is a
        # 128-lane-aligned slice -> free Ref-view style slicing, no XLU shuffle.
        i_g = jax.nn.sigmoid(gates[:, 0 * Hp:1 * Hp])
        f_g = jax.nn.sigmoid(gates[:, 1 * Hp:2 * Hp])
        g_g = jnp.tanh(gates[:, 2 * Hp:3 * Hp])
        o_g = jax.nn.sigmoid(gates[:, 3 * Hp:4 * Hp])
        c_new = f_g * c_prev + i_g * g_g
        h_new = o_g * jnp.tanh(c_new)
        return h_new, c_new

    hs0 = tuple(h0_ref[l] for l in range(n_layers))
    cs0 = tuple(c0_ref[l] for l in range(n_layers))

    def step(t, carry):
        hs, cs = carry
        inp = x_ref[t]                                   # (Bp, Hp)
        new_hs, new_cs = [], []
        for l in range(n_layers):
            # single merged gate matmul: [inp | h_prev] @ [W_ih^T ; W_hh^T]
            comb = jnp.concatenate([inp, hs[l]], axis=-1)            # (Bp, 2Hp)
            gates = (jnp.dot(comb, w_ref[l],
                             preferred_element_type=jnp.float32)
                     + b_ref[l])                                     # (Bp, 4Hp)
            h_new, c_new = lstm_cell(gates, cs[l])
            new_hs.append(h_new)
            new_cs.append(c_new)
            inp = h_new
        return tuple(new_hs), tuple(new_cs)

    hs, cs = jax.lax.fori_loop(0, seq_len, step, (hs0, cs0), unroll=True)

    # write final states exactly once (lane-dense (Bp, Hp) slabs)
    for l in range(n_layers):
        hN_ref[l] = hs[l]
        cN_ref[l] = cs[l]

    # fused ReLU + fc on the top layer's final hidden state
    h_top = jnp.maximum(hs[-1], 0.0)
    y_ref[...] = (jnp.dot(h_top, wfc_ref[...],
                          preferred_element_type=jnp.float32)
                  + bfc_ref[...])


# ------------------------------ weight packing --------------------------------
def pack_params(params, hidden_dim):
    """One-time packing: transpose, fuse biases, pad to (sublane, lane) tiles."""
    H = hidden_dim
    Hp = _round_up(H, 128)
    ws, bs = [], []
    for (w_ih, w_hh, b_ih, b_hh) in params["lstm"]:
        I = w_ih.shape[1]
        assert I <= Hp, "input_dim must fit the padded hidden width"
        W = jnp.zeros((2 * Hp, 4 * Hp), jnp.float32)
        b = jnp.zeros((1, 4 * Hp), jnp.float32)
        for g in range(4):
            W = W.at[:I, g * Hp:g * Hp + H].set(
                jnp.transpose(w_ih[g * H:(g + 1) * H, :]))
            W = W.at[Hp:Hp + H, g * Hp:g * Hp + H].set(
                jnp.transpose(w_hh[g * H:(g + 1) * H, :]))
            b = b.at[0, g * Hp:g * Hp + H].set(
                b_ih[g * H:(g + 1) * H] + b_hh[g * H:(g + 1) * H])
        ws.append(W)
        bs.append(b)
    O = params["fc_w"].shape[0]
    Op = _round_up(O, 128)
    wfc = jnp.zeros((Hp, Op), jnp.float32).at[:H, :O].set(
        jnp.transpose(params["fc_w"]))
    bfc = jnp.zeros((1, Op), jnp.float32).at[0, :O].set(params["fc_b"])
    return {"w": jnp.stack(ws),      # (L, 2*Hp, 4*Hp)
            "b": jnp.stack(bs),      # (L, 1, 4*Hp)
            "wfc": wfc,              # (Hp, Op)
            "bfc": bfc}              # (1, Op)


# ------------------------------- LSTMNet forward ------------------------------
@functools.partial(jax.jit, static_argnames=("output_dim",))
def lstm_net_forward(packed, x, h, output_dim):
    """Equivalent of LSTMNet.forward(x, h).

    x: (B, T, input_dim)   [batch_first]
    h: (h0, c0), each (n_layers, B, hidden_dim)
    returns (y, (hN, cN)) with y: (B, output_dim)
    """
    h0_all, c0_all = h
    B, T, I = x.shape
    L, _, H = h0_all.shape
    Hp = packed["w"].shape[1] // 2
    Op = packed["wfc"].shape[1]
    Bp = _round_up(B, 8)

    # zero-pad activations to (sublane=8, lane=128) tiles; padded lanes of
    # h/c stay zero through the recurrence (zero weight/bias padding).
    x_pad = jnp.zeros((T, Bp, Hp), jnp.float32).at[:, :B, :I].set(
        jnp.transpose(x, (1, 0, 2)).astype(jnp.float32))
    h0_pad = jnp.zeros((L, Bp, Hp), jnp.float32).at[:, :B, :H].set(h0_all)
    c0_pad = jnp.zeros((L, Bp, Hp), jnp.float32).at[:, :B, :H].set(c0_all)

    kernel = functools.partial(_lstm_net_kernel,
                               n_layers=L, seq_len=T, hp=Hp)
    y_pad, hN_pad, cN_pad = pl.pallas_call(
        kernel,
        out_shape=(jax.ShapeDtypeStruct((Bp, Op), jnp.float32),
                   jax.ShapeDtypeStruct((L, Bp, Hp), jnp.float32),
                   jax.ShapeDtypeStruct((L, Bp, Hp), jnp.float32)),
    )(x_pad, packed["w"], packed["b"], packed["wfc"], packed["bfc"],
      h0_pad, c0_pad)

    y = y_pad[:B, :output_dim]
    hN = hN_pad[:, :B, :H]
    cN = cN_pad[:, :B, :H]
    return y, (hN, cN)


# --------------------------------- reference ----------------------------------
def lstm_net_reference(params, x, h, n_layers):
    """Pure-JAX reference of the same forward pass (for correctness check)."""
    h0_all, c0_all = h
    layer_in = x                                   # (B, T, I)
    h_finals, c_finals = [], []
    for l in range(n_layers):
        w_ih, w_hh, b_ih, b_hh = params["lstm"][l]
        H = w_hh.shape[1]
        h_t, c_t = h0_all[l], c0_all[l]
        outs = []
        for t in range(layer_in.shape[1]):
            g = layer_in[:, t] @ w_ih.T + h_t @ w_hh.T + b_ih + b_hh
            i = jax.nn.sigmoid(g[:, :H])
            f = jax.nn.sigmoid(g[:, H:2 * H])
            gg = jnp.tanh(g[:, 2 * H:3 * H])
            o = jax.nn.sigmoid(g[:, 3 * H:])
            c_t = f * c_t + i * gg
            h_t = o * jnp.tanh(c_t)
            outs.append(h_t)
        layer_in = jnp.stack(outs, axis=1)
        h_finals.append(h_t)
        c_finals.append(c_t)
    y = jnp.maximum(h_finals[-1], 0.0) @ params["fc_w"].T + params["fc_b"]
    return y, (jnp.stack(h_finals), jnp.stack(c_finals))


# ----------------------------------- main --------------------------------------
if __name__ == "__main__":
    # "2 features predict 1 output", hidden_dim = 50 (from the source script)
    input_dim, hidden_dim, output_dim, n_layers = 2, 50, 1, 2
    batch, seq_len = 4, 8

    key = jax.random.PRNGKey(0)
    k_scale = 1.0 / jnp.sqrt(hidden_dim)           # PyTorch default uniform bound

    def uniform(k, shape):
        return jax.random.uniform(k, shape, jnp.float32, -k_scale, k_scale)

    keys = jax.random.split(key, 4 * n_layers + 5)
    params = {"lstm": []}
    for l in range(n_layers):
        in_dim = input_dim if l == 0 else hidden_dim
        w_ih = uniform(keys[4 * l + 0], (4 * hidden_dim, in_dim))
        w_hh = uniform(keys[4 * l + 1], (4 * hidden_dim, hidden_dim))
        b_ih = uniform(keys[4 * l + 2], (4 * hidden_dim,))
        b_hh = uniform(keys[4 * l + 3], (4 * hidden_dim,))
        params["lstm"].append((w_ih, w_hh, b_ih, b_hh))
    params["fc_w"] = uniform(keys[-5], (output_dim, hidden_dim))
    params["fc_b"] = uniform(keys[-4], (output_dim,))

    packed = pack_params(params, hidden_dim)       # one-time weight packing

    x = jax.random.normal(keys[-3], (batch, seq_len, input_dim), jnp.float32)

    # --- case 1: zero initial state (== LSTMNet.init_hidden) ---
    h0 = jnp.zeros((n_layers, batch, hidden_dim), jnp.float32)
    c0 = jnp.zeros((n_layers, batch, hidden_dim), jnp.float32)
    y, (hN, cN) = lstm_net_forward(packed, x, (h0, c0), output_dim=output_dim)
    jax.block_until_ready((y, hN, cN))

    y_ref, (hN_ref, cN_ref) = lstm_net_reference(params, x, (h0, c0), n_layers)
    assert y.shape == (batch, output_dim)
    assert hN.shape == (n_layers, batch, hidden_dim)
    assert cN.shape == (n_layers, batch, hidden_dim)
    assert jnp.allclose(y, y_ref, atol=1e-4, rtol=1e-4)
    assert jnp.allclose(hN, hN_ref, atol=1e-4, rtol=1e-4)
    assert jnp.allclose(cN, cN_ref, atol=1e-4, rtol=1e-4)

    # --- case 2: non-zero initial state (general forward(x, h) semantics) ---
    h0r = 0.3 * jax.random.normal(keys[-2], (n_layers, batch, hidden_dim), jnp.float32)
    c0r = 0.3 * jax.random.normal(keys[-1], (n_layers, batch, hidden_dim), jnp.float32)
    y2, (hN2, cN2) = lstm_net_forward(packed, x, (h0r, c0r), output_dim=output_dim)
    jax.block_until_ready((y2, hN2, cN2))
    y2_ref, (hN2_ref, cN2_ref) = lstm_net_reference(params, x, (h0r, c0r), n_layers)
    assert jnp.allclose(y2, y2_ref, atol=1e-4, rtol=1e-4)
    assert jnp.allclose(hN2, hN2_ref, atol=1e-4, rtol=1e-4)
    assert jnp.allclose(cN2, cN2_ref, atol=1e-4, rtol=1e-4)

    print("KERNEL_OK")
</pallas_src>

<mosaic_0001>
module attributes {stable_mosaic.version = 11 : i64} {
  func.func @_lstm_net_kernel(%arg0: memref<8x8x128xf32, #tpu.memory_space<vmem>>, %arg1: memref<2x256x512xf32, #tpu.memory_space<vmem>>, %arg2: memref<2x1x512xf32, #tpu.memory_space<vmem>>, %arg3: memref<128x128xf32, #tpu.memory_space<vmem>>, %arg4: memref<1x128xf32, #tpu.memory_space<vmem>>, %arg5: memref<2x8x128xf32, #tpu.memory_space<vmem>>, %arg6: memref<2x8x128xf32, #tpu.memory_space<vmem>>, %arg7: memref<8x128xf32, #tpu.memory_space<vmem>>, %arg8: memref<2x8x128xf32, #tpu.memory_space<vmem>>, %arg9: memref<2x8x128xf32, #tpu.memory_space<vmem>>) attributes {dimension_semantics = [], scalar_prefetch = 0 : i64, scratch_operands = 0 : i64, tpu.core_type = #tpu.core_type<tc>} {
    %c0 = arith.constant 0 : index
    %c0_0 = arith.constant 0 : index
    %c0_1 = arith.constant 0 : index
    %0 = vector.load %arg5[%c0, %c0_0, %c0_1] : memref<2x8x128xf32, #tpu.memory_space<vmem>>, vector<1x8x128xf32>
    %1 = vector.shape_cast %0 : vector<1x8x128xf32> to vector<8x128xf32>
    %c1 = arith.constant 1 : index
    %c0_2 = arith.constant 0 : index
    %c0_3 = arith.constant 0 : index
    %2 = vector.load %arg5[%c1, %c0_2, %c0_3] : memref<2x8x128xf32, #tpu.memory_space<vmem>>, vector<1x8x128xf32>
    %3 = vector.shape_cast %2 : vector<1x8x128xf32> to vector<8x128xf32>
    %c0_4 = arith.constant 0 : index
    %c0_5 = arith.constant 0 : index
    %c0_6 = arith.constant 0 : index
    %4 = vector.load %arg6[%c0_4, %c0_5, %c0_6] : memref<2x8x128xf32, #tpu.memory_space<vmem>>, vector<1x8x128xf32>
    %5 = vector.shape_cast %4 : vector<1x8x128xf32> to vector<8x128xf32>
    %c1_7 = arith.constant 1 : index
    %c0_8 = arith.constant 0 : index
    %c0_9 = arith.constant 0 : index
    %6 = vector.load %arg6[%c1_7, %c0_8, %c0_9] : memref<2x8x128xf32, #tpu.memory_space<vmem>>, vector<1x8x128xf32>
    %7 = vector.shape_cast %6 : vector<1x8x128xf32> to vector<8x128xf32>
    %c0_i32 = arith.constant 0 : i32
    %8 = arith.index_cast %c0_i32 : i32 to index
    %c0_10 = arith.constant 0 : index
    %c0_11 = arith.constant 0 : index
    %9 = vector.load %arg0[%8, %c0_10, %c0_11] : memref<8x8x128xf32, #tpu.memory_space<vmem>>, vector<1x8x128xf32>
    %10 = vector.shape_cast %9 : vector<1x8x128xf32> to vector<8x128xf32>
    %11 = tpu.concatenate %10, %1 in 1 : vector<8x128xf32>, vector<8x128xf32> -> vector<8x256xf32>
    %c0_12 = arith.constant 0 : index
    %c0_13 = arith.constant 0 : index
    %c0_14 = arith.constant 0 : index
    %12 = vector.load %arg1[%c0_12, %c0_13, %c0_14] : memref<2x256x512xf32, #tpu.memory_space<vmem>>, vector<1x256x512xf32>
    %13 = vector.shape_cast %12 : vector<1x256x512xf32> to vector<256x512xf32>
    %cst = arith.constant dense<0.000000e+00> : vector<8x512xf32>
    %14 = tpu.matmul %11, %13, %cst {dimension_numbers = #tpu.dot_dimension_numbers<[1], [0], [0], [1], [0, 0, 1, 1], [], []>} : vector<8x256xf32>, vector<256x512xf32>, vector<8x512xf32> -> vector<8x512xf32>
    %c0_15 = arith.constant 0 : index
    %c0_16 = arith.constant 0 : index
    %c0_17 = arith.constant 0 : index
    %15 = vector.load %arg2[%c0_15, %c0_16, %c0_17] : memref<2x1x512xf32, #tpu.memory_space<vmem>>, vector<1x1x512xf32>
    %16 = vector.shape_cast %15 : vector<1x1x512xf32> to vector<1x512xf32>
    %17 = vector.broadcast %16 : vector<1x512xf32> to vector<8x512xf32>
    %18 = arith.addf %14, %17 : vector<8x512xf32>
    %19 = vector.extract_strided_slice %18 {offsets = [0, 0], sizes = [8, 128], strides = [1, 1]} : vector<8x512xf32> to vector<8x128xf32>
    %20 = arith.negf %19 : vector<8x128xf32>
    %21 = math.exp %20 : vector<8x128xf32>
    %cst_18 = arith.constant 1.000000e+00 : f32
    %22 = vector.broadcast %cst_18 : f32 to vector<8x128xf32>
    %23 = arith.addf %22, %21 : vector<8x128xf32>
    %24 = arith.divf %22, %23 : vector<8x128xf32>
    %25 = vector.extract_strided_slice %18 {offsets = [0, 128], sizes = [8, 128], strides = [1, 1]} : vector<8x512xf32> to vector<8x128xf32>
    %26 = arith.negf %25 : vector<8x128xf32>
    %27 = math.exp %26 : vector<8x128xf32>
    %cst_19 = arith.constant 1.000000e+00 : f32
    %28 = vector.broadcast %cst_19 : f32 to vector<8x128xf32>
    %29 = arith.addf %28, %27 : vector<8x128xf32>
    %30 = arith.divf %28, %29 : vector<8x128xf32>
    %31 = vector.extract_strided_slice %18 {offsets = [0, 256], sizes = [8, 128], strides = [1, 1]} : vector<8x512xf32> to vector<8x128xf32>
    %32 = math.tanh %31 : vector<8x128xf32>
    %33 = vector.extract_strided_slice %18 {offsets = [0, 384], sizes = [8, 128], strides = [1, 1]} : vector<8x512xf32> to vector<8x128xf32>
    %34 = arith.negf %33 : vector<8x128xf32>
    %35 = math.exp %34 : vector<8x128xf32>
    %cst_20 = arith.constant 1.000000e+00 : f32
    %36 = vector.broadcast %cst_20 : f32 to vector<8x128xf32>
    %37 = arith.addf %36, %35 : vector<8x128xf32>
    %38 = arith.divf %36, %37 : vector<8x128xf32>
    %39 = arith.mulf %30, %5 : vector<8x128xf32>
    %40 = arith.mulf %24, %32 : vector<8x128xf32>
    %41 = arith.addf %39, %40 : vector<8x128xf32>
    %42 = math.tanh %41 : vector<8x128xf32>
    %43 = arith.mulf %38, %42 : vector<8x128xf32>
    %44 = tpu.concatenate %43, %3 in 1 : vector<8x128xf32>, vector<8x128xf32> -> vector<8x256xf32>
    %c1_21 = arith.constant 1 : index
    %c0_22 = arith.constant 0 : index
    %c0_23 = arith.constant 0 : index
    %45 = vector.load %arg1[%c1_21, %c0_22, %c0_23] : memref<2x256x512xf32, #tpu.memory_space<vmem>>, vector<1x256x512xf32>
    %46 = vector.shape_cast %45 : vector<1x256x512xf32> to vector<256x512xf32>
    %cst_24 = arith.constant dense<0.000000e+00> : vector<8x512xf32>
    %47 = tpu.matmul %44, %46, %cst_24 {dimension_numbers = #tpu.dot_dimension_numbers<[1], [0], [0], [1], [0, 0, 1, 1], [], []>} : vector<8x256xf32>, vector<256x512xf32>, vector<8x512xf32> -> vector<8x512xf32>
    %c1_25 = arith.constant 1 : index
    %c0_26 = arith.constant 0 : index
    %c0_27 = arith.constant 0 : index
    %48 = vector.load %arg2[%c1_25, %c0_26, %c0_27] : memref<2x1x512xf32, #tpu.memory_space<vmem>>, vector<1x1x512xf32>
    %49 = vector.shape_cast %48 : vector<1x1x512xf32> to vector<1x512xf32>
    %50 = vector.broadcast %49 : vector<1x512xf32> to vector<8x512xf32>
    %51 = arith.addf %47, %50 : vector<8x512xf32>
    %52 = vector.extract_strided_slice %51 {offsets = [0, 0], sizes = [8, 128], strides = [1, 1]} : vector<8x512xf32> to vector<8x128xf32>
    %53 = arith.negf %52 : vector<8x128xf32>
    %54 = math.exp %53 : vector<8x128xf32>
    %cst_28 = arith.constant 1.000000e+00 : f32
    %55 = vector.broadcast %cst_28 : f32 to vector<8x128xf32>
    %56 = arith.addf %55, %54 : vector<8x128xf32>
    %57 = arith.divf %55, %56 : vector<8x128xf32>
    %58 = vector.extract_strided_slice %51 {offsets = [0, 128], sizes = [8, 128], strides = [1, 1]} : vector<8x512xf32> to vector<8x128xf32>
    %59 = arith.negf %58 : vector<8x128xf32>
    %60 = math.exp %59 : vector<8x128xf32>
    %cst_29 = arith.constant 1.000000e+00 : f32
    %61 = vector.broadcast %cst_29 : f32 to vector<8x128xf32>
    %62 = arith.addf %61, %60 : vector<8x128xf32>
    %63 = arith.divf %61, %62 : vector<8x128xf32>
    %64 = vector.extract_strided_slice %51 {offsets = [0, 256], sizes = [8, 128], strides = [1, 1]} : vector<8x512xf32> to vector<8x128xf32>
    %65 = math.tanh %64 : vector<8x128xf32>
    %66 = vector.extract_strided_slice %51 {offsets = [0, 384], sizes = [8, 128], strides = [1, 1]} : vector<8x512xf32> to vector<8x128xf32>
    %67 = arith.negf %66 : vector<8x128xf32>
    %68 = math.exp %67 : vector<8x128xf32>
    %cst_30 = arith.constant 1.000000e+00 : f32
    %69 = vector.broadcast %cst_30 : f32 to vector<8x128xf32>
    %70 = arith.addf %69, %68 : vector<8x128xf32>
    %71 = arith.divf %69, %70 : vector<8x128xf32>
    %72 = arith.mulf %63, %7 : vector<8x128xf32>
    %73 = arith.mulf %57, %65 : vector<8x128xf32>
    %74 = arith.addf %72, %73 : vector<8x128xf32>
    %75 = math.tanh %74 : vector<8x128xf32>
    %76 = arith.mulf %71, %75 : vector<8x128xf32>
    %c1_i32 = arith.constant 1 : i32
    %77 = arith.index_cast %c1_i32 : i32 to index
    %c0_31 = arith.constant 0 : index
    %c0_32 = arith.constant 0 : index
    %78 = vector.load %arg0[%77, %c0_31, %c0_32] : memref<8x8x128xf32, #tpu.memory_space<vmem>>, vector<1x8x128xf32>
    %79 = vector.shape_cast %78 : vector<1x8x128xf32> to vector<8x128xf32>
    %80 = tpu.concatenate %79, %43 in 1 : vector<8x128xf32>, vector<8x128xf32> -> vector<8x256xf32>
    %c0_33 = arith.constant 0 : index
    %c0_34 = arith.constant 0 : index
    %c0_35 = arith.constant 0 : index
    %81 = vector.load %arg1[%c0_33, %c0_34, %c0_35] : memref<2x256x512xf32, #tpu.memory_space<vmem>>, vector<1x256x512xf32>
    %82 = vector.shape_cast %81 : vector<1x256x512xf32> to vector<256x512xf32>
    %cst_36 = arith.constant dense<0.000000e+00> : vector<8x512xf32>
    %83 = tpu.matmul %80, %82, %cst_36 {dimension_numbers = #tpu.dot_dimension_numbers<[1], [0], [0], [1], [0, 0, 1, 1], [], []>} : vector<8x256xf32>, vector<256x512xf32>, vector<8x512xf32> -> vector<8x512xf32>
    %c0_37 = arith.constant 0 : index
    %c0_38 = arith.constant 0 : index
    %c0_39 = arith.constant 0 : index
    %84 = vector.load %arg2[%c0_37, %c0_38, %c0_39] : memref<2x1x512xf32, #tpu.memory_space<vmem>>, vector<1x1x512xf32>
    %85 = vector.shape_cast %84 : vector<1x1x512xf32> to vector<1x512xf32>
    %86 = vector.broadcast %85 : vector<1x512xf32> to vector<8x512xf32>
    %87 = arith.addf %83, %86 : vector<8x512xf32>
    %88 = vector.extract_strided_slice %87 {offsets = [0, 0], sizes = [8, 128], strides = [1, 1]} : vector<8x512xf32> to vector<8x128xf32>
    %89 = arith.negf %88 : vector<8x128xf32>
    %90 = math.exp %89 : vector<8x128xf32>
    %cst_40 = arith.constant 1.000000e+00 : f32
    %91 = vector.broadcast %cst_40 : f32 to vector<8x128xf32>
    %92 = arith.addf %91, %90 : vector<8x128xf32>
    %93 = arith.divf %91, %92 : vector<8x128xf32>
    %94 = vector.extract_strided_slice %87 {offsets = [0, 128], sizes = [8, 128], strides = [1, 1]} : vector<8x512xf32> to vector<8x128xf32>
    %95 = arith.negf %94 : vector<8x128xf32>
    %96 = math.exp %95 : vector<8x128xf32>
    %cst_41 = arith.constant 1.000000e+00 : f32
    %97 = vector.broadcast %cst_41 : f32 to vector<8x128xf32>
    %98 = arith.addf %97, %96 : vector<8x128xf32>
    %99 = arith.divf %97, %98 : vector<8x128xf32>
    %100 = vector.extract_strided_slice %87 {offsets = [0, 256], sizes = [8, 128], strides = [1, 1]} : vector<8x512xf32> to vector<8x128xf32>
    %101 = math.tanh %100 : vector<8x128xf32>
    %102 = vector.extract_strided_slice %87 {offsets = [0, 384], sizes = [8, 128], strides = [1, 1]} : vector<8x512xf32> to vector<8x128xf32>
    %103 = arith.negf %102 : vector<8x128xf32>
    %104 = math.exp %103 : vector<8x128xf32>
    %cst_42 = arith.constant 1.000000e+00 : f32
    %105 = vector.broadcast %cst_42 : f32 to vector<8x128xf32>
    %106 = arith.addf %105, %104 : vector<8x128xf32>
    %107 = arith.divf %105, %106 : vector<8x128xf32>
    %108 = arith.mulf %99, %41 : vector<8x128xf32>
    %109 = arith.mulf %93, %101 : vector<8x128xf32>
    %110 = arith.addf %108, %109 : vector<8x128xf32>
    %111 = math.tanh %110 : vector<8x128xf32>
    %112 = arith.mulf %107, %111 : vector<8x128xf32>
    %113 = tpu.concatenate %112, %76 in 1 : vector<8x128xf32>, vector<8x128xf32> -> vector<8x256xf32>
    %c1_43 = arith.constant 1 : index
    %c0_44 = arith.constant 0 : index
    %c0_45 = arith.constant 0 : index
    %114 = vector.load %arg1[%c1_43, %c0_44, %c0_45] : memref<2x256x512xf32, #tpu.memory_space<vmem>>, vector<1x256x512xf32>
    %115 = vector.shape_cast %114 : vector<1x256x512xf32> to vector<256x512xf32>
    %cst_46 = arith.constant dense<0.000000e+00> : vector<8x512xf32>
    %116 = tpu.matmul %113, %115, %cst_46 {dimension_numbers = #tpu.dot_dimension_numbers<[1], [0], [0], [1], [0, 0, 1, 1], [], []>} : vector<8x256xf32>, vector<256x512xf32>, vector<8x512xf32> -> vector<8x512xf32>
    %c1_47 = arith.constant 1 : index
    %c0_48 = arith.constant 0 : index
    %c0_49 = arith.constant 0 : index
    %117 = vector.load %arg2[%c1_47, %c0_48, %c0_49] : memref<2x1x512xf32, #tpu.memory_space<vmem>>, vector<1x1x512xf32>
    %118 = vector.shape_cast %117 : vector<1x1x512xf32> to vector<1x512xf32>
    %119 = vector.broadcast %118 : vector<1x512xf32> to vector<8x512xf32>
    %120 = arith.addf %116, %119 : vector<8x512xf32>
    %121 = vector.extract_strided_slice %120 {offsets = [0, 0], sizes = [8, 128], strides = [1, 1]} : vector<8x512xf32> to vector<8x128xf32>
    %122 = arith.negf %121 : vector<8x128xf32>
    %123 = math.exp %122 : vector<8x128xf32>
    %cst_50 = arith.constant 1.000000e+00 : f32
    %124 = vector.broadcast %cst_50 : f32 to vector<8x128xf32>
    %125 = arith.addf %124, %123 : vector<8x128xf32>
    %126 = arith.divf %124, %125 : vector<8x128xf32>
    %127 = vector.extract_strided_slice %120 {offsets = [0, 128], sizes = [8, 128], strides = [1, 1]} : vector<8x512xf32> to vector<8x128xf32>
    %128 = arith.negf %127 : vector<8x128xf32>
    %129 = math.exp %128 : vector<8x128xf32>
    %cst_51 = arith.constant 1.000000e+00 : f32
    %130 = vector.broadcast %cst_51 : f32 to vector<8x128xf32>
    %131 = arith.addf %130, %129 : vector<8x128xf32>
    %132 = arith.divf %130, %131 : vector<8x128xf32>
    %133 = vector.extract_strided_slice %120 {offsets = [0, 256], sizes = [8, 128], strides = [1, 1]} : vector<8x512xf32> to vector<8x128xf32>
    %134 = math.tanh %133 : vector<8x128xf32>
    %135 = vector.extract_strided_slice %120 {offsets = [0, 384], sizes = [8, 128], strides = [1, 1]} : vector<8x512xf32> to vector<8x128xf32>
    %136 = arith.negf %135 : vector<8x128xf32>
    %137 = math.exp %136 : vector<8x128xf32>
    %cst_52 = arith.constant 1.000000e+00 : f32
    %138 = vector.broadcast %cst_52 : f32 to vector<8x128xf32>
    %139 = arith.addf %138, %137 : vector<8x128xf32>
    %140 = arith.divf %138, %139 : vector<8x128xf32>
    %141 = arith.mulf %132, %74 : vector<8x128xf32>
    %142 = arith.mulf %126, %134 : vector<8x128xf32>
    %143 = arith.addf %141, %142 : vector<8x128xf32>
    %144 = math.tanh %143 : vector<8x128xf32>
    %145 = arith.mulf %140, %144 : vector<8x128xf32>
    %c2_i32 = arith.constant 2 : i32
    %146 = arith.index_cast %c2_i32 : i32 to index
    %c0_53 = arith.constant 0 : index
    %c0_54 = arith.constant 0 : index
    %147 = vector.load %arg0[%146, %c0_53, %c0_54] : memref<8x8x128xf32, #tpu.memory_space<vmem>>, vector<1x8x128xf32>
    %148 = vector.shape_cast %147 : vector<1x8x128xf32> to vector<8x128xf32>
    %149 = tpu.concatenate %148, %112 in 1 : vector<8x128xf32>, vector<8x128xf32> -> vector<8x256xf32>
    %c0_55 = arith.constant 0 : index
    %c0_56 = arith.constant 0 : index
    %c0_57 = arith.constant 0 : index
    %150 = vector.load %arg1[%c0_55, %c0_56, %c0_57] : memref<2x256x512xf32, #tpu.memory_space<vmem>>, vector<1x256x512xf32>
    %151 = vector.shape_cast %150 : vector<1x256x512xf32> to vector<256x512xf32>
    %cst_58 = arith.constant dense<0.000000e+00> : vector<8x512xf32>
    %152 = tpu.matmul %149, %151, %cst_58 {dimension_numbers = #tpu.dot_dimension_numbers<[1], [0], [0], [1], [0, 0, 1, 1], [], []>} : vector<8x256xf32>, vector<256x512xf32>, vector<8x512xf32> -> vector<8x512xf32>
    %c0_59 = arith.constant 0 : index
    %c0_60 = arith.constant 0 : index
    %c0_61 = arith.constant 0 : index
    %153 = vector.load %arg2[%c0_59, %c0_60, %c0_61] : memref<2x1x512xf32, #tpu.memory_space<vmem>>, vector<1x1x512xf32>
    %154 = vector.shape_cast %153 : vector<1x1x512xf32> to vector<1x512xf32>
    %155 = vector.broadcast %154 : vector<1x512xf32> to vector<8x512xf32>
    %156 = arith.addf %152, %155 : vector<8x512xf32>
    %157 = vector.extract_strided_slice %156 {offsets = [0, 0], sizes = [8, 128], strides = [1, 1]} : vector<8x512xf32> to vector<8x128xf32>
    %158 = arith.negf %157 : vector<8x128xf32>
    %159 = math.exp %158 : vector<8x128xf32>
    %cst_62 = arith.constant 1.000000e+00 : f32
    %160 = vector.broadcast %cst_62 : f32 to vector<8x128xf32>
    %161 = arith.addf %160, %159 : vector<8x128xf32>
    %162 = arith.divf %160, %161 : vector<8x128xf32>
    %163 = vector.extract_strided_slice %156 {offsets = [0, 128], sizes = [8, 128], strides = [1, 1]} : vector<8x512xf32> to vector<8x128xf32>
    %164 = arith.negf %163 : vector<8x128xf32>
    %165 = math.exp %164 : vector<8x128xf32>
    %cst_63 = arith.constant 1.000000e+00 : f32
    %166 = vector.broadcast %cst_63 : f32 to vector<8x128xf32>
    %167 = arith.addf %166, %165 : vector<8x128xf32>
    %168 = arith.divf %166, %167 : vector<8x128xf32>
    %169 = vector.extract_strided_slice %156 {offsets = [0, 256], sizes = [8, 128], strides = [1, 1]} : vector<8x512xf32> to vector<8x128xf32>
    %170 = math.tanh %169 : vector<8x128xf32>
    %171 = vector.extract_strided_slice %156 {offsets = [0, 384], sizes = [8, 128], strides = [1, 1]} : vector<8x512xf32> to vector<8x128xf32>
    %172 = arith.negf %171 : vector<8x128xf32>
    %173 = math.exp %172 : vector<8x128xf32>
    %cst_64 = arith.constant 1.000000e+00 : f32
    %174 = vector.broadcast %cst_64 : f32 to vector<8x128xf32>
    %175 = arith.addf %174, %173 : vector<8x128xf32>
    %176 = arith.divf %174, %175 : vector<8x128xf32>
    %177 = arith.mulf %168, %110 : vector<8x128xf32>
    %178 = arith.mulf %162, %170 : vector<8x128xf32>
    %179 = arith.addf %177, %178 : vector<8x128xf32>
    %180 = math.tanh %179 : vector<8x128xf32>
    %181 = arith.mulf %176, %180 : vector<8x128xf32>
    %182 = tpu.concatenate %181, %145 in 1 : vector<8x128xf32>, vector<8x128xf32> -> vector<8x256xf32>
    %c1_65 = arith.constant 1 : index
    %c0_66 = arith.constant 0 : index
    %c0_67 = arith.constant 0 : index
    %183 = vector.load %arg1[%c1_65, %c0_66, %c0_67] : memref<2x256x512xf32, #tpu.memory_space<vmem>>, vector<1x256x512xf32>
    %184 = vector.shape_cast %183 : vector<1x256x512xf32> to vector<256x512xf32>
    %cst_68 = arith.constant dense<0.000000e+00> : vector<8x512xf32>
    %185 = tpu.matmul %182, %184, %cst_68 {dimension_numbers = #tpu.dot_dimension_numbers<[1], [0], [0], [1], [0, 0, 1, 1], [], []>} : vector<8x256xf32>, vector<256x512xf32>, vector<8x512xf32> -> vector<8x512xf32>
    %c1_69 = arith.constant 1 : index
    %c0_70 = arith.constant 0 : index
    %c0_71 = arith.constant 0 : index
    %186 = vector.load %arg2[%c1_69, %c0_70, %c0_71] : memref<2x1x512xf32, #tpu.memory_space<vmem>>, vector<1x1x512xf32>
    %187 = vector.shape_cast %186 : vector<1x1x512xf32> to vector<1x512xf32>
    %188 = vector.broadcast %187 : vector<1x512xf32> to vector<8x512xf32>
    %189 = arith.addf %185, %188 : vector<8x512xf32>
    %190 = vector.extract_strided_slice %189 {offsets = [0, 0], sizes = [8, 128], strides = [1, 1]} : vector<8x512xf32> to vector<8x128xf32>
    %191 = arith.negf %190 : vector<8x128xf32>
    %192 = math.exp %191 : vector<8x128xf32>
    %cst_72 = arith.constant 1.000000e+00 : f32
    %193 = vector.broadcast %cst_72 : f32 to vector<8x128xf32>
    %194 = arith.addf %193, %192 : vector<8x128xf32>
    %195 = arith.divf %193, %194 : vector<8x128xf32>
    %196 = vector.extract_strided_slice %189 {offsets = [0, 128], sizes = [8, 128], strides = [1, 1]} : vector<8x512xf32> to vector<8x128xf32>
    %197 = arith.negf %196 : vector<8x128xf32>
    %198 = math.exp %197 : vector<8x128xf32>
    %cst_73 = arith.constant 1.000000e+00 : f32
    %199 = vector.broadcast %cst_73 : f32 to vector<8x128xf32>
    %200 = arith.addf %199, %198 : vector<8x128xf32>
    %201 = arith.divf %199, %200 : vector<8x128xf32>
    %202 = vector.extract_strided_slice %189 {offsets = [0, 256], sizes = [8, 128], strides = [1, 1]} : vector<8x512xf32> to vector<8x128xf32>
    %203 = math.tanh %202 : vector<8x128xf32>
    %204 = vector.extract_strided_slice %189 {offsets = [0, 384], sizes = [8, 128], strides = [1, 1]} : vector<8x512xf32> to vector<8x128xf32>
    %205 = arith.negf %204 : vector<8x128xf32>
    %206 = math.exp %205 : vector<8x128xf32>
    %cst_74 = arith.constant 1.000000e+00 : f32
    %207 = vector.broadcast %cst_74 : f32 to vector<8x128xf32>
    %208 = arith.addf %207, %206 : vector<8x128xf32>
    %209 = arith.divf %207, %208 : vector<8x128xf32>
    %210 = arith.mulf %201, %143 : vector<8x128xf32>
    %211 = arith.mulf %195, %203 : vector<8x128xf32>
    %212 = arith.addf %210, %211 : vector<8x128xf32>
    %213 = math.tanh %212 : vector<8x128xf32>
    %214 = arith.mulf %209, %213 : vector<8x128xf32>
    %c3_i32 = arith.constant 3 : i32
    %215 = arith.index_cast %c3_i32 : i32 to index
    %c0_75 = arith.constant 0 : index
    %c0_76 = arith.constant 0 : index
    %216 = vector.load %arg0[%215, %c0_75, %c0_76] : memref<8x8x128xf32, #tpu.memory_space<vmem>>, vector<1x8x128xf32>
    %217 = vector.shape_cast %216 : vector<1x8x128xf32> to vector<8x128xf32>
    %218 = tpu.concatenate %217, %181 in 1 : vector<8x128xf32>, vector<8x128xf32> -> vector<8x256xf32>
    %c0_77 = arith.constant 0 : index
    %c0_78 = arith.constant 0 : index
    %c0_79 = arith.constant 0 : index
    %219 = vector.load %arg1[%c0_77, %c0_78, %c0_79] : memref<2x256x512xf32, #tpu.memory_space<vmem>>, vector<1x256x512xf32>
    %220 = vector.shape_cast %219 : vector<1x256x512xf32> to vector<256x512xf32>
    %cst_80 = arith.constant dense<0.000000e+00> : vector<8x512xf32>
    %221 = tpu.matmul %218, %220, %cst_80 {dimension_numbers = #tpu.dot_dimension_numbers<[1], [0], [0], [1], [0, 0, 1, 1], [], []>} : vector<8x256xf32>, vector<256x512xf32>, vector<8x512xf32> -> vector<8x512xf32>
    %c0_81 = arith.constant 0 : index
    %c0_82 = arith.constant 0 : index
    %c0_83 = arith.constant 0 : index
    %222 = vector.load %arg2[%c0_81, %c0_82, %c0_83] : memref<2x1x512xf32, #tpu.memory_space<vmem>>, vector<1x1x512xf32>
    %223 = vector.shape_cast %222 : vector<1x1x512xf32> to vector<1x512xf32>
    %224 = vector.broadcast %223 : vector<1x512xf32> to vector<8x512xf32>
    %225 = arith.addf %221, %224 : vector<8x512xf32>
    %226 = vector.extract_strided_slice %225 {offsets = [0, 0], sizes = [8, 128], strides = [1, 1]} : vector<8x512xf32> to vector<8x128xf32>
    %227 = arith.negf %226 : vector<8x128xf32>
    %228 = math.exp %227 : vector<8x128xf32>
    %cst_84 = arith.constant 1.000000e+00 : f32
    %229 = vector.broadcast %cst_84 : f32 to vector<8x128xf32>
    %230 = arith.addf %229, %228 : vector<8x128xf32>
    %231 = arith.divf %229, %230 : vector<8x128xf32>
    %232 = vector.extract_strided_slice %225 {offsets = [0, 128], sizes = [8, 128], strides = [1, 1]} : vector<8x512xf32> to vector<8x128xf32>
    %233 = arith.negf %232 : vector<8x128xf32>
    %234 = math.exp %233 : vector<8x128xf32>
    %cst_85 = arith.constant 1.000000e+00 : f32
    %235 = vector.broadcast %cst_85 : f32 to vector<8x128xf32>
    %236 = arith.addf %235, %234 : vector<8x128xf32>
    %237 = arith.divf %235, %236 : vector<8x128xf32>
    %238 = vector.extract_strided_slice %225 {offsets = [0, 256], sizes = [8, 128], strides = [1, 1]} : vector<8x512xf32> to vector<8x128xf32>
    %239 = math.tanh %238 : vector<8x128xf32>
    %240 = vector.extract_strided_slice %225 {offsets = [0, 384], sizes = [8, 128], strides = [1, 1]} : vector<8x512xf32> to vector<8x128xf32>
    %241 = arith.negf %240 : vector<8x128xf32>
    %242 = math.exp %241 : vector<8x128xf32>
    %cst_86 = arith.constant 1.000000e+00 : f32
    %243 = vector.broadcast %cst_86 : f32 to vector<8x128xf32>
    %244 = arith.addf %243, %242 : vector<8x128xf32>
    %245 = arith.divf %243, %244 : vector<8x128xf32>
    %246 = arith.mulf %237, %179 : vector<8x128xf32>
    %247 = arith.mulf %231, %239 : vector<8x128xf32>
    %248 = arith.addf %246, %247 : vector<8x128xf32>
    %249 = math.tanh %248 : vector<8x128xf32>
    %250 = arith.mulf %245, %249 : vector<8x128xf32>
    %251 = tpu.concatenate %250, %214 in 1 : vector<8x128xf32>, vector<8x128xf32> -> vector<8x256xf32>
    %c1_87 = arith.constant 1 : index
    %c0_88 = arith.constant 0 : index
    %c0_89 = arith.constant 0 : index
    %252 = vector.load %arg1[%c1_87, %c0_88, %c0_89] : memref<2x256x512xf32, #tpu.memory_space<vmem>>, vector<1x256x512xf32>
    %253 = vector.shape_cast %252 : vector<1x256x512xf32> to vector<256x512xf32>
    %cst_90 = arith.constant dense<0.000000e+00> : vector<8x512xf32>
    %254 = tpu.matmul %251, %253, %cst_90 {dimension_numbers = #tpu.dot_dimension_numbers<[1], [0], [0], [1], [0, 0, 1, 1], [], []>} : vector<8x256xf32>, vector<256x512xf32>, vector<8x512xf32> -> vector<8x512xf32>
    %c1_91 = arith.constant 1 : index
    %c0_92 = arith.constant 0 : index
    %c0_93 = arith.constant 0 : index
    %255 = vector.load %arg2[%c1_91, %c0_92, %c0_93] : memref<2x1x512xf32, #tpu.memory_space<vmem>>, vector<1x1x512xf32>
    %256 = vector.shape_cast %255 : vector<1x1x512xf32> to vector<1x512xf32>
    %257 = vector.broadcast %256 : vector<1x512xf32> to vector<8x512xf32>
    %258 = arith.addf %254, %257 : vector<8x512xf32>
    %259 = vector.extract_strided_slice %258 {offsets = [0, 0], sizes = [8, 128], strides = [1, 1]} : vector<8x512xf32> to vector<8x128xf32>
    %260 = arith.negf %259 : vector<8x128xf32>
    %261 = math.exp %260 : vector<8x128xf32>
    %cst_94 = arith.constant 1.000000e+00 : f32
    %262 = vector.broadcast %cst_94 : f32 to vector<8x128xf32>
    %263 = arith.addf %262, %261 : vector<8x128xf32>
    %264 = arith.divf %262, %263 : vector<8x128xf32>
    %265 = vector.extract_strided_slice %258 {offsets = [0, 128], sizes = [8, 128], strides = [1, 1]} : vector<8x512xf32> to vector<8x128xf32>
    %266 = arith.negf %265 : vector<8x128xf32>
    %267 = math.exp %266 : vector<8x128xf32>
    %cst_95 = arith.constant 1.000000e+00 : f32
    %268 = vector.broadcast %cst_95 : f32 to vector<8x128xf32>
    %269 = arith.addf %268, %267 : vector<8x128xf32>
    %270 = arith.divf %268, %269 : vector<8x128xf32>
    %271 = vector.extract_strided_slice %258 {offsets = [0, 256], sizes = [8, 128], strides = [1, 1]} : vector<8x512xf32> to vector<8x128xf32>
    %272 = math.tanh %271 : vector<8x128xf32>
    %273 = vector.extract_strided_slice %258 {offsets = [0, 384], sizes = [8, 128], strides = [1, 1]} : vector<8x512xf32> to vector<8x128xf32>
    %274 = arith.negf %273 : vector<8x128xf32>
    %275 = math.exp %274 : vector<8x128xf32>
    %cst_96 = arith.constant 1.000000e+00 : f32
    %276 = vector.broadcast %cst_96 : f32 to vector<8x128xf32>
    %277 = arith.addf %276, %275 : vector<8x128xf32>
    %278 = arith.divf %276, %277 : vector<8x128xf32>
    %279 = arith.mulf %270, %212 : vector<8x128xf32>
    %280 = arith.mulf %264, %272 : vector<8x128xf32>
    %281 = arith.addf %279, %280 : vector<8x128xf32>
    %282 = math.tanh %281 : vector<8x128xf32>
    %283 = arith.mulf %278, %282 : vector<8x128xf32>
    %c4_i32 = arith.constant 4 : i32
    %284 = arith.index_cast %c4_i32 : i32 to index
    %c0_97 = arith.constant 0 : index
    %c0_98 = arith.constant 0 : index
    %285 = vector.load %arg0[%284, %c0_97, %c0_98] : memref<8x8x128xf32, #tpu.memory_space<vmem>>, vector<1x8x128xf32>
    %286 = vector.shape_cast %285 : vector<1x8x128xf32> to vector<8x128xf32>
    %287 = tpu.concatenate %286, %250 in 1 : vector<8x128xf32>, vector<8x128xf32> -> vector<8x256xf32>
    %c0_99 = arith.constant 0 : index
    %c0_100 = arith.constant 0 : index
    %c0_101 = arith.constant 0 : index
    %288 = vector.load %arg1[%c0_99, %c0_100, %c0_101] : memref<2x256x512xf32, #tpu.memory_space<vmem>>, vector<1x256x512xf32>
    %289 = vector.shape_cast %288 : vector<1x256x512xf32> to vector<256x512xf32>
    %cst_102 = arith.constant dense<0.000000e+00> : vector<8x512xf32>
    %290 = tpu.matmul %287, %289, %cst_102 {dimension_numbers = #tpu.dot_dimension_numbers<[1], [0], [0], [1], [0, 0, 1, 1], [], []>} : vector<8x256xf32>, vector<256x512xf32>, vector<8x512xf32> -> vector<8x512xf32>
    %c0_103 = arith.constant 0 : index
    %c0_104 = arith.constant 0 : index
    %c0_105 = arith.constant 0 : index
    %291 = vector.load %arg2[%c0_103, %c0_104, %c0_105] : memref<2x1x512xf32, #tpu.memory_space<vmem>>, vector<1x1x512xf32>
    %292 = vector.shape_cast %291 : vector<1x1x512xf32> to vector<1x512xf32>
    %293 = vector.broadcast %292 : vector<1x512xf32> to vector<8x512xf32>
    %294 = arith.addf %290, %293 : vector<8x512xf32>
    %295 = vector.extract_strided_slice %294 {offsets = [0, 0], sizes = [8, 128], strides = [1, 1]} : vector<8x512xf32> to vector<8x128xf32>
    %296 = arith.negf %295 : vector<8x128xf32>
    %297 = math.exp %296 : vector<8x128xf32>
    %cst_106 = arith.constant 1.000000e+00 : f32
    %298 = vector.broadcast %cst_106 : f32 to vector<8x128xf32>
    %299 = arith.addf %298, %297 : vector<8x128xf32>
    %300 = arith.divf %298, %299 : vector<8x128xf32>
    %301 = vector.extract_strided_slice %294 {offsets = [0, 128], sizes = [8, 128], strides = [1, 1]} : vector<8x512xf32> to vector<8x128xf32>
    %302 = arith.negf %301 : vector<8x128xf32>
    %303 = math.exp %302 : vector<8x128xf32>
    %cst_107 = arith.constant 1.000000e+00 : f32
    %304 = vector.broadcast %cst_107 : f32 to vector<8x128xf32>
    %305 = arith.addf %304, %303 : vector<8x128xf32>
    %306 = arith.divf %304, %305 : vector<8x128xf32>
    %307 = vector.extract_strided_slice %294 {offsets = [0, 256], sizes = [8, 128], strides = [1, 1]} : vector<8x512xf32> to vector<8x128xf32>
    %308 = math.tanh %307 : vector<8x128xf32>
    %309 = vector.extract_strided_slice %294 {offsets = [0, 384], sizes = [8, 128], strides = [1, 1]} : vector<8x512xf32> to vector<8x128xf32>
    %310 = arith.negf %309 : vector<8x128xf32>
    %311 = math.exp %310 : vector<8x128xf32>
    %cst_108 = arith.constant 1.000000e+00 : f32
    %312 = vector.broadcast %cst_108 : f32 to vector<8x128xf32>
    %313 = arith.addf %312, %311 : vector<8x128xf32>
    %314 = arith.divf %312, %313 : vector<8x128xf32>
    %315 = arith.mulf %306, %248 : vector<8x128xf32>
    %316 = arith.mulf %300, %308 : vector<8x128xf32>
    %317 = arith.addf %315, %316 : vector<8x128xf32>
    %318 = math.tanh %317 : vector<8x128xf32>
    %319 = arith.mulf %314, %318 : vector<8x128xf32>
    %320 = tpu.concatenate %319, %283 in 1 : vector<8x128xf32>, vector<8x128xf32> -> vector<8x256xf32>
    %c1_109 = arith.constant 1 : index
    %c0_110 = arith.constant 0 : index
    %c0_111 = arith.constant 0 : index
    %321 = vector.load %arg1[%c1_109, %c0_110, %c0_111] : memref<2x256x512xf32, #tpu.memory_space<vmem>>, vector<1x256x512xf32>
    %322 = vector.shape_cast %321 : vector<1x256x512xf32> to vector<256x512xf32>
    %cst_112 = arith.constant dense<0.000000e+00> : vector<8x512xf32>
    %323 = tpu.matmul %320, %322, %cst_112 {dimension_numbers = #tpu.dot_dimension_numbers<[1], [0], [0], [1], [0, 0, 1, 1], [], []>} : vector<8x256xf32>, vector<256x512xf32>, vector<8x512xf32> -> vector<8x512xf32>
    %c1_113 = arith.constant 1 : index
    %c0_114 = arith.constant 0 : index
    %c0_115 = arith.constant 0 : index
    %324 = vector.load %arg2[%c1_113, %c0_114, %c0_115] : memref<2x1x512xf32, #tpu.memory_space<vmem>>, vector<1x1x512xf32>
    %325 = vector.shape_cast %324 : vector<1x1x512xf32> to vector<1x512xf32>
    %326 = vector.broadcast %325 : vector<1x512xf32> to vector<8x512xf32>
    %327 = arith.addf %323, %326 : vector<8x512xf32>
    %328 = vector.extract_strided_slice %327 {offsets = [0, 0], sizes = [8, 128], strides = [1, 1]} : vector<8x512xf32> to vector<8x128xf32>
    %329 = arith.negf %328 : vector<8x128xf32>
    %330 = math.exp %329 : vector<8x128xf32>
    %cst_116 = arith.constant 1.000000e+00 : f32
    %331 = vector.broadcast %cst_116 : f32 to vector<8x128xf32>
    %332 = arith.addf %331, %330 : vector<8x128xf32>
    %333 = arith.divf %331, %332 : vector<8x128xf32>
    %334 = vector.extract_strided_slice %327 {offsets = [0, 128], sizes = [8, 128], strides = [1, 1]} : vector<8x512xf32> to vector<8x128xf32>
    %335 = arith.negf %334 : vector<8x128xf32>
    %336 = math.exp %335 : vector<8x128xf32>
    %cst_117 = arith.constant 1.000000e+00 : f32
    %337 = vector.broadcast %cst_117 : f32 to vector<8x128xf32>
    %338 = arith.addf %337, %336 : vector<8x128xf32>
    %339 = arith.divf %337, %338 : vector<8x128xf32>
    %340 = vector.extract_strided_slice %327 {offsets = [0, 256], sizes = [8, 128], strides = [1, 1]} : vector<8x512xf32> to vector<8x128xf32>
    %341 = math.tanh %340 : vector<8x128xf32>
    %342 = vector.extract_strided_slice %327 {offsets = [0, 384], sizes = [8, 128], strides = [1, 1]} : vector<8x512xf32> to vector<8x128xf32>
    %343 = arith.negf %342 : vector<8x128xf32>
    %344 = math.exp %343 : vector<8x128xf32>
    %cst_118 = arith.constant 1.000000e+00 : f32
    %345 = vector.broadcast %cst_118 : f32 to vector<8x128xf32>
    %346 = arith.addf %345, %344 : vector<8x128xf32>
    %347 = arith.divf %345, %346 : vector<8x128xf32>
    %348 = arith.mulf %339, %281 : vector<8x128xf32>
    %349 = arith.mulf %333, %341 : vector<8x128xf32>
    %350 = arith.addf %348, %349 : vector<8x128xf32>
    %351 = math.tanh %350 : vector<8x128xf32>
    %352 = arith.mulf %347, %351 : vector<8x128xf32>
    %c5_i32 = arith.constant 5 : i32
    %353 = arith.index_cast %c5_i32 : i32 to index
    %c0_119 = arith.constant 0 : index
    %c0_120 = arith.constant 0 : index
    %354 = vector.load %arg0[%353, %c0_119, %c0_120] : memref<8x8x128xf32, #tpu.memory_space<vmem>>, vector<1x8x128xf32>
    %355 = vector.shape_cast %354 : vector<1x8x128xf32> to vector<8x128xf32>
    %356 = tpu.concatenate %355, %319 in 1 : vector<8x128xf32>, vector<8x128xf32> -> vector<8x256xf32>
    %c0_121 = arith.constant 0 : index
    %c0_122 = arith.constant 0 : index
    %c0_123 = arith.constant 0 : index
    %357 = vector.load %arg1[%c0_121, %c0_122, %c0_123] : memref<2x256x512xf32, #tpu.memory_space<vmem>>, vector<1x256x512xf32>
    %358 = vector.shape_cast %357 : vector<1x256x512xf32> to vector<256x512xf32>
    %cst_124 = arith.constant dense<0.000000e+00> : vector<8x512xf32>
    %359 = tpu.matmul %356, %358, %cst_124 {dimension_numbers = #tpu.dot_dimension_numbers<[1], [0], [0], [1], [0, 0, 1, 1], [], []>} : vector<8x256xf32>, vector<256x512xf32>, vector<8x512xf32> -> vector<8x512xf32>
    %c0_125 = arith.constant 0 : index
    %c0_126 = arith.constant 0 : index
    %c0_127 = arith.constant 0 : index
    %360 = vector.load %arg2[%c0_125, %c0_126, %c0_127] : memref<2x1x512xf32, #tpu.memory_space<vmem>>, vector<1x1x512xf32>
    %361 = vector.shape_cast %360 : vector<1x1x512xf32> to vector<1x512xf32>
    %362 = vector.broadcast %361 : vector<1x512xf32> to vector<8x512xf32>
    %363 = arith.addf %359, %362 : vector<8x512xf32>
    %364 = vector.extract_strided_slice %363 {offsets = [0, 0], sizes = [8, 128], strides = [1, 1]} : vector<8x512xf32> to vector<8x128xf32>
    %365 = arith.negf %364 : vector<8x128xf32>
    %366 = math.exp %365 : vector<8x128xf32>
    %cst_128 = arith.constant 1.000000e+00 : f32
    %367 = vector.broadcast %cst_128 : f32 to vector<8x128xf32>
    %368 = arith.addf %367, %366 : vector<8x128xf32>
    %369 = arith.divf %367, %368 : vector<8x128xf32>
    %370 = vector.extract_strided_slice %363 {offsets = [0, 128], sizes = [8, 128], strides = [1, 1]} : vector<8x512xf32> to vector<8x128xf32>
    %371 = arith.negf %370 : vector<8x128xf32>
    %372 = math.exp %371 : vector<8x128xf32>
    %cst_129 = arith.constant 1.000000e+00 : f32
    %373 = vector.broadcast %cst_129 : f32 to vector<8x128xf32>
    %374 = arith.addf %373, %372 : vector<8x128xf32>
    %375 = arith.divf %373, %374 : vector<8x128xf32>
    %376 = vector.extract_strided_slice %363 {offsets = [0, 256], sizes = [8, 128], strides = [1, 1]} : vector<8x512xf32> to vector<8x128xf32>
    %377 = math.tanh %376 : vector<8x128xf32>
    %378 = vector.extract_strided_slice %363 {offsets = [0, 384], sizes = [8, 128], strides = [1, 1]} : vector<8x512xf32> to vector<8x128xf32>
    %379 = arith.negf %378 : vector<8x128xf32>
    %380 = math.exp %379 : vector<8x128xf32>
    %cst_130 = arith.constant 1.000000e+00 : f32
    %381 = vector.broadcast %cst_130 : f32 to vector<8x128xf32>
    %382 = arith.addf %381, %380 : vector<8x128xf32>
    %383 = arith.divf %381, %382 : vector<8x128xf32>
    %384 = arith.mulf %375, %317 : vector<8x128xf32>
    %385 = arith.mulf %369, %377 : vector<8x128xf32>
    %386 = arith.addf %384, %385 : vector<8x128xf32>
    %387 = math.tanh %386 : vector<8x128xf32>
    %388 = arith.mulf %383, %387 : vector<8x128xf32>
    %389 = tpu.concatenate %388, %352 in 1 : vector<8x128xf32>, vector<8x128xf32> -> vector<8x256xf32>
    %c1_131 = arith.constant 1 : index
    %c0_132 = arith.constant 0 : index
    %c0_133 = arith.constant 0 : index
    %390 = vector.load %arg1[%c1_131, %c0_132, %c0_133] : memref<2x256x512xf32, #tpu.memory_space<vmem>>, vector<1x256x512xf32>
    %391 = vector.shape_cast %390 : vector<1x256x512xf32> to vector<256x512xf32>
    %cst_134 = arith.constant dense<0.000000e+00> : vector<8x512xf32>
    %392 = tpu.matmul %389, %391, %cst_134 {dimension_numbers = #tpu.dot_dimension_numbers<[1], [0], [0], [1], [0, 0, 1, 1], [], []>} : vector<8x256xf32>, vector<256x512xf32>, vector<8x512xf32> -> vector<8x512xf32>
    %c1_135 = arith.constant 1 : index
    %c0_136 = arith.constant 0 : index
    %c0_137 = arith.constant 0 : index
    %393 = vector.load %arg2[%c1_135, %c0_136, %c0_137] : memref<2x1x512xf32, #tpu.memory_space<vmem>>, vector<1x1x512xf32>
    %394 = vector.shape_cast %393 : vector<1x1x512xf32> to vector<1x512xf32>
    %395 = vector.broadcast %394 : vector<1x512xf32> to vector<8x512xf32>
    %396 = arith.addf %392, %395 : vector<8x512xf32>
    %397 = vector.extract_strided_slice %396 {offsets = [0, 0], sizes = [8, 128], strides = [1, 1]} : vector<8x512xf32> to vector<8x128xf32>
    %398 = arith.negf %397 : vector<8x128xf32>
    %399 = math.exp %398 : vector<8x128xf32>
    %cst_138 = arith.constant 1.000000e+00 : f32
    %400 = vector.broadcast %cst_138 : f32 to vector<8x128xf32>
    %401 = arith.addf %400, %399 : vector<8x128xf32>
    %402 = arith.divf %400, %401 : vector<8x128xf32>
    %403 = vector.extract_strided_slice %396 {offsets = [0, 128], sizes = [8, 128], strides = [1, 1]} : vector<8x512xf32> to vector<8x128xf32>
    %404 = arith.negf %403 : vector<8x128xf32>
    %405 = math.exp %404 : vector<8x128xf32>
    %cst_139 = arith.constant 1.000000e+00 : f32
    %406 = vector.broadcast %cst_139 : f32 to vector<8x128xf32>
    %407 = arith.addf %406, %405 : vector<8x128xf32>
    %408 = arith.divf %406, %407 : vector<8x128xf32>
    %409 = vector.extract_strided_slice %396 {offsets = [0, 256], sizes = [8, 128], strides = [1, 1]} : vector<8x512xf32> to vector<8x128xf32>
    %410 = math.tanh %409 : vector<8x128xf32>
    %411 = vector.extract_strided_slice %396 {offsets = [0, 384], sizes = [8, 128], strides = [1, 1]} : vector<8x512xf32> to vector<8x128xf32>
    %412 = arith.negf %411 : vector<8x128xf32>
    %413 = math.exp %412 : vector<8x128xf32>
    %cst_140 = arith.constant 1.000000e+00 : f32
    %414 = vector.broadcast %cst_140 : f32 to vector<8x128xf32>
    %415 = arith.addf %414, %413 : vector<8x128xf32>
    %416 = arith.divf %414, %415 : vector<8x128xf32>
    %417 = arith.mulf %408, %350 : vector<8x128xf32>
    %418 = arith.mulf %402, %410 : vector<8x128xf32>
    %419 = arith.addf %417, %418 : vector<8x128xf32>
    %420 = math.tanh %419 : vector<8x128xf32>
    %421 = arith.mulf %416, %420 : vector<8x128xf32>
    %c6_i32 = arith.constant 6 : i32
    %422 = arith.index_cast %c6_i32 : i32 to index
    %c0_141 = arith.constant 0 : index
    %c0_142 = arith.constant 0 : index
    %423 = vector.load %arg0[%422, %c0_141, %c0_142] : memref<8x8x128xf32, #tpu.memory_space<vmem>>, vector<1x8x128xf32>
    %424 = vector.shape_cast %423 : vector<1x8x128xf32> to vector<8x128xf32>
    %425 = tpu.concatenate %424, %388 in 1 : vector<8x128xf32>, vector<8x128xf32> -> vector<8x256xf32>
    %c0_143 = arith.constant 0 : index
    %c0_144 = arith.constant 0 : index
    %c0_145 = arith.constant 0 : index
    %426 = vector.load %arg1[%c0_143, %c0_144, %c0_145] : memref<2x256x512xf32, #tpu.memory_space<vmem>>, vector<1x256x512xf32>
    %427 = vector.shape_cast %426 : vector<1x256x512xf32> to vector<256x512xf32>
    %cst_146 = arith.constant dense<0.000000e+00> : vector<8x512xf32>
    %428 = tpu.matmul %425, %427, %cst_146 {dimension_numbers = #tpu.dot_dimension_numbers<[1], [0], [0], [1], [0, 0, 1, 1], [], []>} : vector<8x256xf32>, vector<256x512xf32>, vector<8x512xf32> -> vector<8x512xf32>
    %c0_147 = arith.constant 0 : index
    %c0_148 = arith.constant 0 : index
    %c0_149 = arith.constant 0 : index
    %429 = vector.load %arg2[%c0_147, %c0_148, %c0_149] : memref<2x1x512xf32, #tpu.memory_space<vmem>>, vector<1x1x512xf32>
    %430 = vector.shape_cast %429 : vector<1x1x512xf32> to vector<1x512xf32>
    %431 = vector.broadcast %430 : vector<1x512xf32> to vector<8x512xf32>
    %432 = arith.addf %428, %431 : vector<8x512xf32>
    %433 = vector.extract_strided_slice %432 {offsets = [0, 0], sizes = [8, 128], strides = [1, 1]} : vector<8x512xf32> to vector<8x128xf32>
    %434 = arith.negf %433 : vector<8x128xf32>
    %435 = math.exp %434 : vector<8x128xf32>
    %cst_150 = arith.constant 1.000000e+00 : f32
    %436 = vector.broadcast %cst_150 : f32 to vector<8x128xf32>
    %437 = arith.addf %436, %435 : vector<8x128xf32>
    %438 = arith.divf %436, %437 : vector<8x128xf32>
    %439 = vector.extract_strided_slice %432 {offsets = [0, 128], sizes = [8, 128], strides = [1, 1]} : vector<8x512xf32> to vector<8x128xf32>
    %440 = arith.negf %439 : vector<8x128xf32>
    %441 = math.exp %440 : vector<8x128xf32>
    %cst_151 = arith.constant 1.000000e+00 : f32
    %442 = vector.broadcast %cst_151 : f32 to vector<8x128xf32>
    %443 = arith.addf %442, %441 : vector<8x128xf32>
    %444 = arith.divf %442, %443 : vector<8x128xf32>
    %445 = vector.extract_strided_slice %432 {offsets = [0, 256], sizes = [8, 128], strides = [1, 1]} : vector<8x512xf32> to vector<8x128xf32>
    %446 = math.tanh %445 : vector<8x128xf32>
    %447 = vector.extract_strided_slice %432 {offsets = [0, 384], sizes = [8, 128], strides = [1, 1]} : vector<8x512xf32> to vector<8x128xf32>
    %448 = arith.negf %447 : vector<8x128xf32>
    %449 = math.exp %448 : vector<8x128xf32>
    %cst_152 = arith.constant 1.000000e+00 : f32
    %450 = vector.broadcast %cst_152 : f32 to vector<8x128xf32>
    %451 = arith.addf %450, %449 : vector<8x128xf32>
    %452 = arith.divf %450, %451 : vector<8x128xf32>
    %453 = arith.mulf %444, %386 : vector<8x128xf32>
    %454 = arith.mulf %438, %446 : vector<8x128xf32>
    %455 = arith.addf %453, %454 : vector<8x128xf32>
    %456 = math.tanh %455 : vector<8x128xf32>
    %457 = arith.mulf %452, %456 : vector<8x128xf32>
    %458 = tpu.concatenate %457, %421 in 1 : vector<8x128xf32>, vector<8x128xf32> -> vector<8x256xf32>
    %c1_153 = arith.constant 1 : index
    %c0_154 = arith.constant 0 : index
    %c0_155 = arith.constant 0 : index
    %459 = vector.load %arg1[%c1_153, %c0_154, %c0_155] : memref<2x256x512xf32, #tpu.memory_space<vmem>>, vector<1x256x512xf32>
    %460 = vector.shape_cast %459 : vector<1x256x512xf32> to vector<256x512xf32>
    %cst_156 = arith.constant dense<0.000000e+00> : vector<8x512xf32>
    %461 = tpu.matmul %458, %460, %cst_156 {dimension_numbers = #tpu.dot_dimension_numbers<[1], [0], [0], [1], [0, 0, 1, 1], [], []>} : vector<8x256xf32>, vector<256x512xf32>, vector<8x512xf32> -> vector<8x512xf32>
    %c1_157 = arith.constant 1 : index
    %c0_158 = arith.constant 0 : index
    %c0_159 = arith.constant 0 : index
    %462 = vector.load %arg2[%c1_157, %c0_158, %c0_159] : memref<2x1x512xf32, #tpu.memory_space<vmem>>, vector<1x1x512xf32>
    %463 = vector.shape_cast %462 : vector<1x1x512xf32> to vector<1x512xf32>
    %464 = vector.broadcast %463 : vector<1x512xf32> to vector<8x512xf32>
    %465 = arith.addf %461, %464 : vector<8x512xf32>
    %466 = vector.extract_strided_slice %465 {offsets = [0, 0], sizes = [8, 128], strides = [1, 1]} : vector<8x512xf32> to vector<8x128xf32>
    %467 = arith.negf %466 : vector<8x128xf32>
    %468 = math.exp %467 : vector<8x128xf32>
    %cst_160 = arith.constant 1.000000e+00 : f32
    %469 = vector.broadcast %cst_160 : f32 to vector<8x128xf32>
    %470 = arith.addf %469, %468 : vector<8x128xf32>
    %471 = arith.divf %469, %470 : vector<8x128xf32>
    %472 = vector.extract_strided_slice %465 {offsets = [0, 128], sizes = [8, 128], strides = [1, 1]} : vector<8x512xf32> to vector<8x128xf32>
    %473 = arith.negf %472 : vector<8x128xf32>
    %474 = math.exp %473 : vector<8x128xf32>
    %cst_161 = arith.constant 1.000000e+00 : f32
    %475 = vector.broadcast %cst_161 : f32 to vector<8x128xf32>
    %476 = arith.addf %475, %474 : vector<8x128xf32>
    %477 = arith.divf %475, %476 : vector<8x128xf32>
    %478 = vector.extract_strided_slice %465 {offsets = [0, 256], sizes = [8, 128], strides = [1, 1]} : vector<8x512xf32> to vector<8x128xf32>
    %479 = math.tanh %478 : vector<8x128xf32>
    %480 = vector.extract_strided_slice %465 {offsets = [0, 384], sizes = [8, 128], strides = [1, 1]} : vector<8x512xf32> to vector<8x128xf32>
    %481 = arith.negf %480 : vector<8x128xf32>
    %482 = math.exp %481 : vector<8x128xf32>
    %cst_162 = arith.constant 1.000000e+00 : f32
    %483 = vector.broadcast %cst_162 : f32 to vector<8x128xf32>
    %484 = arith.addf %483, %482 : vector<8x128xf32>
    %485 = arith.divf %483, %484 : vector<8x128xf32>
    %486 = arith.mulf %477, %419 : vector<8x128xf32>
    %487 = arith.mulf %471, %479 : vector<8x128xf32>
    %488 = arith.addf %486, %487 : vector<8x128xf32>
    %489 = math.tanh %488 : vector<8x128xf32>
    %490 = arith.mulf %485, %489 : vector<8x128xf32>
    %c7_i32 = arith.constant 7 : i32
    %491 = arith.index_cast %c7_i32 : i32 to index
    %c0_163 = arith.constant 0 : index
    %c0_164 = arith.constant 0 : index
    %492 = vector.load %arg0[%491, %c0_163, %c0_164] : memref<8x8x128xf32, #tpu.memory_space<vmem>>, vector<1x8x128xf32>
    %493 = vector.shape_cast %492 : vector<1x8x128xf32> to vector<8x128xf32>
    %494 = tpu.concatenate %493, %457 in 1 : vector<8x128xf32>, vector<8x128xf32> -> vector<8x256xf32>
    %c0_165 = arith.constant 0 : index
    %c0_166 = arith.constant 0 : index
    %c0_167 = arith.constant 0 : index
    %495 = vector.load %arg1[%c0_165, %c0_166, %c0_167] : memref<2x256x512xf32, #tpu.memory_space<vmem>>, vector<1x256x512xf32>
    %496 = vector.shape_cast %495 : vector<1x256x512xf32> to vector<256x512xf32>
    %cst_168 = arith.constant dense<0.000000e+00> : vector<8x512xf32>
    %497 = tpu.matmul %494, %496, %cst_168 {dimension_numbers = #tpu.dot_dimension_numbers<[1], [0], [0], [1], [0, 0, 1, 1], [], []>} : vector<8x256xf32>, vector<256x512xf32>, vector<8x512xf32> -> vector<8x512xf32>
    %c0_169 = arith.constant 0 : index
    %c0_170 = arith.constant 0 : index
    %c0_171 = arith.constant 0 : index
    %498 = vector.load %arg2[%c0_169, %c0_170, %c0_171] : memref<2x1x512xf32, #tpu.memory_space<vmem>>, vector<1x1x512xf32>
    %499 = vector.shape_cast %498 : vector<1x1x512xf32> to vector<1x512xf32>
    %500 = vector.broadcast %499 : vector<1x512xf32> to vector<8x512xf32>
    %501 = arith.addf %497, %500 : vector<8x512xf32>
    %502 = vector.extract_strided_slice %501 {offsets = [0, 0], sizes = [8, 128], strides = [1, 1]} : vector<8x512xf32> to vector<8x128xf32>
    %503 = arith.negf %502 : vector<8x128xf32>
    %504 = math.exp %503 : vector<8x128xf32>
    %cst_172 = arith.constant 1.000000e+00 : f32
    %505 = vector.broadcast %cst_172 : f32 to vector<8x128xf32>
    %506 = arith.addf %505, %504 : vector<8x128xf32>
    %507 = arith.divf %505, %506 : vector<8x128xf32>
    %508 = vector.extract_strided_slice %501 {offsets = [0, 128], sizes = [8, 128], strides = [1, 1]} : vector<8x512xf32> to vector<8x128xf32>
    %509 = arith.negf %508 : vector<8x128xf32>
    %510 = math.exp %509 : vector<8x128xf32>
    %cst_173 = arith.constant 1.000000e+00 : f32
    %511 = vector.broadcast %cst_173 : f32 to vector<8x128xf32>
    %512 = arith.addf %511, %510 : vector<8x128xf32>
    %513 = arith.divf %511, %512 : vector<8x128xf32>
    %514 = vector.extract_strided_slice %501 {offsets = [0, 256], sizes = [8, 128], strides = [1, 1]} : vector<8x512xf32> to vector<8x128xf32>
    %515 = math.tanh %514 : vector<8x128xf32>
    %516 = vector.extract_strided_slice %501 {offsets = [0, 384], sizes = [8, 128], strides = [1, 1]} : vector<8x512xf32> to vector<8x128xf32>
    %517 = arith.negf %516 : vector<8x128xf32>
    %518 = math.exp %517 : vector<8x128xf32>
    %cst_174 = arith.constant 1.000000e+00 : f32
    %519 = vector.broadcast %cst_174 : f32 to vector<8x128xf32>
    %520 = arith.addf %519, %518 : vector<8x128xf32>
    %521 = arith.divf %519, %520 : vector<8x128xf32>
    %522 = arith.mulf %513, %455 : vector<8x128xf32>
    %523 = arith.mulf %507, %515 : vector<8x128xf32>
    %524 = arith.addf %522, %523 : vector<8x128xf32>
    %525 = math.tanh %524 : vector<8x128xf32>
    %526 = arith.mulf %521, %525 : vector<8x128xf32>
    %527 = tpu.concatenate %526, %490 in 1 : vector<8x128xf32>, vector<8x128xf32> -> vector<8x256xf32>
    %c1_175 = arith.constant 1 : index
    %c0_176 = arith.constant 0 : index
    %c0_177 = arith.constant 0 : index
    %528 = vector.load %arg1[%c1_175, %c0_176, %c0_177] : memref<2x256x512xf32, #tpu.memory_space<vmem>>, vector<1x256x512xf32>
    %529 = vector.shape_cast %528 : vector<1x256x512xf32> to vector<256x512xf32>
    %cst_178 = arith.constant dense<0.000000e+00> : vector<8x512xf32>
    %530 = tpu.matmul %527, %529, %cst_178 {dimension_numbers = #tpu.dot_dimension_numbers<[1], [0], [0], [1], [0, 0, 1, 1], [], []>} : vector<8x256xf32>, vector<256x512xf32>, vector<8x512xf32> -> vector<8x512xf32>
    %c1_179 = arith.constant 1 : index
    %c0_180 = arith.constant 0 : index
    %c0_181 = arith.constant 0 : index
    %531 = vector.load %arg2[%c1_179, %c0_180, %c0_181] : memref<2x1x512xf32, #tpu.memory_space<vmem>>, vector<1x1x512xf32>
    %532 = vector.shape_cast %531 : vector<1x1x512xf32> to vector<1x512xf32>
    %533 = vector.broadcast %532 : vector<1x512xf32> to vector<8x512xf32>
    %534 = arith.addf %530, %533 : vector<8x512xf32>
    %535 = vector.extract_strided_slice %534 {offsets = [0, 0], sizes = [8, 128], strides = [1, 1]} : vector<8x512xf32> to vector<8x128xf32>
    %536 = arith.negf %535 : vector<8x128xf32>
    %537 = math.exp %536 : vector<8x128xf32>
    %cst_182 = arith.constant 1.000000e+00 : f32
    %538 = vector.broadcast %cst_182 : f32 to vector<8x128xf32>
    %539 = arith.addf %538, %537 : vector<8x128xf32>
    %540 = arith.divf %538, %539 : vector<8x128xf32>
    %541 = vector.extract_strided_slice %534 {offsets = [0, 128], sizes = [8, 128], strides = [1, 1]} : vector<8x512xf32> to vector<8x128xf32>
    %542 = arith.negf %541 : vector<8x128xf32>
    %543 = math.exp %542 : vector<8x128xf32>
    %cst_183 = arith.constant 1.000000e+00 : f32
    %544 = vector.broadcast %cst_183 : f32 to vector<8x128xf32>
    %545 = arith.addf %544, %543 : vector<8x128xf32>
    %546 = arith.divf %544, %545 : vector<8x128xf32>
    %547 = vector.extract_strided_slice %534 {offsets = [0, 256], sizes = [8, 128], strides = [1, 1]} : vector<8x512xf32> to vector<8x128xf32>
    %548 = math.tanh %547 : vector<8x128xf32>
    %549 = vector.extract_strided_slice %534 {offsets = [0, 384], sizes = [8, 128], strides = [1, 1]} : vector<8x512xf32> to vector<8x128xf32>
    %550 = arith.negf %549 : vector<8x128xf32>
    %551 = math.exp %550 : vector<8x128xf32>
    %cst_184 = arith.constant 1.000000e+00 : f32
    %552 = vector.broadcast %cst_184 : f32 to vector<8x128xf32>
    %553 = arith.addf %552, %551 : vector<8x128xf32>
    %554 = arith.divf %552, %553 : vector<8x128xf32>
    %555 = arith.mulf %546, %488 : vector<8x128xf32>
    %556 = arith.mulf %540, %548 : vector<8x128xf32>
    %557 = arith.addf %555, %556 : vector<8x128xf32>
    %558 = math.tanh %557 : vector<8x128xf32>
    %559 = arith.mulf %554, %558 : vector<8x128xf32>
    %c8_i32 = arith.constant 8 : i32
    %c0_185 = arith.constant 0 : index
    %c0_186 = arith.constant 0 : index
    %c0_187 = arith.constant 0 : index
    %560 = vector.load %arg8[%c0_185, %c0_186, %c0_187] : memref<2x8x128xf32, #tpu.memory_space<vmem>>, vector<1x8x128xf32>
    %561 = vector.shape_cast %560 : vector<1x8x128xf32> to vector<8x128xf32>
    %562 = vector.shape_cast %526 : vector<8x128xf32> to vector<1x8x128xf32>
    tpu.vector_store %arg8[%c0_185, %c0_186, %c0_187], %562 {strides = array<i32>} : memref<2x8x128xf32, #tpu.memory_space<vmem>>, vector<1x8x128xf32>,
    %c0_188 = arith.constant 0 : index
    %c0_189 = arith.constant 0 : index
    %c0_190 = arith.constant 0 : index
    %563 = vector.load %arg9[%c0_188, %c0_189, %c0_190] : memref<2x8x128xf32, #tpu.memory_space<vmem>>, vector<1x8x128xf32>
    %564 = vector.shape_cast %563 : vector<1x8x128xf32> to vector<8x128xf32>
    %565 = vector.shape_cast %524 : vector<8x128xf32> to vector<1x8x128xf32>
    tpu.vector_store %arg9[%c0_188, %c0_189, %c0_190], %565 {strides = array<i32>} : memref<2x8x128xf32, #tpu.memory_space<vmem>>, vector<1x8x128xf32>,
    %c1_191 = arith.constant 1 : index
    %c0_192 = arith.constant 0 : index
    %c0_193 = arith.constant 0 : index
    %566 = vector.load %arg8[%c1_191, %c0_192, %c0_193] : memref<2x8x128xf32, #tpu.memory_space<vmem>>, vector<1x8x128xf32>
    %567 = vector.shape_cast %566 : vector<1x8x128xf32> to vector<8x128xf32>
    %568 = vector.shape_cast %559 : vector<8x128xf32> to vector<1x8x128xf32>
    tpu.vector_store %arg8[%c1_191, %c0_192, %c0_193], %568 {strides = array<i32>} : memref<2x8x128xf32, #tpu.memory_space<vmem>>, vector<1x8x128xf32>,
    %c1_194 = arith.constant 1 : index
    %c0_195 = arith.constant 0 : index
    %c0_196 = arith.constant 0 : index
    %569 = vector.load %arg9[%c1_194, %c0_195, %c0_196] : memref<2x8x128xf32, #tpu.memory_space<vmem>>, vector<1x8x128xf32>
    %570 = vector.shape_cast %569 : vector<1x8x128xf32> to vector<8x128xf32>
    %571 = vector.shape_cast %557 : vector<8x128xf32> to vector<1x8x128xf32>
    tpu.vector_store %arg9[%c1_194, %c0_195, %c0_196], %571 {strides = array<i32>} : memref<2x8x128xf32, #tpu.memory_space<vmem>>, vector<1x8x128xf32>,
    %cst_197 = arith.constant 0.000000e+00 : f32
    %572 = vector.broadcast %cst_197 : f32 to vector<8x128xf32>
    %573 = arith.maximumf %559, %572 : vector<8x128xf32>
    %c0_198 = arith.constant 0 : index
    %c0_199 = arith.constant 0 : index
    %574 = vector.load %arg3[%c0_198, %c0_199] : memref<128x128xf32, #tpu.memory_space<vmem>>, vector<128x128xf32>
    %cst_200 = arith.constant dense<0.000000e+00> : vector<8x128xf32>
    %575 = tpu.matmul %573, %574, %cst_200 {dimension_numbers = #tpu.dot_dimension_numbers<[1], [0], [0], [1], [0, 0, 1, 1], [], []>} : vector<8x128xf32>, vector<128x128xf32>, vector<8x128xf32> -> vector<8x128xf32>
    %c0_201 = arith.constant 0 : index
    %c0_202 = arith.constant 0 : index
    %576 = vector.load %arg4[%c0_201, %c0_202] : memref<1x128xf32, #tpu.memory_space<vmem>>, vector<1x128xf32>
    %577 = vector.broadcast %576 : vector<1x128xf32> to vector<8x128xf32>
    %578 = arith.addf %575, %577 : vector<8x128xf32>
    %c0_203 = arith.constant 0 : index
    %c0_204 = arith.constant 0 : index
    %579 = vector.load %arg7[%c0_203, %c0_204] : memref<8x128xf32, #tpu.memory_space<vmem>>, vector<8x128xf32>
    tpu.vector_store %arg7[%c0_203, %c0_204], %578 {strides = array<i32>} : memref<8x128xf32, #tpu.memory_space<vmem>>, vector<8x128xf32>,
    return
  }
}

</mosaic_0001>

<llo_original>
// kernel: lstm_net_forward.1
$region0: #{lstm_net_forward.1}
  #allocation0 [shape = 'u32[]', space=smem, size = 0x4, offset = 0x4, fixed_abs, tag = 'smem constant byte address 0x4 - core index']
  #allocation1 [shape = 'u32[144,128]{1,0:T(1,128)}', space=vmem, size = 0x12000, scoped, tag = 'internal scratch']
  %s0 = inlined_call_operand.vmem [shape: f32[8,8,128], index: 0, kind: input, shape index: {}]
  %s1 = inlined_call_operand.hbm [shape: f32[2,256,512], index: 1, kind: input, shape index: {}]
  %s2 = inlined_call_operand.vmem [shape: f32[2,1,512], index: 2, kind: input, shape index: {}]
  %s3 = inlined_call_operand.vmem [shape: f32[128,128], index: 3, kind: input, shape index: {}]
  %s4 = inlined_call_operand.vmem [shape: f32[1,128], index: 4, kind: input, shape index: {}]
  %s5 = inlined_call_operand.vmem [shape: f32[2,8,128], index: 5, kind: input, shape index: {}]
  %s6 = inlined_call_operand.vmem [shape: f32[2,8,128], index: 6, kind: input, shape index: {}]
  %s7 = inlined_call_operand.vmem [shape: f32[8,128], index: 7, kind: output, shape index: {0}]
  %s8 = inlined_call_operand.vmem [shape: f32[2,8,128], index: 8, kind: output, shape index: {1}]
  %s9 = inlined_call_operand.vmem [shape: f32[2,8,128], index: 9, kind: output, shape index: {2}]
  %10 = xla_tuple %s7, %s8, %s9
  %s11 = sld [smem:[#allocation0]]
  $region58: #{lstm_net_forward.1} parent=0
    _
  %s13 = ssub.s32 1, %s11
  %s14 = scalar_select 0, %s13, %s11
  $region1: #{lstm_net_forward.1} parent=0
    #allocation2 [shape = 'u8[1048576]{0}', space=vmem, size = 0x100000, scoped, tag = 'input window, operand 1, single buffered']
    #allocation3 [shape = 's32[1]{0}', space=sflag, size = 0x4, scoped, tag = 'scoped memory for lstm_net_forward.1']
    %15 = vsyncpa [#allocation3], 0
    // Predicated region
    $region2: #{lstm_net_forward.1} parent=1 // pred_check
      _
    $region3: #{lstm_net_forward.1} parent=1 // pred_check_branch
      %17 = sbr.rel (0) target = $region5
    $region4: #{lstm_net_forward.1} parent=1 // pred_region
      _
    $region5: #{lstm_net_forward.1} parent=1 // pred_fallthru
      _
    // Predicated region
    $region6: #{lstm_net_forward.1} parent=1 // pred_check
      _
    $region7: #{lstm_net_forward.1} parent=1 // pred_check_branch
      %19 = sbr.rel (0) target = $region9
    $region8: #{lstm_net_forward.1} parent=1 // pred_region
      %s21 = ssub.s32 32768, 32768
      %22 = vsyncadd [#allocation3], %s21
      %s23 = sshll.u32 [#allocation2], 4
      %s24 = int_to_ptr.vmem [resolvable:$true] %s23
      %29 = dma.hbm_to_vmem [thread:$0]  %s1, 32768, %s24, [#allocation3], 512, 512, 32
    $region9: #{lstm_net_forward.1} parent=1 // pred_fallthru
      _
    // Predicated region
    $region10: #{lstm_net_forward.1} parent=1 // pred_check
      _
    $region11: #{lstm_net_forward.1} parent=1 // pred_check_branch
      %31 = sbr.rel (0) target = $region13
    $region12: #{lstm_net_forward.1} parent=1 // pred_region
      _
    $region13: #{lstm_net_forward.1} parent=1 // pred_fallthru
      _
    // Predicated region
    $region14: #{lstm_net_forward.1} parent=1 // pred_check
      _
    $region15: #{lstm_net_forward.1} parent=1 // pred_check_branch
      %33 = sbr.rel (0) target = $region17
    $region16: #{lstm_net_forward.1} parent=1 // pred_region
      _
    $region17: #{lstm_net_forward.1} parent=1 // pred_fallthru
      _
    // Predicated region
    $region18: #{lstm_net_forward.1} parent=1 // pred_check
      _
    $region19: #{lstm_net_forward.1} parent=1 // pred_check_branch
      %35 = sbr.rel (0) target = $region21
    $region20: #{lstm_net_forward.1} parent=1 // pred_region
      _
    $region21: #{lstm_net_forward.1} parent=1 // pred_fallthru
      _
    // Predicated region
    $region22: #{lstm_net_forward.1} parent=1 // pred_check
      _
    $region23: #{lstm_net_forward.1} parent=1 // pred_check_branch
      %37 = sbr.rel (0) target = $region25
    $region24: #{lstm_net_forward.1} parent=1 // pred_region
      _
    $region25: #{lstm_net_forward.1} parent=1 // pred_fallthru
      _
    // Predicated region
    $region26: #{lstm_net_forward.1} parent=1 // pred_check
      _
    $region27: #{lstm_net_forward.1} parent=1 // pred_check_branch
      %39 = sbr.rel (0) target = $region29
    $region28: #{lstm_net_forward.1} parent=1 // pred_region
      _
    $region29: #{lstm_net_forward.1} parent=1 // pred_fallthru
      _
    // Predicated region
    $region30: #{lstm_net_forward.1} parent=1 // pred_check
      _
    $region31: #{lstm_net_forward.1} parent=1 // pred_check_branch
      %41 = sbr.rel (0) target = $region33
    $region32: #{lstm_net_forward.1} parent=1 // pred_region
      %42 = dma.done [#allocation3], 32768
    $region33: #{lstm_net_forward.1} parent=1 // pred_fallthru
      _
    %v43 = vld [vmem:[%s5] sm:$0xff]
    %s44 = scalar_lea.vmem %s5, 8
    %v45 = vld [vmem:[%s44] sm:$0xff]
    %v46 = vld [vmem:[%s6] sm:$0xff]
    %s47 = scalar_lea.vmem %s6, 8
    %v48 = vld [vmem:[%s47] sm:$0xff]
    %v49 = vld [vmem:[%s0] sm:$0xff]
    %v50 = vld [vmem:[#allocation2] sm:$0xff]
    %v51 = vld [vmem:[#allocation2 + $0x8] sm:$0xff]
    %v52 = vld [vmem:[#allocation2 + $0x10] sm:$0xff]
    %v53 = vld [vmem:[#allocation2 + $0x18] sm:$0xff]
    %v54 = vld [vmem:[#allocation2 + $0x20] sm:$0xff]
    %v55 = vld [vmem:[#allocation2 + $0x28] sm:$0xff]
    %v56 = vld [vmem:[#allocation2 + $0x30] sm:$0xff]
    %v57 = vld [vmem:[#allocation2 + $0x38] sm:$0xff]
    %v58 = vld [vmem:[#allocation2 + $0x40] sm:$0xff]
    %v59 = vld [vmem:[#allocation2 + $0x48] sm:$0xff]
    %v60 = vld [vmem:[#allocation2 + $0x50] sm:$0xff]
    %v61 = vld [vmem:[#allocation2 + $0x58] sm:$0xff]
    %v62 = vld [vmem:[#allocation2 + $0x60] sm:$0xff]
    %v63 = vld [vmem:[#allocation2 + $0x68] sm:$0xff]
    %v64 = vld [vmem:[#allocation2 + $0x70] sm:$0xff]
    %v65 = vld [vmem:[#allocation2 + $0x78] sm:$0xff]
    %v66 = vld [vmem:[#allocation2 + $0x80] sm:$0xff]
    %v67 = vld [vmem:[#allocation2 + $0x88] sm:$0xff]
    %v68 = vld [vmem:[#allocation2 + $0x90] sm:$0xff]
    %v69 = vld [vmem:[#allocation2 + $0x98] sm:$0xff]
    %v70 = vld [vmem:[#allocation2 + $0xa0] sm:$0xff]
    %v71 = vld [vmem:[#allocation2 + $0xa8] sm:$0xff]
    %v72 = vld [vmem:[#allocation2 + $0xb0] sm:$0xff]
    %v73 = vld [vmem:[#allocation2 + $0xb8] sm:$0xff]
    %v74 = vld [vmem:[#allocation2 + $0xc0] sm:$0xff]
    %v75 = vld [vmem:[#allocation2 + $0xc8] sm:$0xff]
    %v76 = vld [vmem:[#allocation2 + $0xd0] sm:$0xff]
    %v77 = vld [vmem:[#allocation2 + $0xd8] sm:$0xff]
    %v78 = vld [vmem:[#allocation2 + $0xe0] sm:$0xff]
    %v79 = vld [vmem:[#allocation2 + $0xe8] sm:$0xff]
    %v80 = vld [vmem:[#allocation2 + $0xf0] sm:$0xff]
    %v81 = vld [vmem:[#allocation2 + $0xf8] sm:$0xff]
    %v82 = vld [vmem:[#allocation2 + $0x100] sm:$0xff]
    %v83 = vld [vmem:[#allocation2 + $0x108] sm:$0xff]
    %v84 = vld [vmem:[#allocation2 + $0x110] sm:$0xff]
    %v85 = vld [vmem:[#allocation2 + $0x118] sm:$0xff]
    %v86 = vld [vmem:[#allocation2 + $0x120] sm:$0xff]
    %v87 = vld [vmem:[#allocation2 + $0x128] sm:$0xff]
    %v88 = vld [vmem:[#allocation2 + $0x130] sm:$0xff]
    %v89 = vld [vmem:[#allocation2 + $0x138] sm:$0xff]
    %v90 = vld [vmem:[#allocation2 + $0x140] sm:$0xff]
    %v91 = vld [vmem:[#allocation2 + $0x148] sm:$0xff]
    %v92 = vld [vmem:[#allocation2 + $0x150] sm:$0xff]
    %v93 = vld [vmem:[#allocation2 + $0x158] sm:$0xff]
    %v94 = vld [vmem:[#allocation2 + $0x160] sm:$0xff]
    %v95 = vld [vmem:[#allocation2 + $0x168] sm:$0xff]
    %v96 = vld [vmem:[#allocation2 + $0x170] sm:$0xff]
    %v97 = vld [vmem:[#allocation2 + $0x178] sm:$0xff]
    %v98 = vld [vmem:[#allocation2 + $0x180] sm:$0xff]
    %v99 = vld [vmem:[#allocation2 + $0x188] sm:$0xff]
    %v100 = vld [vmem:[#allocation2 + $0x190] sm:$0xff]
    %v101 = vld [vmem:[#allocation2 + $0x198] sm:$0xff]
    %v102 = vld [vmem:[#allocation2 + $0x1a0] sm:$0xff]
    %v103 = vld [vmem:[#allocation2 + $0x1a8] sm:$0xff]
    %v104 = vld [vmem:[#allocation2 + $0x1b0] sm:$0xff]
    %v105 = vld [vmem:[#allocation2 + $0x1b8] sm:$0xff]
    %v106 = vld [vmem:[#allocation2 + $0x1c0] sm:$0xff]
    %v107 = vld [vmem:[#allocation2 + $0x1c8] sm:$0xff]
    %v108 = vld [vmem:[#allocation2 + $0x1d0] sm:$0xff]
    %v109 = vld [vmem:[#allocation2 + $0x1d8] sm:$0xff]
    %v110 = vld [vmem:[#allocation2 + $0x1e0] sm:$0xff]
    %v111 = vld [vmem:[#allocation2 + $0x1e8] sm:$0xff]
    %v112 = vld [vmem:[#allocation2 + $0x1f0] sm:$0xff]
    %v113 = vld [vmem:[#allocation2 + $0x1f8] sm:$0xff]
    %v114 = vld [vmem:[#allocation2 + $0x200] sm:$0xff]
    %v115 = vld [vmem:[#allocation2 + $0x208] sm:$0xff]
    %v116 = vld [vmem:[#allocation2 + $0x210] sm:$0xff]
    %v117 = vld [vmem:[#allocation2 + $0x218] sm:$0xff]
    %v118 = vld [vmem:[#allocation2 + $0x220] sm:$0xff]
    %v119 = vld [vmem:[#allocation2 + $0x228] sm:$0xff]
    %v120 = vld [vmem:[#allocation2 + $0x230] sm:$0xff]
    %v121 = vld [vmem:[#allocation2 + $0x238] sm:$0xff]
    %v122 = vld [vmem:[#allocation2 + $0x240] sm:$0xff]
    %v123 = vld [vmem:[#allocation2 + $0x248] sm:$0xff]
    %v124 = vld [vmem:[#allocation2 + $0x250] sm:$0xff]
    %v125 = vld [vmem:[#allocation2 + $0x258] sm:$0xff]
    %v126 = vld [vmem:[#allocation2 + $0x260] sm:$0xff]
    %v127 = vld [vmem:[#allocation2 + $0x268] sm:$0xff]
    %v128 = vld [vmem:[#allocation2 + $0x270] sm:$0xff]
    %v129 = vld [vmem:[#allocation2 + $0x278] sm:$0xff]
    %v130 = vld [vmem:[#allocation2 + $0x280] sm:$0xff]
    %v131 = vld [vmem:[#allocation2 + $0x288] sm:$0xff]
    %v132 = vld [vmem:[#allocation2 + $0x290] sm:$0xff]
    %v133 = vld [vmem:[#allocation2 + $0x298] sm:$0xff]
    %v134 = vld [vmem:[#allocation2 + $0x2a0] sm:$0xff]
    %v135 = vld [vmem:[#allocation2 + $0x2a8] sm:$0xff]
    %v136 = vld [vmem:[#allocation2 + $0x2b0] sm:$0xff]
    %v137 = vld [vmem:[#allocation2 + $0x2b8] sm:$0xff]
    %v138 = vld [vmem:[#allocation2 + $0x2c0] sm:$0xff]
    %v139 = vld [vmem:[#allocation2 + $0x2c8] sm:$0xff]
    %v140 = vld [vmem:[#allocation2 + $0x2d0] sm:$0xff]
    %v141 = vld [vmem:[#allocation2 + $0x2d8] sm:$0xff]
    %v142 = vld [vmem:[#allocation2 + $0x2e0] sm:$0xff]
    %v143 = vld [vmem:[#allocation2 + $0x2e8] sm:$0xff]
    %v144 = vld [vmem:[#allocation2 + $0x2f0] sm:$0xff]
    %v145 = vld [vmem:[#allocation2 + $0x2f8] sm:$0xff]
    %v146 = vld [vmem:[#allocation2 + $0x300] sm:$0xff]
    %v147 = vld [vmem:[#allocation2 + $0x308] sm:$0xff]
    %v148 = vld [vmem:[#allocation2 + $0x310] sm:$0xff]
    %v149 = vld [vmem:[#allocation2 + $0x318] sm:$0xff]
    %v150 = vld [vmem:[#allocation2 + $0x320] sm:$0xff]
    %v151 = vld [vmem:[#allocation2 + $0x328] sm:$0xff]
    %v152 = vld [vmem:[#allocation2 + $0x330] sm:$0xff]
    %v153 = vld [vmem:[#allocation2 + $0x338] sm:$0xff]
    %v154 = vld [vmem:[#allocation2 + $0x340] sm:$0xff]
    %v155 = vld [vmem:[#allocation2 + $0x348] sm:$0xff]
    %v156 = vld [vmem:[#allocation2 + $0x350] sm:$0xff]
    %v157 = vld [vmem:[#allocation2 + $0x358] sm:$0xff]
    %v158 = vld [vmem:[#allocation2 + $0x360] sm:$0xff]
    %v159 = vld [vmem:[#allocation2 + $0x368] sm:$0xff]
    %v160 = vld [vmem:[#allocation2 + $0x370] sm:$0xff]
    %v161 = vld [vmem:[#allocation2 + $0x378] sm:$0xff]
    %v162 = vld [vmem:[#allocation2 + $0x380] sm:$0xff]
    %v163 = vld [vmem:[#allocation2 + $0x388] sm:$0xff]
    %v164 = vld [vmem:[#allocation2 + $0x390] sm:$0xff]
    %v165 = vld [vmem:[#allocation2 + $0x398] sm:$0xff]
    %v166 = vld [vmem:[#allocation2 + $0x3a0] sm:$0xff]
    %v167 = vld [vmem:[#allocation2 + $0x3a8] sm:$0xff]
    %v168 = vld [vmem:[#allocation2 + $0x3b0] sm:$0xff]
    %v169 = vld [vmem:[#allocation2 + $0x3b8] sm:$0xff]
    %v170 = vld [vmem:[#allocation2 + $0x3c0] sm:$0xff]
    %v171 = vld [vmem:[#allocation2 + $0x3c8] sm:$0xff]
    %v172 = vld [vmem:[#allocation2 + $0x3d0] sm:$0xff]
    %v173 = vld [vmem:[#allocation2 + $0x3d8] sm:$0xff]
    %v174 = vld [vmem:[#allocation2 + $0x3e0] sm:$0xff]
    %v175 = vld [vmem:[#allocation2 + $0x3e8] sm:$0xff]
    %v176 = vld [vmem:[#allocation2 + $0x3f0] sm:$0xff]
    %v177 = vld [vmem:[#allocation2 + $0x3f8] sm:$0xff]
    %v178 = vld [vmem:[%s2] sm:$0xf]
    %v180 = vlaneseq
    %v181 = vshrl.u32 %v180, 7
    %v182 = vsub.s32 0, %v181
    %v183 = vrot.slane %v178, %v182
    %v184 = vlaneseq
    %v185 = vshrl.u32 %v184, 7
    %v186 = vsub.s32 1, %v185
    %v187 = vrot.slane %v178, %v186
    %v188 = vlaneseq
    %v189 = vshrl.u32 %v188, 7
    %v190 = vsub.s32 2, %v189
    %v191 = vrot.slane %v178, %v190
    %v192 = vlaneseq
    %v193 = vshrl.u32 %v192, 7
    %v194 = vsub.s32 3, %v193
    %v195 = vrot.slane %v178, %v194
    %200 = vmatprep.subr.mxu0 %v51
    %201 = vmatpush1.msra.mxu0 %v50
    %202 = vmatprep.subr.mxu0 %v55
    %203 = vmatpush1.msra.mxu0 %v54
    %204 = vmatprep.subr.mxu0 %v59
    %205 = vmatpush1.msra.mxu0 %v58
    %206 = vmatprep.subr.mxu0 %v63
    %207 = vmatpush1.msra.mxu0 %v62
    %208 = vmatprep.subr.mxu0 %v67
    %209 = vmatpush1.msra.mxu0 %v66
    %210 = vmatprep.subr.mxu0 %v71
    %211 = vmatpush1.msra.mxu0 %v70
    %212 = vmatprep.subr.mxu0 %v75
    %213 = vmatpush1.msra.mxu0 %v74
    %214 = vmatprep.subr.mxu0 %v79
    %215 = vmatpush1.msra.mxu0 %v78
    %216 = vmatprep.subr.mxu0 %v83
    %217 = vmatpush1.msra.mxu0 %v82
    %218 = vmatprep.subr.mxu0 %v87
    %219 = vmatpush1.msra.mxu0 %v86
    %220 = vmatprep.subr.mxu0 %v91
    %221 = vmatpush1.msra.mxu0 %v90
    %222 = vmatprep.subr.mxu0 %v95
    %223 = vmatpush1.msra.mxu0 %v94
    %224 = vmatprep.subr.mxu0 %v99
    %225 = vmatpush1.msra.mxu0 %v98
    %226 = vmatprep.subr.mxu0 %v103
    %227 = vmatpush1.msra.mxu0 %v102
    %228 = vmatprep.subr.mxu0 %v107
    %229 = vmatpush1.msra.mxu0 %v106
    %230 = vmatprep.subr.mxu0 %v111
    %231 = vmatpush1.msra.mxu0 %v110
    %232 = vmatprep.subr.mxu0 %v115
    %233 = vmatpush1.msra.mxu0 %v114
    %234 = vmatprep.subr.mxu0 %v119
    %235 = vmatpush1.msra.mxu0 %v118
    %236 = vmatprep.subr.mxu0 %v123
    %237 = vmatpush1.msra.mxu0 %v122
    %238 = vmatprep.subr.mxu0 %v127
    %239 = vmatpush1.msra.mxu0 %v126
    %240 = vmatprep.subr.mxu0 %v131
    %241 = vmatpush1.msra.mxu0 %v130
    %242 = vmatprep.subr.mxu0 %v135
    %243 = vmatpush1.msra.mxu0 %v134
    %244 = vmatprep.subr.mxu0 %v139
    %245 = vmatpush1.msra.mxu0 %v138
    %246 = vmatprep.subr.mxu0 %v143
    %247 = vmatpush1.msra.mxu0 %v142
    %248 = vmatprep.subr.mxu0 %v147
    %249 = vmatpush1.msra.mxu0 %v146
    %250 = vmatprep.subr.mxu0 %v151
    %251 = vmatpush1.msra.mxu0 %v150
    %252 = vmatprep.subr.mxu0 %v155
    %253 = vmatpush1.msra.mxu0 %v154
    %254 = vmatprep.subr.mxu0 %v159
    %255 = vmatpush1.msra.mxu0 %v158
    %256 = vmatprep.subr.mxu0 %v163
    %257 = vmatpush1.msra.mxu0 %v162
    %258 = vmatprep.subr.mxu0 %v167
    %259 = vmatpush1.msra.mxu0 %v166
    %260 = vmatprep.subr.mxu0 %v171
    %261 = vmatpush1.msra.mxu0 %v170
    %262 = vmatprep.subr.mxu0 %v175
    %263 = vmatpush1.msra.mxu0 %v174
    %264 = vmatprep.mubr.f32.mxu0 %v43
    %265 = vmatmul.mubr.f32.gmra.mrb[0].mxu0 %v49
    %v266 = vpop.f32.mrb[0].mxu0
    %v267 = vadd.f32 %v183, %v266
    %v268 = vpop.f32.mrb[0].mxu0
    %v269 = vadd.f32 %v187, %v268
    %270 = vdwg.mxu0
    %271 = vmatprep.subr.mxu0 %v53
    %272 = vmatpush1.msra.mxu0 %v52
    %273 = vmatprep.subr.mxu0 %v57
    %274 = vmatpush1.msra.mxu0 %v56
    %275 = vmatprep.subr.mxu0 %v61
    %276 = vmatpush1.msra.mxu0 %v60
    %277 = vmatprep.subr.mxu0 %v65
    %278 = vmatpush1.msra.mxu0 %v64
    %279 = vmatprep.subr.mxu0 %v69
    %280 = vmatpush1.msra.mxu0 %v68
    %281 = vmatprep.subr.mxu0 %v73
    %282 = vmatpush1.msra.mxu0 %v72
    %283 = vmatprep.subr.mxu0 %v77
    %284 = vmatpush1.msra.mxu0 %v76
    %285 = vmatprep.subr.mxu0 %v81
    %286 = vmatpush1.msra.mxu0 %v80
    %287 = vmatprep.subr.mxu0 %v85
    %288 = vmatpush1.msra.mxu0 %v84
    %289 = vmatprep.subr.mxu0 %v89
    %290 = vmatpush1.msra.mxu0 %v88
    %291 = vmatprep.subr.mxu0 %v93
    %292 = vmatpush1.msra.mxu0 %v92
    %293 = vmatprep.subr.mxu0 %v97
    %294 = vmatpush1.msra.mxu0 %v96
    %295 = vmatprep.subr.mxu0 %v101
    %296 = vmatpush1.msra.mxu0 %v100
    %297 = vmatprep.subr.mxu0 %v105
    %298 = vmatpush1.msra.mxu0 %v104
    %299 = vmatprep.subr.mxu0 %v109
    %300 = vmatpush1.msra.mxu0 %v108
    %301 = vmatprep.subr.mxu0 %v113
    %302 = vmatpush1.msra.mxu0 %v112
    %303 = vmatprep.subr.mxu0 %v117
    %304 = vmatpush1.msra.mxu0 %v116
    %305 = vmatprep.subr.mxu0 %v121
    %306 = vmatpush1.msra.mxu0 %v120
    %307 = vmatprep.subr.mxu0 %v125
    %308 = vmatpush1.msra.mxu0 %v124
    %309 = vmatprep.subr.mxu0 %v129
    %310 = vmatpush1.msra.mxu0 %v128
    %311 = vmatprep.subr.mxu0 %v133
    %312 = vmatpush1.msra.mxu0 %v132
    %313 = vmatprep.subr.mxu0 %v137
    %314 = vmatpush1.msra.mxu0 %v136
    %315 = vmatprep.subr.mxu0 %v141
    %316 = vmatpush1.msra.mxu0 %v140
    %317 = vmatprep.subr.mxu0 %v145
    %318 = vmatpush1.msra.mxu0 %v144
    %319 = vmatprep.subr.mxu0 %v149
    %320 = vmatpush1.msra.mxu0 %v148
    %321 = vmatprep.subr.mxu0 %v153
    %322 = vmatpush1.msra.mxu0 %v152
    %323 = vmatprep.subr.mxu0 %v157
    %324 = vmatpush1.msra.mxu0 %v156
    %325 = vmatprep.subr.mxu0 %v161
    %326 = vmatpush1.msra.mxu0 %v160
    %327 = vmatprep.subr.mxu0 %v165
    %328 = vmatpush1.msra.mxu0 %v164
    %329 = vmatprep.subr.mxu0 %v169
    %330 = vmatpush1.msra.mxu0 %v168
    %331 = vmatprep.subr.mxu0 %v173
    %332 = vmatpush1.msra.mxu0 %v172
    %333 = vmatprep.subr.mxu0 %v177
    %334 = vmatpush1.msra.mxu0 %v176
    %335 = vmatprep.mubr.f32.mxu0 %v43
    %336 = vmatmul.mubr.f32.gmra.mrb[0].mxu0 %v49
    %v337 = vpop.f32.mrb[0].mxu0
    %v338 = vadd.f32 %v191, %v337
    %v339 = vpop.f32.mrb[0].mxu0
    %v340 = vadd.f32 %v195, %v339
    %341 = vdwg.mxu0
    %v342 = vxor.u32 %v267, 2147483648
    %v343 = vmul.f32 %v342, 1.442695
    %v344 = vpow.pop %v343
    %v345 = vadd.f32 %v344, 1.0
    %v346 = vrcp.pop %v345
    %v347 = vmul.f32 1.0, %v346
    %v348 = vxor.u32 %v269, 2147483648
    %v349 = vmul.f32 %v348, 1.442695
    %v350 = vpow.pop %v349
    %v351 = vadd.f32 %v350, 1.0
    %v352 = vrcp.pop %v351
    %v353 = vmul.f32 1.0, %v352
    %v354 = vtanh.pop %v338
    %v355 = vxor.u32 %v340, 2147483648
    %v356 = vmul.f32 %v355, 1.442695
    %v357 = vpow.pop %v356
    %v358 = vadd.f32 %v357, 1.0
    %v359 = vrcp.pop %v358
    %v360 = vmul.f32 1.0, %v359
    %v361 = vmul.f32 %v353, %v46
    %v362 = vmul.f32 %v347, %v354
    %v363 = vadd.f32 %v361, %v362
    %v364 = vtanh.pop %v363
    %v365 = vmul.f32 %v360, %v364
    %s366 = scalar_lea.vmem [#allocation2], 1024
    %v367 = vld [vmem:[%s366] sm:$0xff]
    %v368 = vld [vmem:[%s366 + $0x8] sm:$0xff]
    %v369 = vld [vmem:[%s366 + $0x10] sm:$0xff]
    %v370 = vld [vmem:[%s366 + $0x18] sm:$0xff]
    %v371 = vld [vmem:[%s366 + $0x20] sm:$0xff]
    %v372 = vld [vmem:[%s366 + $0x28] sm:$0xff]
    %v373 = vld [vmem:[%s366 + $0x30] sm:$0xff]
    %v374 = vld [vmem:[%s366 + $0x38] sm:$0xff]
    %v375 = vld [vmem:[%s366 + $0x40] sm:$0xff]
    %v376 = vld [vmem:[%s366 + $0x48] sm:$0xff]
    %v377 = vld [vmem:[%s366 + $0x50] sm:$0xff]
    %v378 = vld [vmem:[%s366 + $0x58] sm:$0xff]
    %v379 = vld [vmem:[%s366 + $0x60] sm:$0xff]
    %v380 = vld [vmem:[%s366 + $0x68] sm:$0xff]
    %v381 = vld [vmem:[%s366 + $0x70] sm:$0xff]
    %v382 = vld [vmem:[%s366 + $0x78] sm:$0xff]
    %v383 = vld [vmem:[%s366 + $0x80] sm:$0xff]
    %v384 = vld [vmem:[%s366 + $0x88] sm:$0xff]
    %v385 = vld [vmem:[%s366 + $0x90] sm:$0xff]
    %v386 = vld [vmem:[%s366 + $0x98] sm:$0xff]
    %v387 = vld [vmem:[%s366 + $0xa0] sm:$0xff]
    %v388 = vld [vmem:[%s366 + $0xa8] sm:$0xff]
    %v389 = vld [vmem:[%s366 + $0xb0] sm:$0xff]
    %v390 = vld [vmem:[%s366 + $0xb8] sm:$0xff]
    %v391 = vld [vmem:[%s366 + $0xc0] sm:$0xff]
    %v392 = vld [vmem:[%s366 + $0xc8] sm:$0xff]
    %v393 = vld [vmem:[%s366 + $0xd0] sm:$0xff]
    %v394 = vld [vmem:[%s366 + $0xd8] sm:$0xff]
    %v395 = vld [vmem:[%s366 + $0xe0] sm:$0xff]
    %v396 = vld [vmem:[%s366 + $0xe8] sm:$0xff]
    %v397 = vld [vmem:[%s366 + $0xf0] sm:$0xff]
    %v398 = vld [vmem:[%s366 + $0xf8] sm:$0xff]
    %v399 = vld [vmem:[%s366 + $0x100] sm:$0xff]
    %v400 = vld [vmem:[%s366 + $0x108] sm:$0xff]
    %v401 = vld [vmem:[%s366 + $0x110] sm:$0xff]
    %v402 = vld [vmem:[%s366 + $0x118] sm:$0xff]
    %v403 = vld [vmem:[%s366 + $0x120] sm:$0xff]
    %v404 = vld [vmem:[%s366 + $0x128] sm:$0xff]
    %v405 = vld [vmem:[%s366 + $0x130] sm:$0xff]
    %v406 = vld [vmem:[%s366 + $0x138] sm:$0xff]
    %v407 = vld [vmem:[%s366 + $0x140] sm:$0xff]
    %v408 = vld [vmem:[%s366 + $0x148] sm:$0xff]
    %v409 = vld [vmem:[%s366 + $0x150] sm:$0xff]
    %v410 = vld [vmem:[%s366 + $0x158] sm:$0xff]
    %v411 = vld [vmem:[%s366 + $0x160] sm:$0xff]
    %v412 = vld [vmem:[%s366 + $0x168] sm:$0xff]
    %v413 = vld [vmem:[%s366 + $0x170] sm:$0xff]
    %v414 = vld [vmem:[%s366 + $0x178] sm:$0xff]
    %v415 = vld [vmem:[%s366 + $0x180] sm:$0xff]
    %v416 = vld [vmem:[%s366 + $0x188] sm:$0xff]
    %v417 = vld [vmem:[%s366 + $0x190] sm:$0xff]
    %v418 = vld [vmem:[%s366 + $0x198] sm:$0xff]
    %v419 = vld [vmem:[%s366 + $0x1a0] sm:$0xff]
    %v420 = vld [vmem:[%s366 + $0x1a8] sm:$0xff]
    %v421 = vld [vmem:[%s366 + $0x1b0] sm:$0xff]
    %v422 = vld [vmem:[%s366 + $0x1b8] sm:$0xff]
    %v423 = vld [vmem:[%s366 + $0x1c0] sm:$0xff]
    %v424 = vld [vmem:[%s366 + $0x1c8] sm:$0xff]
    %v425 = vld [vmem:[%s366 + $0x1d0] sm:$0xff]
    %v426 = vld [vmem:[%s366 + $0x1d8] sm:$0xff]
    %v427 = vld [vmem:[%s366 + $0x1e0] sm:$0xff]
    %v428 = vld [vmem:[%s366 + $0x1e8] sm:$0xff]
    %v429 = vld [vmem:[%s366 + $0x1f0] sm:$0xff]
    %v430 = vld [vmem:[%s366 + $0x1f8] sm:$0xff]
    %v431 = vld [vmem:[%s366 + $0x200] sm:$0xff]
    %v432 = vld [vmem:[%s366 + $0x208] sm:$0xff]
    %v433 = vld [vmem:[%s366 + $0x210] sm:$0xff]
    %v434 = vld [vmem:[%s366 + $0x218] sm:$0xff]
    %v435 = vld [vmem:[%s366 + $0x220] sm:$0xff]
    %v436 = vld [vmem:[%s366 + $0x228] sm:$0xff]
    %v437 = vld [vmem:[%s366 + $0x230] sm:$0xff]
    %v438 = vld [vmem:[%s366 + $0x238] sm:$0xff]
    %v439 = vld [vmem:[%s366 + $0x240] sm:$0xff]
    %v440 = vld [vmem:[%s366 + $0x248] sm:$0xff]
    %v441 = vld [vmem:[%s366 + $0x250] sm:$0xff]
    %v442 = vld [vmem:[%s366 + $0x258] sm:$0xff]
    %v443 = vld [vmem:[%s366 + $0x260] sm:$0xff]
    %v444 = vld [vmem:[%s366 + $0x268] sm:$0xff]
    %v445 = vld [vmem:[%s366 + $0x270] sm:$0xff]
    %v446 = vld [vmem:[%s366 + $0x278] sm:$0xff]
    %v447 = vld [vmem:[%s366 + $0x280] sm:$0xff]
    %v448 = vld [vmem:[%s366 + $0x288] sm:$0xff]
    %v449 = vld [vmem:[%s366 + $0x290] sm:$0xff]
    %v450 = vld [vmem:[%s366 + $0x298] sm:$0xff]
    %v451 = vld [vmem:[%s366 + $0x2a0] sm:$0xff]
    %v452 = vld [vmem:[%s366 + $0x2a8] sm:$0xff]
    %v453 = vld [vmem:[%s366 + $0x2b0] sm:$0xff]
    %v454 = vld [vmem:[%s366 + $0x2b8] sm:$0xff]
    %v455 = vld [vmem:[%s366 + $0x2c0] sm:$0xff]
    %v456 = vld [vmem:[%s366 + $0x2c8] sm:$0xff]
    %v457 = vld [vmem:[%s366 + $0x2d0] sm:$0xff]
    %v458 = vld [vmem:[%s366 + $0x2d8] sm:$0xff]
    %v459 = vld [vmem:[%s366 + $0x2e0] sm:$0xff]
    %v460 = vld [vmem:[%s366 + $0x2e8] sm:$0xff]
    %v461 = vld [vmem:[%s366 + $0x2f0] sm:$0xff]
    %v462 = vld [vmem:[%s366 + $0x2f8] sm:$0xff]
    %v463 = vld [vmem:[%s366 + $0x300] sm:$0xff]
    %v464 = vld [vmem:[%s366 + $0x308] sm:$0xff]
    %v465 = vld [vmem:[%s366 + $0x310] sm:$0xff]
    %v466 = vld [vmem:[%s366 + $0x318] sm:$0xff]
    %v467 = vld [vmem:[%s366 + $0x320] sm:$0xff]
    %v468 = vld [vmem:[%s366 + $0x328] sm:$0xff]
    %v469 = vld [vmem:[%s366 + $0x330] sm:$0xff]
    %v470 = vld [vmem:[%s366 + $0x338] sm:$0xff]
    %v471 = vld [vmem:[%s366 + $0x340] sm:$0xff]
    %v472 = vld [vmem:[%s366 + $0x348] sm:$0xff]
    %v473 = vld [vmem:[%s366 + $0x350] sm:$0xff]
    %v474 = vld [vmem:[%s366 + $0x358] sm:$0xff]
    %v475 = vld [vmem:[%s366 + $0x360] sm:$0xff]
    %v476 = vld [vmem:[%s366 + $0x368] sm:$0xff]
    %v477 = vld [vmem:[%s366 + $0x370] sm:$0xff]
    %v478 = vld [vmem:[%s366 + $0x378] sm:$0xff]
    %v479 = vld [vmem:[%s366 + $0x380] sm:$0xff]
    %v480 = vld [vmem:[%s366 + $0x388] sm:$0xff]
    %v481 = vld [vmem:[%s366 + $0x390] sm:$0xff]
    %v482 = vld [vmem:[%s366 + $0x398] sm:$0xff]
    %v483 = vld [vmem:[%s366 + $0x3a0] sm:$0xff]
    %v484 = vld [vmem:[%s366 + $0x3a8] sm:$0xff]
    %v485 = vld [vmem:[%s366 + $0x3b0] sm:$0xff]
    %v486 = vld [vmem:[%s366 + $0x3b8] sm:$0xff]
    %v487 = vld [vmem:[%s366 + $0x3c0] sm:$0xff]
    %v488 = vld [vmem:[%s366 + $0x3c8] sm:$0xff]
    %v489 = vld [vmem:[%s366 + $0x3d0] sm:$0xff]
    %v490 = vld [vmem:[%s366 + $0x3d8] sm:$0xff]
    %v491 = vld [vmem:[%s366 + $0x3e0] sm:$0xff]
    %v492 = vld [vmem:[%s366 + $0x3e8] sm:$0xff]
    %v493 = vld [vmem:[%s366 + $0x3f0] sm:$0xff]
    %v494 = vld [vmem:[%s366 + $0x3f8] sm:$0xff]
    %s495 = scalar_lea.vmem %s2, 4
    %v496 = vld [vmem:[%s495] sm:$0xf]
    %v498 = vlaneseq
    %v499 = vshrl.u32 %v498, 7
    %v500 = vsub.s32 0, %v499
    %v501 = vrot.slane %v496, %v500
    %v502 = vlaneseq
    %v503 = vshrl.u32 %v502, 7
    %v504 = vsub.s32 1, %v503
    %v505 = vrot.slane %v496, %v504
    %v506 = vlaneseq
    %v507 = vshrl.u32 %v506, 7
    %v508 = vsub.s32 2, %v507
    %v509 = vrot.slane %v496, %v508
    %v510 = vlaneseq
    %v511 = vshrl.u32 %v510, 7
    %v512 = vsub.s32 3, %v511
    %v513 = vrot.slane %v496, %v512
    %518 = vmatprep.subr.mxu0 %v368
    %519 = vmatpush1.msra.mxu0 %v367
    %520 = vmatprep.subr.mxu0 %v372
    %521 = vmatpush1.msra.mxu0 %v371
    %522 = vmatprep.subr.mxu0 %v376
    %523 = vmatpush1.msra.mxu0 %v375
    %524 = vmatprep.subr.mxu0 %v380
    %525 = vmatpush1.msra.mxu0 %v379
    %526 = vmatprep.subr.mxu0 %v384
    %527 = vmatpush1.msra.mxu0 %v383
    %528 = vmatprep.subr.mxu0 %v388
    %529 = vmatpush1.msra.mxu0 %v387
    %530 = vmatprep.subr.mxu0 %v392
    %531 = vmatpush1.msra.mxu0 %v391
    %532 = vmatprep.subr.mxu0 %v396
    %533 = vmatpush1.msra.mxu0 %v395
    %534 = vmatprep.subr.mxu0 %v400
    %535 = vmatpush1.msra.mxu0 %v399
    %536 = vmatprep.subr.mxu0 %v404
    %537 = vmatpush1.msra.mxu0 %v403
    %538 = vmatprep.subr.mxu0 %v408
    %539 = vmatpush1.msra.mxu0 %v407
    %540 = vmatprep.subr.mxu0 %v412
    %541 = vmatpush1.msra.mxu0 %v411
    %542 = vmatprep.subr.mxu0 %v416
    %543 = vmatpush1.msra.mxu0 %v415
    %544 = vmatprep.subr.mxu0 %v420
    %545 = vmatpush1.msra.mxu0 %v419
    %546 = vmatprep.subr.mxu0 %v424
    %547 = vmatpush1.msra.mxu0 %v423
    %548 = vmatprep.subr.mxu0 %v428
    %549 = vmatpush1.msra.mxu0 %v427
    %550 = vmatprep.subr.mxu0 %v432
    %551 = vmatpush1.msra.mxu0 %v431
    %552 = vmatprep.subr.mxu0 %v436
    %553 = vmatpush1.msra.mxu0 %v435
    %554 = vmatprep.subr.mxu0 %v440
    %555 = vmatpush1.msra.mxu0 %v439
    %556 = vmatprep.subr.mxu0 %v444
    %557 = vmatpush1.msra.mxu0 %v443
    %558 = vmatprep.subr.mxu0 %v448
    %559 = vmatpush1.msra.mxu0 %v447
    %560 = vmatprep.subr.mxu0 %v452
    %561 = vmatpush1.msra.mxu0 %v451
    %562 = vmatprep.subr.mxu0 %v456
    %563 = vmatpush1.msra.mxu0 %v455
    %564 = vmatprep.subr.mxu0 %v460
    %565 = vmatpush1.msra.mxu0 %v459
    %566 = vmatprep.subr.mxu0 %v464
    %567 = vmatpush1.msra.mxu0 %v463
    %568 = vmatprep.subr.mxu0 %v468
    %569 = vmatpush1.msra.mxu0 %v467
    %570 = vmatprep.subr.mxu0 %v472
    %571 = vmatpush1.msra.mxu0 %v471
    %572 = vmatprep.subr.mxu0 %v476
    %573 = vmatpush1.msra.mxu0 %v475
    %574 = vmatprep.subr.mxu0 %v480
    %575 = vmatpush1.msra.mxu0 %v479
    %576 = vmatprep.subr.mxu0 %v484
    %577 = vmatpush1.msra.mxu0 %v483
    %578 = vmatprep.subr.mxu0 %v488
    %579 = vmatpush1.msra.mxu0 %v487
    %580 = vmatprep.subr.mxu0 %v492
    %581 = vmatpush1.msra.mxu0 %v491
    %582 = vmatprep.mubr.f32.mxu0 %v45
    %583 = vmatmul.mubr.f32.gmra.mrb[0].mxu0 %v365
    %v584 = vpop.f32.mrb[0].mxu0
    %v585 = vadd.f32 %v501, %v584
    %v586 = vpop.f32.mrb[0].mxu0
    %v587 = vadd.f32 %v505, %v586
    %588 = vdwg.mxu0
    %589 = vmatprep.subr.mxu0 %v370
    %590 = vmatpush1.msra.mxu0 %v369
    %591 = vmatprep.subr.mxu0 %v374
    %592 = vmatpush1.msra.mxu0 %v373
    %593 = vmatprep.subr.mxu0 %v378
    %594 = vmatpush1.msra.mxu0 %v377
    %595 = vmatprep.subr.mxu0 %v382
    %596 = vmatpush1.msra.mxu0 %v381
    %597 = vmatprep.subr.mxu0 %v386
    %598 = vmatpush1.msra.mxu0 %v385
    %599 = vmatprep.subr.mxu0 %v390
    %600 = vmatpush1.msra.mxu0 %v389
    %601 = vmatprep.subr.mxu0 %v394
    %602 = vmatpush1.msra.mxu0 %v393
    %603 = vmatprep.subr.mxu0 %v398
    %604 = vmatpush1.msra.mxu0 %v397
    %605 = vmatprep.subr.mxu0 %v402
    %606 = vmatpush1.msra.mxu0 %v401
    %607 = vmatprep.subr.mxu0 %v406
    %608 = vmatpush1.msra.mxu0 %v405
    %609 = vmatprep.subr.mxu0 %v410
    %610 = vmatpush1.msra.mxu0 %v409
    %611 = vmatprep.subr.mxu0 %v414
    %612 = vmatpush1.msra.mxu0 %v413
    %613 = vmatprep.subr.mxu0 %v418
    %614 = vmatpush1.msra.mxu0 %v417
    %615 = vmatprep.subr.mxu0 %v422
    %616 = vmatpush1.msra.mxu0 %v421
    %617 = vmatprep.subr.mxu0 %v426
    %618 = vmatpush1.msra.mxu0 %v425
    %619 = vmatprep.subr.mxu0 %v430
    %620 = vmatpush1.msra.mxu0 %v429
    %621 = vmatprep.subr.mxu0 %v434
    %622 = vmatpush1.msra.mxu0 %v433
    %623 = vmatprep.subr.mxu0 %v438
    %624 = vmatpush1.msra.mxu0 %v437
    %625 = vmatprep.subr.mxu0 %v442
    %626 = vmatpush1.msra.mxu0 %v441
    %627 = vmatprep.subr.mxu0 %v446
    %628 = vmatpush1.msra.mxu0 %v445
    %629 = vmatprep.subr.mxu0 %v450
    %630 = vmatpush1.msra.mxu0 %v449
    %631 = vmatprep.subr.mxu0 %v454
    %632 = vmatpush1.msra.mxu0 %v453
    %633 = vmatprep.subr.mxu0 %v458
    %634 = vmatpush1.msra.mxu0 %v457
    %635 = vmatprep.subr.mxu0 %v462
    %636 = vmatpush1.msra.mxu0 %v461
    %637 = vmatprep.subr.mxu0 %v466
    %638 = vmatpush1.msra.mxu0 %v465
    %639 = vmatprep.subr.mxu0 %v470
    %640 = vmatpush1.msra.mxu0 %v469
    %641 = vmatprep.subr.mxu0 %v474
    %642 = vmatpush1.msra.mxu0 %v473
    %643 = vmatprep.subr.mxu0 %v478
    %644 = vmatpush1.msra.mxu0 %v477
    %645 = vmatprep.subr.mxu0 %v482
    %646 = vmatpush1.msra.mxu0 %v481
    %647 = vmatprep.subr.mxu0 %v486
    %648 = vmatpush1.msra.mxu0 %v485
    %649 = vmatprep.subr.mxu0 %v490
    %650 = vmatpush1.msra.mxu0 %v489
    %651 = vmatprep.subr.mxu0 %v494
    %652 = vmatpush1.msra.mxu0 %v493
    %653 = vmatprep.mubr.f32.mxu0 %v45
    %654 = vmatmul.mubr.f32.gmra.mrb[0].mxu0 %v365
    %v655 = vpop.f32.mrb[0].mxu0
    %v656 = vadd.f32 %v509, %v655
    %v657 = vpop.f32.mrb[0].mxu0
    %v658 = vadd.f32 %v513, %v657
    %659 = vdwg.mxu0
    %v660 = vxor.u32 %v585, 2147483648
    %v661 = vmul.f32 %v660, 1.442695
    %v662 = vpow.pop %v661
    %v663 = vadd.f32 %v662, 1.0
    %v664 = vrcp.pop %v663
    %v665 = vmul.f32 1.0, %v664
    %v666 = vxor.u32 %v587, 2147483648
    %v667 = vmul.f32 %v666, 1.442695
    %v668 = vpow.pop %v667
    %v669 = vadd.f32 %v668, 1.0
    %v670 = vrcp.pop %v669
    %v671 = vmul.f32 1.0, %v670
    %v672 = vtanh.pop %v656
    %v673 = vxor.u32 %v658, 2147483648
    %v674 = vmul.f32 %v673, 1.442695
    %v675 = vpow.pop %v674
    %v676 = vadd.f32 %v675, 1.0
    %v677 = vrcp.pop %v676
    %v678 = vmul.f32 1.0, %v677
    %v679 = vmul.f32 %v671, %v48
    %v680 = vmul.f32 %v665, %v672
    %v681 = vadd.f32 %v679, %v680
    %v682 = vtanh.pop %v681
    %v683 = vmul.f32 %v678, %v682
    %s684 = scalar_lea.vmem %s0, 8
    %v685 = vld [vmem:[%s684] sm:$0xff]
    %686 = vmatprep.subr.mxu0 %v51
    %687 = vmatpush1.msra.mxu0 %v50
    %688 = vmatprep.subr.mxu0 %v55
    %689 = vmatpush1.msra.mxu0 %v54
    %690 = vmatprep.subr.mxu0 %v59
    %691 = vmatpush1.msra.mxu0 %v58
    %692 = vmatprep.subr.mxu0 %v63
    %693 = vmatpush1.msra.mxu0 %v62
    %694 = vmatprep.subr.mxu0 %v67
    %695 = vmatpush1.msra.mxu0 %v66
    %696 = vmatprep.subr.mxu0 %v71
    %697 = vmatpush1.msra.mxu0 %v70
    %698 = vmatprep.subr.mxu0 %v75
    %699 = vmatpush1.msra.mxu0 %v74
    %700 = vmatprep.subr.mxu0 %v79
    %701 = vmatpush1.msra.mxu0 %v78
    %702 = vmatprep.subr.mxu0 %v83
    %703 = vmatpush1.msra.mxu0 %v82
    %704 = vmatprep.subr.mxu0 %v87
    %705 = vmatpush1.msra.mxu0 %v86
    %706 = vmatprep.subr.mxu0 %v91
    %707 = vmatpush1.msra.mxu0 %v90
    %708 = vmatprep.subr.mxu0 %v95
    %709 = vmatpush1.msra.mxu0 %v94
    %710 = vmatprep.subr.mxu0 %v99
    %711 = vmatpush1.msra.mxu0 %v98
    %712 = vmatprep.subr.mxu0 %v103
    %713 = vmatpush1.msra.mxu0 %v102
    %714 = vmatprep.subr.mxu0 %v107
    %715 = vmatpush1.msra.mxu0 %v106
    %716 = vmatprep.subr.mxu0 %v111
    %717 = vmatpush1.msra.mxu0 %v110
    %718 = vmatprep.subr.mxu0 %v115
    %719 = vmatpush1.msra.mxu0 %v114
    %720 = vmatprep.subr.mxu0 %v119
    %721 = vmatpush1.msra.mxu0 %v118
    %722 = vmatprep.subr.mxu0 %v123
    %723 = vmatpush1.msra.mxu0 %v122
    %724 = vmatprep.subr.mxu0 %v127
    %725 = vmatpush1.msra.mxu0 %v126
    %726 = vmatprep.subr.mxu0 %v131
    %727 = vmatpush1.msra.mxu0 %v130
    %728 = vmatprep.subr.mxu0 %v135
    %729 = vmatpush1.msra.mxu0 %v134
    %730 = vmatprep.subr.mxu0 %v139
    %731 = vmatpush1.msra.mxu0 %v138
    %732 = vmatprep.subr.mxu0 %v143
    %733 = vmatpush1.msra.mxu0 %v142
    %734 = vmatprep.subr.mxu0 %v147
    %735 = vmatpush1.msra.mxu0 %v146
    %736 = vmatprep.subr.mxu0 %v151
    %737 = vmatpush1.msra.mxu0 %v150
    %738 = vmatprep.subr.mxu0 %v155
    %739 = vmatpush1.msra.mxu0 %v154
    %740 = vmatprep.subr.mxu0 %v159
    %741 = vmatpush1.msra.mxu0 %v158
    %742 = vmatprep.subr.mxu0 %v163
    %743 = vmatpush1.msra.mxu0 %v162
    %744 = vmatprep.subr.mxu0 %v167
    %745 = vmatpush1.msra.mxu0 %v166
    %746 = vmatprep.subr.mxu0 %v171
    %747 = vmatpush1.msra.mxu0 %v170
    %748 = vmatprep.subr.mxu0 %v175
    %749 = vmatpush1.msra.mxu0 %v174
    %750 = vmatprep.mubr.f32.mxu0 %v365
    %751 = vmatmul.mubr.f32.gmra.mrb[0].mxu0 %v685
    %v752 = vpop.f32.mrb[0].mxu0
    %v753 = vadd.f32 %v183, %v752
    %v754 = vpop.f32.mrb[0].mxu0
    %v755 = vadd.f32 %v187, %v754
    %756 = vdwg.mxu0
    %757 = vmatprep.subr.mxu0 %v53
    %758 = vmatpush1.msra.mxu0 %v52
    %759 = vmatprep.subr.mxu0 %v57
    %760 = vmatpush1.msra.mxu0 %v56
    %761 = vmatprep.subr.mxu0 %v61
    %762 = vmatpush1.msra.mxu0 %v60
    %763 = vmatprep.subr.mxu0 %v65
    %764 = vmatpush1.msra.mxu0 %v64
    %765 = vmatprep.subr.mxu0 %v69
    %766 = vmatpush1.msra.mxu0 %v68
    %767 = vmatprep.subr.mxu0 %v73
    %768 = vmatpush1.msra.mxu0 %v72
    %769 = vmatprep.subr.mxu0 %v77
    %770 = vmatpush1.msra.mxu0 %v76
    %771 = vmatprep.subr.mxu0 %v81
    %772 = vmatpush1.msra.mxu0 %v80
    %773 = vmatprep.subr.mxu0 %v85
    %774 = vmatpush1.msra.mxu0 %v84
    %775 = vmatprep.subr.mxu0 %v89
    %776 = vmatpush1.msra.mxu0 %v88
    %777 = vmatprep.subr.mxu0 %v93
    %778 = vmatpush1.msra.mxu0 %v92
    %779 = vmatprep.subr.mxu0 %v97
    %780 = vmatpush1.msra.mxu0 %v96
    %781 = vmatprep.subr.mxu0 %v101
    %782 = vmatpush1.msra.mxu0 %v100
    %783 = vmatprep.subr.mxu0 %v105
    %784 = vmatpush1.msra.mxu0 %v104
    %785 = vmatprep.subr.mxu0 %v109
    %786 = vmatpush1.msra.mxu0 %v108
    %787 = vmatprep.subr.mxu0 %v113
    %788 = vmatpush1.msra.mxu0 %v112
    %789 = vmatprep.subr.mxu0 %v117
    %790 = vmatpush1.msra.mxu0 %v116
    %791 = vmatprep.subr.mxu0 %v121
    %792 = vmatpush1.msra.mxu0 %v120
    %793 = vmatprep.subr.mxu0 %v125
    %794 = vmatpush1.msra.mxu0 %v124
    %795 = vmatprep.subr.mxu0 %v129
    %796 = vmatpush1.msra.mxu0 %v128
    %797 = vmatprep.subr.mxu0 %v133
    %798 = vmatpush1.msra.mxu0 %v132
    %799 = vmatprep.subr.mxu0 %v137
    %800 = vmatpush1.msra.mxu0 %v136
    %801 = vmatprep.subr.mxu0 %v141
    %802 = vmatpush1.msra.mxu0 %v140
    %803 = vmatprep.subr.mxu0 %v145
    %804 = vmatpush1.msra.mxu0 %v144
    %805 = vmatprep.subr.mxu0 %v149
    %806 = vmatpush1.msra.mxu0 %v148
    %807 = vmatprep.subr.mxu0 %v153
    %808 = vmatpush1.msra.mxu0 %v152
    %809 = vmatprep.subr.mxu0 %v157
    %810 = vmatpush1.msra.mxu0 %v156
    %811 = vmatprep.subr.mxu0 %v161
    %812 = vmatpush1.msra.mxu0 %v160
    %813 = vmatprep.subr.mxu0 %v165
    %814 = vmatpush1.msra.mxu0 %v164
    %815 = vmatprep.subr.mxu0 %v169
    %816 = vmatpush1.msra.mxu0 %v168
    %817 = vmatprep.subr.mxu0 %v173
    %818 = vmatpush1.msra.mxu0 %v172
    %819 = vmatprep.subr.mxu0 %v177
    %820 = vmatpush1.msra.mxu0 %v176
    %821 = vmatprep.mubr.f32.mxu0 %v365
    %822 = vmatmul.mubr.f32.gmra.mrb[0].mxu0 %v685
    %v823 = vpop.f32.mrb[0].mxu0
    %v824 = vadd.f32 %v191, %v823
    %v825 = vpop.f32.mrb[0].mxu0
    %v826 = vadd.f32 %v195, %v825
    %827 = vdwg.mxu0
    %v828 = vxor.u32 %v753, 2147483648
    %v829 = vmul.f32 %v828, 1.442695
    %v830 = vpow.pop %v829
    %v831 = vadd.f32 %v830, 1.0
    %v832 = vrcp.pop %v831
    %v833 = vmul.f32 1.0, %v832
    %v834 = vxor.u32 %v755, 2147483648
    %v835 = vmul.f32 %v834, 1.442695
    %v836 = vpow.pop %v835
    %v837 = vadd.f32 %v836, 1.0
    %v838 = vrcp.pop %v837
    %v839 = vmul.f32 1.0, %v838
    %v840 = vtanh.pop %v824
    %v841 = vxor.u32 %v826, 2147483648
    %v842 = vmul.f32 %v841, 1.442695
    %v843 = vpow.pop %v842
    %v844 = vadd.f32 %v843, 1.0
    %v845 = vrcp.pop %v844
    %v846 = vmul.f32 1.0, %v845
    %v847 = vmul.f32 %v839, %v363
    %v848 = vmul.f32 %v833, %v840
    %v849 = vadd.f32 %v847, %v848
    %v850 = vtanh.pop %v849
    %v851 = vmul.f32 %v846, %v850
    %852 = vmatprep.subr.mxu0 %v368
    %853 = vmatpush1.msra.mxu0 %v367
    %854 = vmatprep.subr.mxu0 %v372
    %855 = vmatpush1.msra.mxu0 %v371
    %856 = vmatprep.subr.mxu0 %v376
    %857 = vmatpush1.msra.mxu0 %v375
    %858 = vmatprep.subr.mxu0 %v380
    %859 = vmatpush1.msra.mxu0 %v379
    %860 = vmatprep.subr.mxu0 %v384
    %861 = vmatpush1.msra.mxu0 %v383
    %862 = vmatprep.subr.mxu0 %v388
    %863 = vmatpush1.msra.mxu0 %v387
    %864 = vmatprep.subr.mxu0 %v392
    %865 = vmatpush1.msra.mxu0 %v391
    %866 = vmatprep.subr.mxu0 %v396
    %867 = vmatpush1.msra.mxu0 %v395
    %868 = vmatprep.subr.mxu0 %v400
    %869 = vmatpush1.msra.mxu0 %v399
    %870 = vmatprep.subr.mxu0 %v404
    %871 = vmatpush1.msra.mxu0 %v403
    %872 = vmatprep.subr.mxu0 %v408
    %873 = vmatpush1.msra.mxu0 %v407
    %874 = vmatprep.subr.mxu0 %v412
    %875 = vmatpush1.msra.mxu0 %v411
    %876 = vmatprep.subr.mxu0 %v416
    %877 = vmatpush1.msra.mxu0 %v415
    %878 = vmatprep.subr.mxu0 %v420
    %879 = vmatpush1.msra.mxu0 %v419
    %880 = vmatprep.subr.mxu0 %v424
    %881 = vmatpush1.msra.mxu0 %v423
    %882 = vmatprep.subr.mxu0 %v428
    %883 = vmatpush1.msra.mxu0 %v427
    %884 = vmatprep.subr.mxu0 %v432
    %885 = vmatpush1.msra.mxu0 %v431
    %886 = vmatprep.subr.mxu0 %v436
    %887 = vmatpush1.msra.mxu0 %v435
    %888 = vmatprep.subr.mxu0 %v440
    %889 = vmatpush1.msra.mxu0 %v439
    %890 = vmatprep.subr.mxu0 %v444
    %891 = vmatpush1.msra.mxu0 %v443
    %892 = vmatprep.subr.mxu0 %v448
    %893 = vmatpush1.msra.mxu0 %v447
    %894 = vmatprep.subr.mxu0 %v452
    %895 = vmatpush1.msra.mxu0 %v451
    %896 = vmatprep.subr.mxu0 %v456
    %897 = vmatpush1.msra.mxu0 %v455
    %898 = vmatprep.subr.mxu0 %v460
    %899 = vmatpush1.msra.mxu0 %v459
    %900 = vmatprep.subr.mxu0 %v464
    %901 = vmatpush1.msra.mxu0 %v463
    %902 = vmatprep.subr.mxu0 %v468
    %903 = vmatpush1.msra.mxu0 %v467
    %904 = vmatprep.subr.mxu0 %v472
    %905 = vmatpush1.msra.mxu0 %v471
    %906 = vmatprep.subr.mxu0 %v476
    %907 = vmatpush1.msra.mxu0 %v475
    %908 = vmatprep.subr.mxu0 %v480
    %909 = vmatpush1.msra.mxu0 %v479
    %910 = vmatprep.subr.mxu0 %v484
    %911 = vmatpush1.msra.mxu0 %v483
    %912 = vmatprep.subr.mxu0 %v488
    %913 = vmatpush1.msra.mxu0 %v487
    %914 = vmatprep.subr.mxu0 %v492
    %915 = vmatpush1.msra.mxu0 %v491
    %916 = vmatprep.mubr.f32.mxu0 %v683
    %917 = vmatmul.mubr.f32.gmra.mrb[0].mxu0 %v851
    %v918 = vpop.f32.mrb[0].mxu0
    %v919 = vadd.f32 %v501, %v918
    %v920 = vpop.f32.mrb[0].mxu0
    %v921 = vadd.f32 %v505, %v920
    %922 = vdwg.mxu0
    %923 = vmatprep.subr.mxu0 %v370
    %924 = vmatpush1.msra.mxu0 %v369
    %925 = vmatprep.subr.mxu0 %v374
    %926 = vmatpush1.msra.mxu0 %v373
    %927 = vmatprep.subr.mxu0 %v378
    %928 = vmatpush1.msra.mxu0 %v377
    %929 = vmatprep.subr.mxu0 %v382
    %930 = vmatpush1.msra.mxu0 %v381
    %931 = vmatprep.subr.mxu0 %v386
    %932 = vmatpush1.msra.mxu0 %v385
    %933 = vmatprep.subr.mxu0 %v390
    %934 = vmatpush1.msra.mxu0 %v389
    %935 = vmatprep.subr.mxu0 %v394
    %936 = vmatpush1.msra.mxu0 %v393
    %937 = vmatprep.subr.mxu0 %v398
    %938 = vmatpush1.msra.mxu0 %v397
    %939 = vmatprep.subr.mxu0 %v402
    %940 = vmatpush1.msra.mxu0 %v401
    %941 = vmatprep.subr.mxu0 %v406
    %942 = vmatpush1.msra.mxu0 %v405
    %943 = vmatprep.subr.mxu0 %v410
    %944 = vmatpush1.msra.mxu0 %v409
    %945 = vmatprep.subr.mxu0 %v414
    %946 = vmatpush1.msra.mxu0 %v413
    %947 = vmatprep.subr.mxu0 %v418
    %948 = vmatpush1.msra.mxu0 %v417
    %949 = vmatprep.subr.mxu0 %v422
    %950 = vmatpush1.msra.mxu0 %v421
    %951 = vmatprep.subr.mxu0 %v426
    %952 = vmatpush1.msra.mxu0 %v425
    %953 = vmatprep.subr.mxu0 %v430
    %954 = vmatpush1.msra.mxu0 %v429
    %955 = vmatprep.subr.mxu0 %v434
    %956 = vmatpush1.msra.mxu0 %v433
    %957 = vmatprep.subr.mxu0 %v438
    %958 = vmatpush1.msra.mxu0 %v437
    %959 = vmatprep.subr.mxu0 %v442
    %960 = vmatpush1.msra.mxu0 %v441
    %961 = vmatprep.subr.mxu0 %v446
    %962 = vmatpush1.msra.mxu0 %v445
    %963 = vmatprep.subr.mxu0 %v450
    %964 = vmatpush1.msra.mxu0 %v449
    %965 = vmatprep.subr.mxu0 %v454
    %966 = vmatpush1.msra.mxu0 %v453
    %967 = vmatprep.subr.mxu0 %v458
    %968 = vmatpush1.msra.mxu0 %v457
    %969 = vmatprep.subr.mxu0 %v462
    %970 = vmatpush1.msra.mxu0 %v461
    %971 = vmatprep.subr.mxu0 %v466
    %972 = vmatpush1.msra.mxu0 %v465
    %973 = vmatprep.subr.mxu0 %v470
    %974 = vmatpush1.msra.mxu0 %v469
    %975 = vmatprep.subr.mxu0 %v474
    %976 = vmatpush1.msra.mxu0 %v473
    %977 = vmatprep.subr.mxu0 %v478
    %978 = vmatpush1.msra.mxu0 %v477
    %979 = vmatprep.subr.mxu0 %v482
    %980 = vmatpush1.msra.mxu0 %v481
    %981 = vmatprep.subr.mxu0 %v486
    %982 = vmatpush1.msra.mxu0 %v485
    %983 = vmatprep.subr.mxu0 %v490
    %984 = vmatpush1.msra.mxu0 %v489
    %985 = vmatprep.subr.mxu0 %v494
    %986 = vmatpush1.msra.mxu0 %v493
    %987 = vmatprep.mubr.f32.mxu0 %v683
    %988 = vmatmul.mubr.f32.gmra.mrb[0].mxu0 %v851
    %v989 = vpop.f32.mrb[0].mxu0
    %v990 = vadd.f32 %v509, %v989
    %v991 = vpop.f32.mrb[0].mxu0
    %v992 = vadd.f32 %v513, %v991
    %993 = vdwg.mxu0
    %v994 = vxor.u32 %v919, 2147483648
    %v995 = vmul.f32 %v994, 1.442695
    %v996 = vpow.pop %v995
    %v997 = vadd.f32 %v996, 1.0
    %v998 = vrcp.pop %v997
    %v999 = vmul.f32 1.0, %v998
    %v1000 = vxor.u32 %v921, 2147483648
    %v1001 = vmul.f32 %v1000, 1.442695
    %v1002 = vpow.pop %v1001
    %v1003 = vadd.f32 %v1002, 1.0
    %v1004 = vrcp.pop %v1003
    %v1005 = vmul.f32 1.0, %v1004
    %v1006 = vtanh.pop %v990
    %v1007 = vxor.u32 %v992, 2147483648
    %v1008 = vmul.f32 %v1007, 1.442695
    %v1009 = vpow.pop %v1008
    %v1010 = vadd.f32 %v1009, 1.0
    %v1011 = vrcp.pop %v1010
    %v1012 = vmul.f32 1.0, %v1011
    %v1013 = vmul.f32 %v1005, %v681
    %v1014 = vmul.f32 %v999, %v1006
    %v1015 = vadd.f32 %v1013, %v1014
    %v1016 = vtanh.pop %v1015
    %v1017 = vmul.f32 %v1012, %v1016
    %s1018 = scalar_lea.vmem %s0, 16
    %v1019 = vld [vmem:[%s1018] sm:$0xff]
    %1020 = vmatprep.subr.mxu0 %v51
    %1021 = vmatpush1.msra.mxu0 %v50
    %1022 = vmatprep.subr.mxu0 %v55
    %1023 = vmatpush1.msra.mxu0 %v54
    %1024 = vmatprep.subr.mxu0 %v59
    %1025 = vmatpush1.msra.mxu0 %v58
    %1026 = vmatprep.subr.mxu0 %v63
    %1027 = vmatpush1.msra.mxu0 %v62
    %1028 = vmatprep.subr.mxu0 %v67
    %1029 = vmatpush1.msra.mxu0 %v66
    %1030 = vmatprep.subr.mxu0 %v71
    %1031 = vmatpush1.msra.mxu0 %v70
    %1032 = vmatprep.subr.mxu0 %v75
    %1033 = vmatpush1.msra.mxu0 %v74
    %1034 = vmatprep.subr.mxu0 %v79
    %1035 = vmatpush1.msra.mxu0 %v78
    %1036 = vmatprep.subr.mxu0 %v83
    %1037 = vmatpush1.msra.mxu0 %v82
    %1038 = vmatprep.subr.mxu0 %v87
    %1039 = vmatpush1.msra.mxu0 %v86
    %1040 = vmatprep.subr.mxu0 %v91
    %1041 = vmatpush1.msra.mxu0 %v90
    %1042 = vmatprep.subr.mxu0 %v95
    %1043 = vmatpush1.msra.mxu0 %v94
    %1044 = vmatprep.subr.mxu0 %v99
    %1045 = vmatpush1.msra.mxu0 %v98
    %1046 = vmatprep.subr.mxu0 %v103
    %1047 = vmatpush1.msra.mxu0 %v102
    %1048 = vmatprep.subr.mxu0 %v107
    %1049 = vmatpush1.msra.mxu0 %v106
    %1050 = vmatprep.subr.mxu0 %v111
    %1051 = vmatpush1.msra.mxu0 %v110
    %1052 = vmatprep.subr.mxu0 %v115
    %1053 = vmatpush1.msra.mxu0 %v114
    %1054 = vmatprep.subr.mxu0 %v119
    %1055 = vmatpush1.msra.mxu0 %v118
    %1056 = vmatprep.subr.mxu0 %v123
    %1057 = vmatpush1.msra.mxu0 %v122
    %1058 = vmatprep.subr.mxu0 %v127
    %1059 = vmatpush1.msra.mxu0 %v126
    %1060 = vmatprep.subr.mxu0 %v131
    %1061 = vmatpush1.msra.mxu0 %v130
    %1062 = vmatprep.subr.mxu0 %v135
    %1063 = vmatpush1.msra.mxu0 %v134
    %1064 = vmatprep.subr.mxu0 %v139
    %1065 = vmatpush1.msra.mxu0 %v138
    %1066 = vmatprep.subr.mxu0 %v143
    %1067 = vmatpush1.msra.mxu0 %v142
    %1068 = vmatprep.subr.mxu0 %v147
    %1069 = vmatpush1.msra.mxu0 %v146
    %1070 = vmatprep.subr.mxu0 %v151
    %1071 = vmatpush1.msra.mxu0 %v150
    %1072 = vmatprep.subr.mxu0 %v155
    %1073 = vmatpush1.msra.mxu0 %v154
    %1074 = vmatprep.subr.mxu0 %v159
    %1075 = vmatpush1.msra.mxu0 %v158
    %1076 = vmatprep.subr.mxu0 %v163
    %1077 = vmatpush1.msra.mxu0 %v162
    %1078 = vmatprep.subr.mxu0 %v167
    %1079 = vmatpush1.msra.mxu0 %v166
    %1080 = vmatprep.subr.mxu0 %v171
    %1081 = vmatpush1.msra.mxu0 %v170
    %1082 = vmatprep.subr.mxu0 %v175
    %1083 = vmatpush1.msra.mxu0 %v174
    %1084 = vmatprep.mubr.f32.mxu0 %v851
    %1085 = vmatmul.mubr.f32.gmra.mrb[0].mxu0 %v1019
    %v1086 = vpop.f32.mrb[0].mxu0
    %v1087 = vadd.f32 %v183, %v1086
    %v1088 = vpop.f32.mrb[0].mxu0
    %v1089 = vadd.f32 %v187, %v1088
    %1090 = vdwg.mxu0
    %1091 = vmatprep.subr.mxu0 %v53
    %1092 = vmatpush1.msra.mxu0 %v52
    %1093 = vmatprep.subr.mxu0 %v57
    %1094 = vmatpush1.msra.mxu0 %v56
    %1095 = vmatprep.subr.mxu0 %v61
    %1096 = vmatpush1.msra.mxu0 %v60
    %1097 = vmatprep.subr.mxu0 %v65
    %1098 = vmatpush1.msra.mxu0 %v64
    %1099 = vmatprep.subr.mxu0 %v69
    %1100 = vmatpush1.msra.mxu0 %v68
    %1101 = vmatprep.subr.mxu0 %v73
    %1102 = vmatpush1.msra.mxu0 %v72
    %1103 = vmatprep.subr.mxu0 %v77
    %1104 = vmatpush1.msra.mxu0 %v76
    %1105 = vmatprep.subr.mxu0 %v81
    %1106 = vmatpush1.msra.mxu0 %v80
    %1107 = vmatprep.subr.mxu0 %v85
    %1108 = vmatpush1.msra.mxu0 %v84
    %1109 = vmatprep.subr.mxu0 %v89
    %1110 = vmatpush1.msra.mxu0 %v88
    %1111 = vmatprep.subr.mxu0 %v93
    %1112 = vmatpush1.msra.mxu0 %v92
    %1113 = vmatprep.subr.mxu0 %v97
    %1114 = vmatpush1.msra.mxu0 %v96
    %1115 = vmatprep.subr.mxu0 %v101
    %1116 = vmatpush1.msra.mxu0 %v100
    %1117 = vmatprep.subr.mxu0 %v105
    %1118 = vmatpush1.msra.mxu0 %v104
    %1119 = vmatprep.subr.mxu0 %v109
    %1120 = vmatpush1.msra.mxu0 %v108
    %1121 = vmatprep.subr.mxu0 %v113
    %1122 = vmatpush1.msra.mxu0 %v112
    %1123 = vmatprep.subr.mxu0 %v117
    %1124 = vmatpush1.msra.mxu0 %v116
    %1125 = vmatprep.subr.mxu0 %v121
    %1126 = vmatpush1.msra.mxu0 %v120
    %1127 = vmatprep.subr.mxu0 %v125
    %1128 = vmatpush1.msra.mxu0 %v124
    %1129 = vmatprep.subr.mxu0 %v129
    %1130 = vmatpush1.msra.mxu0 %v128
    %1131 = vmatprep.subr.mxu0 %v133
    %1132 = vmatpush1.msra.mxu0 %v132
    %1133 = vmatprep.subr.mxu0 %v137
    %1134 = vmatpush1.msra.mxu0 %v136
    %1135 = vmatprep.subr.mxu0 %v141
    %1136 = vmatpush1.msra.mxu0 %v140
    %1137 = vmatprep.subr.mxu0 %v145
    %1138 = vmatpush1.msra.mxu0 %v144
    %1139 = vmatprep.subr.mxu0 %v149
    %1140 = vmatpush1.msra.mxu0 %v148
    %1141 = vmatprep.subr.mxu0 %v153
    %1142 = vmatpush1.msra.mxu0 %v152
    %1143 = vmatprep.subr.mxu0 %v157
    %1144 = vmatpush1.msra.mxu0 %v156
    %1145 = vmatprep.subr.mxu0 %v161
    %1146 = vmatpush1.msra.mxu0 %v160
    %1147 = vmatprep.subr.mxu0 %v165
    %1148 = vmatpush1.msra.mxu0 %v164
    %1149 = vmatprep.subr.mxu0 %v169
    %1150 = vmatpush1.msra.mxu0 %v168
    %1151 = vmatprep.subr.mxu0 %v173
    %1152 = vmatpush1.msra.mxu0 %v172
    %1153 = vmatprep.subr.mxu0 %v177
    %1154 = vmatpush1.msra.mxu0 %v176
    %1155 = vmatprep.mubr.f32.mxu0 %v851
    %1156 = vmatmul.mubr.f32.gmra.mrb[0].mxu0 %v1019
    %v1157 = vpop.f32.mrb[0].mxu0
    %v1158 = vadd.f32 %v191, %v1157
    %v1159 = vpop.f32.mrb[0].mxu0
    %v1160 = vadd.f32 %v195, %v1159
    %1161 = vdwg.mxu0
    %v1162 = vxor.u32 %v1087, 2147483648
    %v1163 = vmul.f32 %v1162, 1.442695
    %v1164 = vpow.pop %v1163
    %v1165 = vadd.f32 %v1164, 1.0
    %v1166 = vrcp.pop %v1165
    %v1167 = vmul.f32 1.0, %v1166
    %v1168 = vxor.u32 %v1089, 2147483648
    %v1169 = vmul.f32 %v1168, 1.442695
    %v1170 = vpow.pop %v1169
    %v1171 = vadd.f32 %v1170, 1.0
    %v1172 = vrcp.pop %v1171
    %v1173 = vmul.f32 1.0, %v1172
    %v1174 = vtanh.pop %v1158
    %v1175 = vxor.u32 %v1160, 2147483648
    %v1176 = vmul.f32 %v1175, 1.442695
    %v1177 = vpow.pop %v1176
    %v1178 = vadd.f32 %v1177, 1.0
    %v1179 = vrcp.pop %v1178
    %v1180 = vmul.f32 1.0, %v1179
    %v1181 = vmul.f32 %v1173, %v849
    %v1182 = vmul.f32 %v1167, %v1174
    %v1183 = vadd.f32 %v1181, %v1182
    %v1184 = vtanh.pop %v1183
    %v1185 = vmul.f32 %v1180, %v1184
    %1186 = vmatprep.subr.mxu0 %v368
    %1187 = vmatpush1.msra.mxu0 %v367
    %1188 = vmatprep.subr.mxu0 %v372
    %1189 = vmatpush1.msra.mxu0 %v371
    %1190 = vmatprep.subr.mxu0 %v376
    %1191 = vmatpush1.msra.mxu0 %v375
    %1192 = vmatprep.subr.mxu0 %v380
    %1193 = vmatpush1.msra.mxu0 %v379
    %1194 = vmatprep.subr.mxu0 %v384
    %1195 = vmatpush1.msra.mxu0 %v383
    %1196 = vmatprep.subr.mxu0 %v388
    %1197 = vmatpush1.msra.mxu0 %v387
    %1198 = vmatprep.subr.mxu0 %v392
    %1199 = vmatpush1.msra.mxu0 %v391
    %1200 = vmatprep.subr.mxu0 %v396
    %1201 = vmatpush1.msra.mxu0 %v395
    %1202 = vmatprep.subr.mxu0 %v400
    %1203 = vmatpush1.msra.mxu0 %v399
    %1204 = vmatprep.subr.mxu0 %v404
    %1205 = vmatpush1.msra.mxu0 %v403
    %1206 = vmatprep.subr.mxu0 %v408
    %1207 = vmatpush1.msra.mxu0 %v407
    %1208 = vmatprep.subr.mxu0 %v412
    %1209 = vmatpush1.msra.mxu0 %v411
    %1210 = vmatprep.subr.mxu0 %v416
    %1211 = vmatpush1.msra.mxu0 %v415
    %1212 = vmatprep.subr.mxu0 %v420
    %1213 = vmatpush1.msra.mxu0 %v419
    %1214 = vmatprep.subr.mxu0 %v424
    %1215 = vmatpush1.msra.mxu0 %v423
    %1216 = vmatprep.subr.mxu0 %v428
    %1217 = vmatpush1.msra.mxu0 %v427
    %1218 = vmatprep.subr.mxu0 %v432
    %1219 = vmatpush1.msra.mxu0 %v431
    %1220 = vmatprep.subr.mxu0 %v436
    %1221 = vmatpush1.msra.mxu0 %v435
    %1222 = vmatprep.subr.mxu0 %v440
    %1223 = vmatpush1.msra.mxu0 %v439
    %1224 = vmatprep.subr.mxu0 %v444
    %1225 = vmatpush1.msra.mxu0 %v443
    %1226 = vmatprep.subr.mxu0 %v448
    %1227 = vmatpush1.msra.mxu0 %v447
    %1228 = vmatprep.subr.mxu0 %v452
    %1229 = vmatpush1.msra.mxu0 %v451
    %1230 = vmatprep.subr.mxu0 %v456
    %1231 = vmatpush1.msra.mxu0 %v455
    %1232 = vmatprep.subr.mxu0 %v460
    %1233 = vmatpush1.msra.mxu0 %v459
    %1234 = vmatprep.subr.mxu0 %v464
    %1235 = vmatpush1.msra.mxu0 %v463
    %1236 = vmatprep.subr.mxu0 %v468
    %1237 = vmatpush1.msra.mxu0 %v467
    %1238 = vmatprep.subr.mxu0 %v472
    %1239 = vmatpush1.msra.mxu0 %v471
    %1240 = vmatprep.subr.mxu0 %v476
    %1241 = vmatpush1.msra.mxu0 %v475
    %1242 = vmatprep.subr.mxu0 %v480
    %1243 = vmatpush1.msra.mxu0 %v479
    %1244 = vmatprep.subr.mxu0 %v484
    %1245 = vmatpush1.msra.mxu0 %v483
    %1246 = vmatprep.subr.mxu0 %v488
    %1247 = vmatpush1.msra.mxu0 %v487
    %1248 = vmatprep.subr.mxu0 %v492
    %1249 = vmatpush1.msra.mxu0 %v491
    %1250 = vmatprep.mubr.f32.mxu0 %v1017
    %1251 = vmatmul.mubr.f32.gmra.mrb[0].mxu0 %v1185
    %v1252 = vpop.f32.mrb[0].mxu0
    %v1253 = vadd.f32 %v501, %v1252
    %v1254 = vpop.f32.mrb[0].mxu0
    %v1255 = vadd.f32 %v505, %v1254
    %1256 = vdwg.mxu0
    %1257 = vmatprep.subr.mxu0 %v370
    %1258 = vmatpush1.msra.mxu0 %v369
    %1259 = vmatprep.subr.mxu0 %v374
    %1260 = vmatpush1.msra.mxu0 %v373
    %1261 = vmatprep.subr.mxu0 %v378
    %1262 = vmatpush1.msra.mxu0 %v377
    %1263 = vmatprep.subr.mxu0 %v382
    %1264 = vmatpush1.msra.mxu0 %v381
    %1265 = vmatprep.subr.mxu0 %v386
    %1266 = vmatpush1.msra.mxu0 %v385
    %1267 = vmatprep.subr.mxu0 %v390
    %1268 = vmatpush1.msra.mxu0 %v389
    %1269 = vmatprep.subr.mxu0 %v394
    %1270 = vmatpush1.msra.mxu0 %v393
    %1271 = vmatprep.subr.mxu0 %v398
    %1272 = vmatpush1.msra.mxu0 %v397
    %1273 = vmatprep.subr.mxu0 %v402
    %1274 = vmatpush1.msra.mxu0 %v401
    %1275 = vmatprep.subr.mxu0 %v406
    %1276 = vmatpush1.msra.mxu0 %v405
    %1277 = vmatprep.subr.mxu0 %v410
    %1278 = vmatpush1.msra.mxu0 %v409
    %1279 = vmatprep.subr.mxu0 %v414
    %1280 = vmatpush1.msra.mxu0 %v413
    %1281 = vmatprep.subr.mxu0 %v418
    %1282 = vmatpush1.msra.mxu0 %v417
    %1283 = vmatprep.subr.mxu0 %v422
    %1284 = vmatpush1.msra.mxu0 %v421
    %1285 = vmatprep.subr.mxu0 %v426
    %1286 = vmatpush1.msra.mxu0 %v425
    %1287 = vmatprep.subr.mxu0 %v430
    %1288 = vmatpush1.msra.mxu0 %v429
    %1289 = vmatprep.subr.mxu0 %v434
    %1290 = vmatpush1.msra.mxu0 %v433
    %1291 = vmatprep.subr.mxu0 %v438
    %1292 = vmatpush1.msra.mxu0 %v437
    %1293 = vmatprep.subr.mxu0 %v442
    %1294 = vmatpush1.msra.mxu0 %v441
    %1295 = vmatprep.subr.mxu0 %v446
    %1296 = vmatpush1.msra.mxu0 %v445
    %1297 = vmatprep.subr.mxu0 %v450
    %1298 = vmatpush1.msra.mxu0 %v449
    %1299 = vmatprep.subr.mxu0 %v454
    %1300 = vmatpush1.msra.mxu0 %v453
    %1301 = vmatprep.subr.mxu0 %v458
    %1302 = vmatpush1.msra.mxu0 %v457
    %1303 = vmatprep.subr.mxu0 %v462
    %1304 = vmatpush1.msra.mxu0 %v461
    %1305 = vmatprep.subr.mxu0 %v466
    %1306 = vmatpush1.msra.mxu0 %v465
    %1307 = vmatprep.subr.mxu0 %v470
    %1308 = vmatpush1.msra.mxu0 %v469
    %1309 = vmatprep.subr.mxu0 %v474
    %1310 = vmatpush1.msra.mxu0 %v473
    %1311 = vmatprep.subr.mxu0 %v478
    %1312 = vmatpush1.msra.mxu0 %v477
    %1313 = vmatprep.subr.mxu0 %v482
    %1314 = vmatpush1.msra.mxu0 %v481
    %1315 = vmatprep.subr.mxu0 %v486
    %1316 = vmatpush1.msra.mxu0 %v485
    %1317 = vmatprep.subr.mxu0 %v490
    %1318 = vmatpush1.msra.mxu0 %v489
    %1319 = vmatprep.subr.mxu0 %v494
    %1320 = vmatpush1.msra.mxu0 %v493
    %1321 = vmatprep.mubr.f32.mxu0 %v1017
    %1322 = vmatmul.mubr.f32.gmra.mrb[0].mxu0 %v1185
    %v1323 = vpop.f32.mrb[0].mxu0
    %v1324 = vadd.f32 %v509, %v1323
    %v1325 = vpop.f32.mrb[0].mxu0
    %v1326 = vadd.f32 %v513, %v1325
    %1327 = vdwg.mxu0
    %v1328 = vxor.u32 %v1253, 2147483648
    %v1329 = vmul.f32 %v1328, 1.442695
    %v1330 = vpow.pop %v1329
    %v1331 = vadd.f32 %v1330, 1.0
    %v1332 = vrcp.pop %v1331
    %v1333 = vmul.f32 1.0, %v1332
    %v1334 = vxor.u32 %v1255, 2147483648
    %v1335 = vmul.f32 %v1334, 1.442695
    %v1336 = vpow.pop %v1335
    %v1337 = vadd.f32 %v1336, 1.0
    %v1338 = vrcp.pop %v1337
    %v1339 = vmul.f32 1.0, %v1338
    %v1340 = vtanh.pop %v1324
    %v1341 = vxor.u32 %v1326, 2147483648
    %v1342 = vmul.f32 %v1341, 1.442695
    %v1343 = vpow.pop %v1342
    %v1344 = vadd.f32 %v1343, 1.0
    %v1345 = vrcp.pop %v1344
    %v1346 = vmul.f32 1.0, %v1345
    %v1347 = vmul.f32 %v1339, %v1015
    %v1348 = vmul.f32 %v1333, %v1340
    %v1349 = vadd.f32 %v1347, %v1348
    %v1350 = vtanh.pop %v1349
    %v1351 = vmul.f32 %v1346, %v1350
    %s1352 = scalar_lea.vmem %s0, 24
    %v1353 = vld [vmem:[%s1352] sm:$0xff]
    %1354 = vmatprep.subr.mxu0 %v51
    %1355 = vmatpush1.msra.mxu0 %v50
    %1356 = vmatprep.subr.mxu0 %v55
    %1357 = vmatpush1.msra.mxu0 %v54
    %1358 = vmatprep.subr.mxu0 %v59
    %1359 = vmatpush1.msra.mxu0 %v58
    %1360 = vmatprep.subr.mxu0 %v63
    %1361 = vmatpush1.msra.mxu0 %v62
    %1362 = vmatprep.subr.mxu0 %v67
    %1363 = vmatpush1.msra.mxu0 %v66
    %1364 = vmatprep.subr.mxu0 %v71
    %1365 = vmatpush1.msra.mxu0 %v70
    %1366 = vmatprep.subr.mxu0 %v75
    %1367 = vmatpush1.msra.mxu0 %v74
    %1368 = vmatprep.subr.mxu0 %v79
    %1369 = vmatpush1.msra.mxu0 %v78
    %1370 = vmatprep.subr.mxu0 %v83
    %1371 = vmatpush1.msra.mxu0 %v82
    %1372 = vmatprep.subr.mxu0 %v87
    %1373 = vmatpush1.msra.mxu0 %v86
    %1374 = vmatprep.subr.mxu0 %v91
    %1375 = vmatpush1.msra.mxu0 %v90
    %1376 = vmatprep.subr.mxu0 %v95
    %1377 = vmatpush1.msra.mxu0 %v94
    %1378 = vmatprep.subr.mxu0 %v99
    %1379 = vmatpush1.msra.mxu0 %v98
    %1380 = vmatprep.subr.mxu0 %v103
    %1381 = vmatpush1.msra.mxu0 %v102
    %1382 = vmatprep.subr.mxu0 %v107
    %1383 = vmatpush1.msra.mxu0 %v106
    %1384 = vmatprep.subr.mxu0 %v111
    %1385 = vmatpush1.msra.mxu0 %v110
    %1386 = vmatprep.subr.mxu0 %v115
    %1387 = vmatpush1.msra.mxu0 %v114
    %1388 = vmatprep.subr.mxu0 %v119
    %1389 = vmatpush1.msra.mxu0 %v118
    %1390 = vmatprep.subr.mxu0 %v123
    %1391 = vmatpush1.msra.mxu0 %v122
    %1392 = vmatprep.subr.mxu0 %v127
    %1393 = vmatpush1.msra.mxu0 %v126
    %1394 = vmatprep.subr.mxu0 %v131
    %1395 = vmatpush1.msra.mxu0 %v130
    %1396 = vmatprep.subr.mxu0 %v135
    %1397 = vmatpush1.msra.mxu0 %v134
    %1398 = vmatprep.subr.mxu0 %v139
    %1399 = vmatpush1.msra.mxu0 %v138
    %1400 = vmatprep.subr.mxu0 %v143
    %1401 = vmatpush1.msra.mxu0 %v142
    %1402 = vmatprep.subr.mxu0 %v147
    %1403 = vmatpush1.msra.mxu0 %v146
    %1404 = vmatprep.subr.mxu0 %v151
    %1405 = vmatpush1.msra.mxu0 %v150
    %1406 = vmatprep.subr.mxu0 %v155
    %1407 = vmatpush1.msra.mxu0 %v154
    %1408 = vmatprep.subr.mxu0 %v159
    %1409 = vmatpush1.msra.mxu0 %v158
    %1410 = vmatprep.subr.mxu0 %v163
    %1411 = vmatpush1.msra.mxu0 %v162
    %1412 = vmatprep.subr.mxu0 %v167
    %1413 = vmatpush1.msra.mxu0 %v166
    %1414 = vmatprep.subr.mxu0 %v171
    %1415 = vmatpush1.msra.mxu0 %v170
    %1416 = vmatprep.subr.mxu0 %v175
    %1417 = vmatpush1.msra.mxu0 %v174
    %1418 = vmatprep.mubr.f32.mxu0 %v1185
    %1419 = vmatmul.mubr.f32.gmra.mrb[0].mxu0 %v1353
    %v1420 = vpop.f32.mrb[0].mxu0
    %v1421 = vadd.f32 %v183, %v1420
    %v1422 = vpop.f32.mrb[0].mxu0
    %v1423 = vadd.f32 %v187, %v1422
    %1424 = vdwg.mxu0
    %1425 = vmatprep.subr.mxu0 %v53
    %1426 = vmatpush1.msra.mxu0 %v52
    %1427 = vmatprep.subr.mxu0 %v57
    %1428 = vmatpush1.msra.mxu0 %v56
    %1429 = vmatprep.subr.mxu0 %v61
    %1430 = vmatpush1.msra.mxu0 %v60
    %1431 = vmatprep.subr.mxu0 %v65
    %1432 = vmatpush1.msra.mxu0 %v64
    %1433 = vmatprep.subr.mxu0 %v69
    %1434 = vmatpush1.msra.mxu0 %v68
    %1435 = vmatprep.subr.mxu0 %v73
    %1436 = vmatpush1.msra.mxu0 %v72
    %1437 = vmatprep.subr.mxu0 %v77
    %1438 = vmatpush1.msra.mxu0 %v76
    %1439 = vmatprep.subr.mxu0 %v81
    %1440 = vmatpush1.msra.mxu0 %v80
    %1441 = vmatprep.subr.mxu0 %v85
    %1442 = vmatpush1.msra.mxu0 %v84
    %1443 = vmatprep.subr.mxu0 %v89
    %1444 = vmatpush1.msra.mxu0 %v88
    %1445 = vmatprep.subr.mxu0 %v93
    %1446 = vmatpush1.msra.mxu0 %v92
    %1447 = vmatprep.subr.mxu0 %v97
    %1448 = vmatpush1.msra.mxu0 %v96
    %1449 = vmatprep.subr.mxu0 %v101
    %1450 = vmatpush1.msra.mxu0 %v100
    %1451 = vmatprep.subr.mxu0 %v105
    %1452 = vmatpush1.msra.mxu0 %v104
    %1453 = vmatprep.subr.mxu0 %v109
    %1454 = vmatpush1.msra.mxu0 %v108
    %1455 = vmatprep.subr.mxu0 %v113
    %1456 = vmatpush1.msra.mxu0 %v112
    %1457 = vmatprep.subr.mxu0 %v117
    %1458 = vmatpush1.msra.mxu0 %v116
    %1459 = vmatprep.subr.mxu0 %v121
    %1460 = vmatpush1.msra.mxu0 %v120
    %1461 = vmatprep.subr.mxu0 %v125
    %1462 = vmatpush1.msra.mxu0 %v124
    %1463 = vmatprep.subr.mxu0 %v129
    %1464 = vmatpush1.msra.mxu0 %v128
    %1465 = vmatprep.subr.mxu0 %v133
    %1466 = vmatpush1.msra.mxu0 %v132
    %1467 = vmatprep.subr.mxu0 %v137
    %1468 = vmatpush1.msra.mxu0 %v136
    %1469 = vmatprep.subr.mxu0 %v141
    %1470 = vmatpush1.msra.mxu0 %v140
    %1471 = vmatprep.subr.mxu0 %v145
    %1472 = vmatpush1.msra.mxu0 %v144
    %1473 = vmatprep.subr.mxu0 %v149
    %1474 = vmatpush1.msra.mxu0 %v148
    %1475 = vmatprep.subr.mxu0 %v153
    %1476 = vmatpush1.msra.mxu0 %v152
    %1477 = vmatprep.subr.mxu0 %v157
    %1478 = vmatpush1.msra.mxu0 %v156
    %1479 = vmatprep.subr.mxu0 %v161
    %1480 = vmatpush1.msra.mxu0 %v160
    %1481 = vmatprep.subr.mxu0 %v165
    %1482 = vmatpush1.msra.mxu0 %v164
    %1483 = vmatprep.subr.mxu0 %v169
    %1484 = vmatpush1.msra.mxu0 %v168
    %1485 = vmatprep.subr.mxu0 %v173
    %1486 = vmatpush1.msra.mxu0 %v172
    %1487 = vmatprep.subr.mxu0 %v177
    %1488 = vmatpush1.msra.mxu0 %v176
    %1489 = vmatprep.mubr.f32.mxu0 %v1185
    %1490 = vmatmul.mubr.f32.gmra.mrb[0].mxu0 %v1353
    %v1491 = vpop.f32.mrb[0].mxu0
    %v1492 = vadd.f32 %v191, %v1491
    %v1493 = vpop.f32.mrb[0].mxu0
    %v1494 = vadd.f32 %v195, %v1493
    %1495 = vdwg.mxu0
    %v1496 = vxor.u32 %v1421, 2147483648
    %v1497 = vmul.f32 %v1496, 1.442695
    %v1498 = vpow.pop %v1497
    %v1499 = vadd.f32 %v1498, 1.0
    %v1500 = vrcp.pop %v1499
    %v1501 = vmul.f32 1.0, %v1500
    %v1502 = vxor.u32 %v1423, 2147483648
    %v1503 = vmul.f32 %v1502, 1.442695
    %v1504 = vpow.pop %v1503
    %v1505 = vadd.f32 %v1504, 1.0
    %v1506 = vrcp.pop %v1505
    %v1507 = vmul.f32 1.0, %v1506
    %v1508 = vtanh.pop %v1492
    %v1509 = vxor.u32 %v1494, 2147483648
    %v1510 = vmul.f32 %v1509, 1.442695
    %v1511 = vpow.pop %v1510
    %v1512 = vadd.f32 %v1511, 1.0
    %v1513 = vrcp.pop %v1512
    %v1514 = vmul.f32 1.0, %v1513
    %v1515 = vmul.f32 %v1507, %v1183
    %v1516 = vmul.f32 %v1501, %v1508
    %v1517 = vadd.f32 %v1515, %v1516
    %v1518 = vtanh.pop %v1517
    %v1519 = vmul.f32 %v1514, %v1518
    %1520 = vmatprep.subr.mxu0 %v368
    %1521 = vmatpush1.msra.mxu0 %v367
    %1522 = vmatprep.subr.mxu0 %v372
    %1523 = vmatpush1.msra.mxu0 %v371
    %1524 = vmatprep.subr.mxu0 %v376
    %1525 = vmatpush1.msra.mxu0 %v375
    %1526 = vmatprep.subr.mxu0 %v380
    %1527 = vmatpush1.msra.mxu0 %v379
    %1528 = vmatprep.subr.mxu0 %v384
    %1529 = vmatpush1.msra.mxu0 %v383
    %1530 = vmatprep.subr.mxu0 %v388
    %1531 = vmatpush1.msra.mxu0 %v387
    %1532 = vmatprep.subr.mxu0 %v392
    %1533 = vmatpush1.msra.mxu0 %v391
    %1534 = vmatprep.subr.mxu0 %v396
    %1535 = vmatpush1.msra.mxu0 %v395
    %1536 = vmatprep.subr.mxu0 %v400
    %1537 = vmatpush1.msra.mxu0 %v399
    %1538 = vmatprep.subr.mxu0 %v404
    %1539 = vmatpush1.msra.mxu0 %v403
    %1540 = vmatprep.subr.mxu0 %v408
    %1541 = vmatpush1.msra.mxu0 %v407
    %1542 = vmatprep.subr.mxu0 %v412
    %1543 = vmatpush1.msra.mxu0 %v411
    %1544 = vmatprep.subr.mxu0 %v416
    %1545 = vmatpush1.msra.mxu0 %v415
    %1546 = vmatprep.subr.mxu0 %v420
    %1547 = vmatpush1.msra.mxu0 %v419
    %1548 = vmatprep.subr.mxu0 %v424
    %1549 = vmatpush1.msra.mxu0 %v423
    %1550 = vmatprep.subr.mxu0 %v428
    %1551 = vmatpush1.msra.mxu0 %v427
    %1552 = vmatprep.subr.mxu0 %v432
    %1553 = vmatpush1.msra.mxu0 %v431
    %1554 = vmatprep.subr.mxu0 %v436
    %1555 = vmatpush1.msra.mxu0 %v435
    %1556 = vmatprep.subr.mxu0 %v440
    %1557 = vmatpush1.msra.mxu0 %v439
    %1558 = vmatprep.subr.mxu0 %v444
    %1559 = vmatpush1.msra.mxu0 %v443
    %1560 = vmatprep.subr.mxu0 %v448
    %1561 = vmatpush1.msra.mxu0 %v447
    %1562 = vmatprep.subr.mxu0 %v452
    %1563 = vmatpush1.msra.mxu0 %v451
    %1564 = vmatprep.subr.mxu0 %v456
    %1565 = vmatpush1.msra.mxu0 %v455
    %1566 = vmatprep.subr.mxu0 %v460
    %1567 = vmatpush1.msra.mxu0 %v459
    %1568 = vmatprep.subr.mxu0 %v464
    %1569 = vmatpush1.msra.mxu0 %v463
    %1570 = vmatprep.subr.mxu0 %v468
    %1571 = vmatpush1.msra.mxu0 %v467
    %1572 = vmatprep.subr.mxu0 %v472
    %1573 = vmatpush1.msra.mxu0 %v471
    %1574 = vmatprep.subr.mxu0 %v476
    %1575 = vmatpush1.msra.mxu0 %v475
    %1576 = vmatprep.subr.mxu0 %v480
    %1577 = vmatpush1.msra.mxu0 %v479
    %1578 = vmatprep.subr.mxu0 %v484
    %1579 = vmatpush1.msra.mxu0 %v483
    %1580 = vmatprep.subr.mxu0 %v488
    %1581 = vmatpush1.msra.mxu0 %v487
    %1582 = vmatprep.subr.mxu0 %v492
    %1583 = vmatpush1.msra.mxu0 %v491
    %1584 = vmatprep.mubr.f32.mxu0 %v1351
    %1585 = vmatmul.mubr.f32.gmra.mrb[0].mxu0 %v1519
    %v1586 = vpop.f32.mrb[0].mxu0
    %v1587 = vadd.f32 %v501, %v1586
    %v1588 = vpop.f32.mrb[0].mxu0
    %v1589 = vadd.f32 %v505, %v1588
    %1590 = vdwg.mxu0
    %1591 = vmatprep.subr.mxu0 %v370
    %1592 = vmatpush1.msra.mxu0 %v369
    %1593 = vmatprep.subr.mxu0 %v374
    %1594 = vmatpush1.msra.mxu0 %v373
    %1595 = vmatprep.subr.mxu0 %v378
    %1596 = vmatpush1.msra.mxu0 %v377
    %1597 = vmatprep.subr.mxu0 %v382
    %1598 = vmatpush1.msra.mxu0 %v381
    %1599 = vmatprep.subr.mxu0 %v386
    %1600 = vmatpush1.msra.mxu0 %v385
    %1601 = vmatprep.subr.mxu0 %v390
    %1602 = vmatpush1.msra.mxu0 %v389
    %1603 = vmatprep.subr.mxu0 %v394
    %1604 = vmatpush1.msra.mxu0 %v393
    %1605 = vmatprep.subr.mxu0 %v398
    %1606 = vmatpush1.msra.mxu0 %v397
    %1607 = vmatprep.subr.mxu0 %v402
    %1608 = vmatpush1.msra.mxu0 %v401
    %1609 = vmatprep.subr.mxu0 %v406
    %1610 = vmatpush1.msra.mxu0 %v405
    %1611 = vmatprep.subr.mxu0 %v410
    %1612 = vmatpush1.msra.mxu0 %v409
    %1613 = vmatprep.subr.mxu0 %v414
    %1614 = vmatpush1.msra.mxu0 %v413
    %1615 = vmatprep.subr.mxu0 %v418
    %1616 = vmatpush1.msra.mxu0 %v417
    %1617 = vmatprep.subr.mxu0 %v422
    %1618 = vmatpush1.msra.mxu0 %v421
    %1619 = vmatprep.subr.mxu0 %v426
    %1620 = vmatpush1.msra.mxu0 %v425
    %1621 = vmatprep.subr.mxu0 %v430
    %1622 = vmatpush1.msra.mxu0 %v429
    %1623 = vmatprep.subr.mxu0 %v434
    %1624 = vmatpush1.msra.mxu0 %v433
    %1625 = vmatprep.subr.mxu0 %v438
    %1626 = vmatpush1.msra.mxu0 %v437
    %1627 = vmatprep.subr.mxu0 %v442
    %1628 = vmatpush1.msra.mxu0 %v441
    %1629 = vmatprep.subr.mxu0 %v446
    %1630 = vmatpush1.msra.mxu0 %v445
    %1631 = vmatprep.subr.mxu0 %v450
    %1632 = vmatpush1.msra.mxu0 %v449
    %1633 = vmatprep.subr.mxu0 %v454
    %1634 = vmatpush1.msra.mxu0 %v453
    %1635 = vmatprep.subr.mxu0 %v458
    %1636 = vmatpush1.msra.mxu0 %v457
    %1637 = vmatprep.subr.mxu0 %v462
    %1638 = vmatpush1.msra.mxu0 %v461
    %1639 = vmatprep.subr.mxu0 %v466
    %1640 = vmatpush1.msra.mxu0 %v465
    %1641 = vmatprep.subr.mxu0 %v470
    %1642 = vmatpush1.msra.mxu0 %v469
    %1643 = vmatprep.subr.mxu0 %v474
    %1644 = vmatpush1.msra.mxu0 %v473
    %1645 = vmatprep.subr.mxu0 %v478
    %1646 = vmatpush1.msra.mxu0 %v477
    %1647 = vmatprep.subr.mxu0 %v482
    %1648 = vmatpush1.msra.mxu0 %v481
    %1649 = vmatprep.subr.mxu0 %v486
    %1650 = vmatpush1.msra.mxu0 %v485
    %1651 = vmatprep.subr.mxu0 %v490
    %1652 = vmatpush1.msra.mxu0 %v489
    %1653 = vmatprep.subr.mxu0 %v494
    %1654 = vmatpush1.msra.mxu0 %v493
    %1655 = vmatprep.mubr.f32.mxu0 %v1351
    %1656 = vmatmul.mubr.f32.gmra.mrb[0].mxu0 %v1519
    %v1657 = vpop.f32.mrb[0].mxu0
    %v1658 = vadd.f32 %v509, %v1657
    %v1659 = vpop.f32.mrb[0].mxu0
    %v1660 = vadd.f32 %v513, %v1659
    %1661 = vdwg.mxu0
    %v1662 = vxor.u32 %v1587, 2147483648
    %v1663 = vmul.f32 %v1662, 1.442695
    %v1664 = vpow.pop %v1663
    %v1665 = vadd.f32 %v1664, 1.0
    %v1666 = vrcp.pop %v1665
    %v1667 = vmul.f32 1.0, %v1666
    %v1668 = vxor.u32 %v1589, 2147483648
    %v1669 = vmul.f32 %v1668, 1.442695
    %v1670 = vpow.pop %v1669
    %v1671 = vadd.f32 %v1670, 1.0
    %v1672 = vrcp.pop %v1671
    %v1673 = vmul.f32 1.0, %v1672
    %v1674 = vtanh.pop %v1658
    %v1675 = vxor.u32 %v1660, 2147483648
    %v1676 = vmul.f32 %v1675, 1.442695
    %v1677 = vpow.pop %v1676
    %v1678 = vadd.f32 %v1677, 1.0
    %v1679 = vrcp.pop %v1678
    %v1680 = vmul.f32 1.0, %v1679
    %v1681 = vmul.f32 %v1673, %v1349
    %v1682 = vmul.f32 %v1667, %v1674
    %v1683 = vadd.f32 %v1681, %v1682
    %v1684 = vtanh.pop %v1683
    %v1685 = vmul.f32 %v1680, %v1684
    %s1686 = scalar_lea.vmem %s0, 32
    %v1687 = vld [vmem:[%s1686] sm:$0xff]
    %1688 = vmatprep.subr.mxu0 %v51
    %1689 = vmatpush1.msra.mxu0 %v50
    %1690 = vmatprep.subr.mxu0 %v55
    %1691 = vmatpush1.msra.mxu0 %v54
    %1692 = vmatprep.subr.mxu0 %v59
    %1693 = vmatpush1.msra.mxu0 %v58
    %1694 = vmatprep.subr.mxu0 %v63
    %1695 = vmatpush1.msra.mxu0 %v62
    %1696 = vmatprep.subr.mxu0 %v67
    %1697 = vmatpush1.msra.mxu0 %v66
    %1698 = vmatprep.subr.mxu0 %v71
    %1699 = vmatpush1.msra.mxu0 %v70
    %1700 = vmatprep.subr.mxu0 %v75
    %1701 = vmatpush1.msra.mxu0 %v74
    %1702 = vmatprep.subr.mxu0 %v79
    %1703 = vmatpush1.msra.mxu0 %v78
    %1704 = vmatprep.subr.mxu0 %v83
    %1705 = vmatpush1.msra.mxu0 %v82
    %1706 = vmatprep.subr.mxu0 %v87
    %1707 = vmatpush1.msra.mxu0 %v86
    %1708 = vmatprep.subr.mxu0 %v91
    %1709 = vmatpush1.msra.mxu0 %v90
    %1710 = vmatprep.subr.mxu0 %v95
    %1711 = vmatpush1.msra.mxu0 %v94
    %1712 = vmatprep.subr.mxu0 %v99
    %1713 = vmatpush1.msra.mxu0 %v98
    %1714 = vmatprep.subr.mxu0 %v103
    %1715 = vmatpush1.msra.mxu0 %v102
    %1716 = vmatprep.subr.mxu0 %v107
    %1717 = vmatpush1.msra.mxu0 %v106
    %1718 = vmatprep.subr.mxu0 %v111
    %1719 = vmatpush1.msra.mxu0 %v110
    %1720 = vmatprep.subr.mxu0 %v115
    %1721 = vmatpush1.msra.mxu0 %v114
    %1722 = vmatprep.subr.mxu0 %v119
    %1723 = vmatpush1.msra.mxu0 %v118
    %1724 = vmatprep.subr.mxu0 %v123
    %1725 = vmatpush1.msra.mxu0 %v122
    %1726 = vmatprep.subr.mxu0 %v127
    %1727 = vmatpush1.msra.mxu0 %v126
    %1728 = vmatprep.subr.mxu0 %v131
    %1729 = vmatpush1.msra.mxu0 %v130
    %1730 = vmatprep.subr.mxu0 %v135
    %1731 = vmatpush1.msra.mxu0 %v134
    %1732 = vmatprep.subr.mxu0 %v139
    %1733 = vmatpush1.msra.mxu0 %v138
    %1734 = vmatprep.subr.mxu0 %v143
    %1735 = vmatpush1.msra.mxu0 %v142
    %1736 = vmatprep.subr.mxu0 %v147
    %1737 = vmatpush1.msra.mxu0 %v146
    %1738 = vmatprep.subr.mxu0 %v151
    %1739 = vmatpush1.msra.mxu0 %v150
    %1740 = vmatprep.subr.mxu0 %v155
    %1741 = vmatpush1.msra.mxu0 %v154
    %1742 = vmatprep.subr.mxu0 %v159
    %1743 = vmatpush1.msra.mxu0 %v158
    %1744 = vmatprep.subr.mxu0 %v163
    %1745 = vmatpush1.msra.mxu0 %v162
    %1746 = vmatprep.subr.mxu0 %v167
    %1747 = vmatpush1.msra.mxu0 %v166
    %1748 = vmatprep.subr.mxu0 %v171
    %1749 = vmatpush1.msra.mxu0 %v170
    %1750 = vmatprep.subr.mxu0 %v175
    %1751 = vmatpush1.msra.mxu0 %v174
    %1752 = vmatprep.mubr.f32.mxu0 %v1519
    %1753 = vmatmul.mubr.f32.gmra.mrb[0].mxu0 %v1687
    %v1754 = vpop.f32.mrb[0].mxu0
    %v1755 = vadd.f32 %v183, %v1754
    %v1756 = vpop.f32.mrb[0].mxu0
    %v1757 = vadd.f32 %v187, %v1756
    %1758 = vdwg.mxu0
    %1759 = vmatprep.subr.mxu0 %v53
    %1760 = vmatpush1.msra.mxu0 %v52
    %1761 = vmatprep.subr.mxu0 %v57
    %1762 = vmatpush1.msra.mxu0 %v56
    %1763 = vmatprep.subr.mxu0 %v61
    %1764 = vmatpush1.msra.mxu0 %v60
    %1765 = vmatprep.subr.mxu0 %v65
    %1766 = vmatpush1.msra.mxu0 %v64
    %1767 = vmatprep.subr.mxu0 %v69
    %1768 = vmatpush1.msra.mxu0 %v68
    %1769 = vmatprep.subr.mxu0 %v73
    %1770 = vmatpush1.msra.mxu0 %v72
    %1771 = vmatprep.subr.mxu0 %v77
    %1772 = vmatpush1.msra.mxu0 %v76
    %1773 = vmatprep.subr.mxu0 %v81
    %1774 = vmatpush1.msra.mxu0 %v80
    %1775 = vmatprep.subr.mxu0 %v85
    %1776 = vmatpush1.msra.mxu0 %v84
    %1777 = vmatprep.subr.mxu0 %v89
    %1778 = vmatpush1.msra.mxu0 %v88
    %1779 = vmatprep.subr.mxu0 %v93
    %1780 = vmatpush1.msra.mxu0 %v92
    %1781 = vmatprep.subr.mxu0 %v97
    %1782 = vmatpush1.msra.mxu0 %v96
    %1783 = vmatprep.subr.mxu0 %v101
    %1784 = vmatpush1.msra.mxu0 %v100
    %1785 = vmatprep.subr.mxu0 %v105
    %1786 = vmatpush1.msra.mxu0 %v104
    %1787 = vmatprep.subr.mxu0 %v109
    %1788 = vmatpush1.msra.mxu0 %v108
    %1789 = vmatprep.subr.mxu0 %v113
    %1790 = vmatpush1.msra.mxu0 %v112
    %1791 = vmatprep.subr.mxu0 %v117
    %1792 = vmatpush1.msra.mxu0 %v116
    %1793 = vmatprep.subr.mxu0 %v121
    %1794 = vmatpush1.msra.mxu0 %v120
    %1795 = vmatprep.subr.mxu0 %v125
    %1796 = vmatpush1.msra.mxu0 %v124
    %1797 = vmatprep.subr.mxu0 %v129
    %1798 = vmatpush1.msra.mxu0 %v128
    %1799 = vmatprep.subr.mxu0 %v133
    %1800 = vmatpush1.msra.mxu0 %v132
    %1801 = vmatprep.subr.mxu0 %v137
    %1802 = vmatpush1.msra.mxu0 %v136
    %1803 = vmatprep.subr.mxu0 %v141
    %1804 = vmatpush1.msra.mxu0 %v140
    %1805 = vmatprep.subr.mxu0 %v145
    %1806 = vmatpush1.msra.mxu0 %v144
    %1807 = vmatprep.subr.mxu0 %v149
    %1808 = vmatpush1.msra.mxu0 %v148
    %1809 = vmatprep.subr.mxu0 %v153
    %1810 = vmatpush1.msra.mxu0 %v152
    %1811 = vmatprep.subr.mxu0 %v157
    %1812 = vmatpush1.msra.mxu0 %v156
    %1813 = vmatprep.subr.mxu0 %v161
    %1814 = vmatpush1.msra.mxu0 %v160
    %1815 = vmatprep.subr.mxu0 %v165
    %1816 = vmatpush1.msra.mxu0 %v164
    %1817 = vmatprep.subr.mxu0 %v169
    %1818 = vmatpush1.msra.mxu0 %v168
    %1819 = vmatprep.subr.mxu0 %v173
    %1820 = vmatpush1.msra.mxu0 %v172
    %1821 = vmatprep.subr.mxu0 %v177
    %1822 = vmatpush1.msra.mxu0 %v176
    %1823 = vmatprep.mubr.f32.mxu0 %v1519
    %1824 = vmatmul.mubr.f32.gmra.mrb[0].mxu0 %v1687
    %v1825 = vpop.f32.mrb[0].mxu0
    %v1826 = vadd.f32 %v191, %v1825
    %v1827 = vpop.f32.mrb[0].mxu0
    %v1828 = vadd.f32 %v195, %v1827
    %1829 = vdwg.mxu0
    %v1830 = vxor.u32 %v1755, 2147483648
    %v1831 = vmul.f32 %v1830, 1.442695
    %v1832 = vpow.pop %v1831
    %v1833 = vadd.f32 %v1832, 1.0
    %v1834 = vrcp.pop %v1833
    %v1835 = vmul.f32 1.0, %v1834
    %v1836 = vxor.u32 %v1757, 2147483648
    %v1837 = vmul.f32 %v1836, 1.442695
    %v1838 = vpow.pop %v1837
    %v1839 = vadd.f32 %v1838, 1.0
    %v1840 = vrcp.pop %v1839
    %v1841 = vmul.f32 1.0, %v1840
    %v1842 = vtanh.pop %v1826
    %v1843 = vxor.u32 %v1828, 2147483648
    %v1844 = vmul.f32 %v1843, 1.442695
    %v1845 = vpow.pop %v1844
    %v1846 = vadd.f32 %v1845, 1.0
    %v1847 = vrcp.pop %v1846
    %v1848 = vmul.f32 1.0, %v1847
    %v1849 = vmul.f32 %v1841, %v1517
    %v1850 = vmul.f32 %v1835, %v1842
    %v1851 = vadd.f32 %v1849, %v1850
    %v1852 = vtanh.pop %v1851
    %v1853 = vmul.f32 %v1848, %v1852
    %1854 = vmatprep.subr.mxu0 %v368
    %1855 = vmatpush1.msra.mxu0 %v367
    %1856 = vmatprep.subr.mxu0 %v372
    %1857 = vmatpush1.msra.mxu0 %v371
    %1858 = vmatprep.subr.mxu0 %v376
    %1859 = vmatpush1.msra.mxu0 %v375
    %1860 = vmatprep.subr.mxu0 %v380
    %1861 = vmatpush1.msra.mxu0 %v379
    %1862 = vmatprep.subr.mxu0 %v384
    %1863 = vmatpush1.msra.mxu0 %v383
    %1864 = vmatprep.subr.mxu0 %v388
    %1865 = vmatpush1.msra.mxu0 %v387
    %1866 = vmatprep.subr.mxu0 %v392
    %1867 = vmatpush1.msra.mxu0 %v391
    %1868 = vmatprep.subr.mxu0 %v396
    %1869 = vmatpush1.msra.mxu0 %v395
    %1870 = vmatprep.subr.mxu0 %v400
    %1871 = vmatpush1.msra.mxu0 %v399
    %1872 = vmatprep.subr.mxu0 %v404
    %1873 = vmatpush1.msra.mxu0 %v403
    %1874 = vmatprep.subr.mxu0 %v408
    %1875 = vmatpush1.msra.mxu0 %v407
    %1876 = vmatprep.subr.mxu0 %v412
    %1877 = vmatpush1.msra.mxu0 %v411
    %1878 = vmatprep.subr.mxu0 %v416
    %1879 = vmatpush1.msra.mxu0 %v415
    %1880 = vmatprep.subr.mxu0 %v420
    %1881 = vmatpush1.msra.mxu0 %v419
    %1882 = vmatprep.subr.mxu0 %v424
    %1883 = vmatpush1.msra.mxu0 %v423
    %1884 = vmatprep.subr.mxu0 %v428
    %1885 = vmatpush1.msra.mxu0 %v427
    %1886 = vmatprep.subr.mxu0 %v432
    %1887 = vmatpush1.msra.mxu0 %v431
    %1888 = vmatprep.subr.mxu0 %v436
    %1889 = vmatpush1.msra.mxu0 %v435
    %1890 = vmatprep.subr.mxu0 %v440
    %1891 = vmatpush1.msra.mxu0 %v439
    %1892 = vmatprep.subr.mxu0 %v444
    %1893 = vmatpush1.msra.mxu0 %v443
    %1894 = vmatprep.subr.mxu0 %v448
    %1895 = vmatpush1.msra.mxu0 %v447
    %1896 = vmatprep.subr.mxu0 %v452
    %1897 = vmatpush1.msra.mxu0 %v451
    %1898 = vmatprep.subr.mxu0 %v456
    %1899 = vmatpush1.msra.mxu0 %v455
    %1900 = vmatprep.subr.mxu0 %v460
    %1901 = vmatpush1.msra.mxu0 %v459
    %1902 = vmatprep.subr.mxu0 %v464
    %1903 = vmatpush1.msra.mxu0 %v463
    %1904 = vmatprep.subr.mxu0 %v468
    %1905 = vmatpush1.msra.mxu0 %v467
    %1906 = vmatprep.subr.mxu0 %v472
    %1907 = vmatpush1.msra.mxu0 %v471
    %1908 = vmatprep.subr.mxu0 %v476
    %1909 = vmatpush1.msra.mxu0 %v475
    %1910 = vmatprep.subr.mxu0 %v480
    %1911 = vmatpush1.msra.mxu0 %v479
    %1912 = vmatprep.subr.mxu0 %v484
    %1913 = vmatpush1.msra.mxu0 %v483
    %1914 = vmatprep.subr.mxu0 %v488
    %1915 = vmatpush1.msra.mxu0 %v487
    %1916 = vmatprep.subr.mxu0 %v492
    %1917 = vmatpush1.msra.mxu0 %v491
    %1918 = vmatprep.mubr.f32.mxu0 %v1685
    %1919 = vmatmul.mubr.f32.gmra.mrb[0].mxu0 %v1853
    %v1920 = vpop.f32.mrb[0].mxu0
    %v1921 = vadd.f32 %v501, %v1920
    %v1922 = vpop.f32.mrb[0].mxu0
    %v1923 = vadd.f32 %v505, %v1922
    %1924 = vdwg.mxu0
    %1925 = vmatprep.subr.mxu0 %v370
    %1926 = vmatpush1.msra.mxu0 %v369
    %1927 = vmatprep.subr.mxu0 %v374
    %1928 = vmatpush1.msra.mxu0 %v373
    %1929 = vmatprep.subr.mxu0 %v378
    %1930 = vmatpush1.msra.mxu0 %v377
    %1931 = vmatprep.subr.mxu0 %v382
    %1932 = vmatpush1.msra.mxu0 %v381
    %1933 = vmatprep.subr.mxu0 %v386
    %1934 = vmatpush1.msra.mxu0 %v385
    %1935 = vmatprep.subr.mxu0 %v390
    %1936 = vmatpush1.msra.mxu0 %v389
    %1937 = vmatprep.subr.mxu0 %v394
    %1938 = vmatpush1.msra.mxu0 %v393
    %1939 = vmatprep.subr.mxu0 %v398
    %1940 = vmatpush1.msra.mxu0 %v397
    %1941 = vmatprep.subr.mxu0 %v402
    %1942 = vmatpush1.msra.mxu0 %v401
    %1943 = vmatprep.subr.mxu0 %v406
    %1944 = vmatpush1.msra.mxu0 %v405
    %1945 = vmatprep.subr.mxu0 %v410
    %1946 = vmatpush1.msra.mxu0 %v409
    %1947 = vmatprep.subr.mxu0 %v414
    %1948 = vmatpush1.msra.mxu0 %v413
    %1949 = vmatprep.subr.mxu0 %v418
    %1950 = vmatpush1.msra.mxu0 %v417
    %1951 = vmatprep.subr.mxu0 %v422
    %1952 = vmatpush1.msra.mxu0 %v421
    %1953 = vmatprep.subr.mxu0 %v426
    %1954 = vmatpush1.msra.mxu0 %v425
    %1955 = vmatprep.subr.mxu0 %v430
    %1956 = vmatpush1.msra.mxu0 %v429
    %1957 = vmatprep.subr.mxu0 %v434
    %1958 = vmatpush1.msra.mxu0 %v433
    %1959 = vmatprep.subr.mxu0 %v438
    %1960 = vmatpush1.msra.mxu0 %v437
    %1961 = vmatprep.subr.mxu0 %v442
    %1962 = vmatpush1.msra.mxu0 %v441
    %1963 = vmatprep.subr.mxu0 %v446
    %1964 = vmatpush1.msra.mxu0 %v445
    %1965 = vmatprep.subr.mxu0 %v450
    %1966 = vmatpush1.msra.mxu0 %v449
    %1967 = vmatprep.subr.mxu0 %v454
    %1968 = vmatpush1.msra.mxu0 %v453
    %1969 = vmatprep.subr.mxu0 %v458
    %1970 = vmatpush1.msra.mxu0 %v457
    %1971 = vmatprep.subr.mxu0 %v462
    %1972 = vmatpush1.msra.mxu0 %v461
    %1973 = vmatprep.subr.mxu0 %v466
    %1974 = vmatpush1.msra.mxu0 %v465
    %1975 = vmatprep.subr.mxu0 %v470
    %1976 = vmatpush1.msra.mxu0 %v469
    %1977 = vmatprep.subr.mxu0 %v474
    %1978 = vmatpush1.msra.mxu0 %v473
    %1979 = vmatprep.subr.mxu0 %v478
    %1980 = vmatpush1.msra.mxu0 %v477
    %1981 = vmatprep.subr.mxu0 %v482
    %1982 = vmatpush1.msra.mxu0 %v481
    %1983 = vmatprep.subr.mxu0 %v486
    %1984 = vmatpush1.msra.mxu0 %v485
    %1985 = vmatprep.subr.mxu0 %v490
    %1986 = vmatpush1.msra.mxu0 %v489
    %1987 = vmatprep.subr.mxu0 %v494
    %1988 = vmatpush1.msra.mxu0 %v493
    %1989 = vmatprep.mubr.f32.mxu0 %v1685
    %1990 = vmatmul.mubr.f32.gmra.mrb[0].mxu0 %v1853
    %v1991 = vpop.f32.mrb[0].mxu0
    %v1992 = vadd.f32 %v509, %v1991
    %v1993 = vpop.f32.mrb[0].mxu0
    %v1994 = vadd.f32 %v513, %v1993
    %1995 = vdwg.mxu0
    %v1996 = vxor.u32 %v1921, 2147483648
    %v1997 = vmul.f32 %v1996, 1.442695
    %v1998 = vpow.pop %v1997
    %v1999 = vadd.f32 %v1998, 1.0
    %v2000 = vrcp.pop %v1999
    %v2001 = vmul.f32 1.0, %v2000
    %v2002 = vxor.u32 %v1923, 2147483648
    %v2003 = vmul.f32 %v2002, 1.442695
    %v2004 = vpow.pop %v2003
    %v2005 = vadd.f32 %v2004, 1.0
    %v2006 = vrcp.pop %v2005
    %v2007 = vmul.f32 1.0, %v2006
    %v2008 = vtanh.pop %v1992
    %v2009 = vxor.u32 %v1994, 2147483648
    %v2010 = vmul.f32 %v2009, 1.442695
    %v2011 = vpow.pop %v2010
    %v2012 = vadd.f32 %v2011, 1.0
    %v2013 = vrcp.pop %v2012
    %v2014 = vmul.f32 1.0, %v2013
    %v2015 = vmul.f32 %v2007, %v1683
    %v2016 = vmul.f32 %v2001, %v2008
    %v2017 = vadd.f32 %v2015, %v2016
    %v2018 = vtanh.pop %v2017
    %v2019 = vmul.f32 %v2014, %v2018
    %s2020 = scalar_lea.vmem %s0, 40
    %v2021 = vld [vmem:[%s2020] sm:$0xff]
    %2022 = vmatprep.subr.mxu0 %v51
    %2023 = vmatpush1.msra.mxu0 %v50
    %2024 = vmatprep.subr.mxu0 %v55
    %2025 = vmatpush1.msra.mxu0 %v54
    %2026 = vmatprep.subr.mxu0 %v59
    %2027 = vmatpush1.msra.mxu0 %v58
    %2028 = vmatprep.subr.mxu0 %v63
    %2029 = vmatpush1.msra.mxu0 %v62
    %2030 = vmatprep.subr.mxu0 %v67
    %2031 = vmatpush1.msra.mxu0 %v66
    %2032 = vmatprep.subr.mxu0 %v71
    %2033 = vmatpush1.msra.mxu0 %v70
    %2034 = vmatprep.subr.mxu0 %v75
    %2035 = vmatpush1.msra.mxu0 %v74
    %2036 = vmatprep.subr.mxu0 %v79
    %2037 = vmatpush1.msra.mxu0 %v78
    %2038 = vmatprep.subr.mxu0 %v83
    %2039 = vmatpush1.msra.mxu0 %v82
    %2040 = vmatprep.subr.mxu0 %v87
    %2041 = vmatpush1.msra.mxu0 %v86
    %2042 = vmatprep.subr.mxu0 %v91
    %2043 = vmatpush1.msra.mxu0 %v90
    %2044 = vmatprep.subr.mxu0 %v95
    %2045 = vmatpush1.msra.mxu0 %v94
    %2046 = vmatprep.subr.mxu0 %v99
    %2047 = vmatpush1.msra.mxu0 %v98
    %2048 = vmatprep.subr.mxu0 %v103
    %2049 = vmatpush1.msra.mxu0 %v102
    %2050 = vmatprep.subr.mxu0 %v107
    %2051 = vmatpush1.msra.mxu0 %v106
    %2052 = vmatprep.subr.mxu0 %v111
    %2053 = vmatpush1.msra.mxu0 %v110
    %2054 = vmatprep.subr.mxu0 %v115
    %2055 = vmatpush1.msra.mxu0 %v114
    %2056 = vmatprep.subr.mxu0 %v119
    %2057 = vmatpush1.msra.mxu0 %v118
    %2058 = vmatprep.subr.mxu0 %v123
    %2059 = vmatpush1.msra.mxu0 %v122
    %2060 = vmatprep.subr.mxu0 %v127
    %2061 = vmatpush1.msra.mxu0 %v126
    %2062 = vmatprep.subr.mxu0 %v131
    %2063 = vmatpush1.msra.mxu0 %v130
    %2064 = vmatprep.subr.mxu0 %v135
    %2065 = vmatpush1.msra.mxu0 %v134
    %2066 = vmatprep.subr.mxu0 %v139
    %2067 = vmatpush1.msra.mxu0 %v138
    %2068 = vmatprep.subr.mxu0 %v143
    %2069 = vmatpush1.msra.mxu0 %v142
    %2070 = vmatprep.subr.mxu0 %v147
    %2071 = vmatpush1.msra.mxu0 %v146
    %2072 = vmatprep.subr.mxu0 %v151
    %2073 = vmatpush1.msra.mxu0 %v150
    %2074 = vmatprep.subr.mxu0 %v155
    %2075 = vmatpush1.msra.mxu0 %v154
    %2076 = vmatprep.subr.mxu0 %v159
    %2077 = vmatpush1.msra.mxu0 %v158
    %2078 = vmatprep.subr.mxu0 %v163
    %2079 = vmatpush1.msra.mxu0 %v162
    %2080 = vmatprep.subr.mxu0 %v167
    %2081 = vmatpush1.msra.mxu0 %v166
    %2082 = vmatprep.subr.mxu0 %v171
    %2083 = vmatpush1.msra.mxu0 %v170
    %2084 = vmatprep.subr.mxu0 %v175
    %2085 = vmatpush1.msra.mxu0 %v174
    %2086 = vmatprep.mubr.f32.mxu0 %v1853
    %2087 = vmatmul.mubr.f32.gmra.mrb[0].mxu0 %v2021
    %v2088 = vpop.f32.mrb[0].mxu0
    %v2089 = vadd.f32 %v183, %v2088
    %v2090 = vpop.f32.mrb[0].mxu0
    %v2091 = vadd.f32 %v187, %v2090
    %2092 = vdwg.mxu0
    %2093 = vmatprep.subr.mxu0 %v53
    %2094 = vmatpush1.msra.mxu0 %v52
    %2095 = vmatprep.subr.mxu0 %v57
    %2096 = vmatpush1.msra.mxu0 %v56
    %2097 = vmatprep.subr.mxu0 %v61
    %2098 = vmatpush1.msra.mxu0 %v60
    %2099 = vmatprep.subr.mxu0 %v65
    %2100 = vmatpush1.msra.mxu0 %v64
    %2101 = vmatprep.subr.mxu0 %v69
    %2102 = vmatpush1.msra.mxu0 %v68
    %2103 = vmatprep.subr.mxu0 %v73
    %2104 = vmatpush1.msra.mxu0 %v72
    %2105 = vmatprep.subr.mxu0 %v77
    %2106 = vmatpush1.msra.mxu0 %v76
    %2107 = vmatprep.subr.mxu0 %v81
    %2108 = vmatpush1.msra.mxu0 %v80
    %2109 = vmatprep.subr.mxu0 %v85
    %2110 = vmatpush1.msra.mxu0 %v84
    %2111 = vmatprep.subr.mxu0 %v89
    %2112 = vmatpush1.msra.mxu0 %v88
    %2113 = vmatprep.subr.mxu0 %v93
    %2114 = vmatpush1.msra.mxu0 %v92
    %2115 = vmatprep.subr.mxu0 %v97
    %2116 = vmatpush1.msra.mxu0 %v96
    %2117 = vmatprep.subr.mxu0 %v101
    %2118 = vmatpush1.msra.mxu0 %v100
    %2119 = vmatprep.subr.mxu0 %v105
    %2120 = vmatpush1.msra.mxu0 %v104
    %2121 = vmatprep.subr.mxu0 %v109
    %2122 = vmatpush1.msra.mxu0 %v108
    %2123 = vmatprep.subr.mxu0 %v113
    %2124 = vmatpush1.msra.mxu0 %v112
    %2125 = vmatprep.subr.mxu0 %v117
    %2126 = vmatpush1.msra.mxu0 %v116
    %2127 = vmatprep.subr.mxu0 %v121
    %2128 = vmatpush1.msra.mxu0 %v120
    %2129 = vmatprep.subr.mxu0 %v125
    %2130 = vmatpush1.msra.mxu0 %v124
    %2131 = vmatprep.subr.mxu0 %v129
    %2132 = vmatpush1.msra.mxu0 %v128
    %2133 = vmatprep.subr.mxu0 %v133
    %2134 = vmatpush1.msra.mxu0 %v132
    %2135 = vmatprep.subr.mxu0 %v137
    %2136 = vmatpush1.msra.mxu0 %v136
    %2137 = vmatprep.subr.mxu0 %v141
    %2138 = vmatpush1.msra.mxu0 %v140
    %2139 = vmatprep.subr.mxu0 %v145
    %2140 = vmatpush1.msra.mxu0 %v144
    %2141 = vmatprep.subr.mxu0 %v149
    %2142 = vmatpush1.msra.mxu0 %v148
    %2143 = vmatprep.subr.mxu0 %v153
    %2144 = vmatpush1.msra.mxu0 %v152
    %2145 = vmatprep.subr.mxu0 %v157
    %2146 = vmatpush1.msra.mxu0 %v156
    %2147 = vmatprep.subr.mxu0 %v161
    %2148 = vmatpush1.msra.mxu0 %v160
    %2149 = vmatprep.subr.mxu0 %v165
    %2150 = vmatpush1.msra.mxu0 %v164
    %2151 = vmatprep.subr.mxu0 %v169
    %2152 = vmatpush1.msra.mxu0 %v168
    %2153 = vmatprep.subr.mxu0 %v173
    %2154 = vmatpush1.msra.mxu0 %v172
    %2155 = vmatprep.subr.mxu0 %v177
    %2156 = vmatpush1.msra.mxu0 %v176
    %2157 = vmatprep.mubr.f32.mxu0 %v1853
    %2158 = vmatmul.mubr.f32.gmra.mrb[0].mxu0 %v2021
    %v2159 = vpop.f32.mrb[0].mxu0
    %v2160 = vadd.f32 %v191, %v2159
    %v2161 = vpop.f32.mrb[0].mxu0
    %v2162 = vadd.f32 %v195, %v2161
    %2163 = vdwg.mxu0
    %v2164 = vxor.u32 %v2089, 2147483648
    %v2165 = vmul.f32 %v2164, 1.442695
    %v2166 = vpow.pop %v2165
    %v2167 = vadd.f32 %v2166, 1.0
    %v2168 = vrcp.pop %v2167
    %v2169 = vmul.f32 1.0, %v2168
    %v2170 = vxor.u32 %v2091, 2147483648
    %v2171 = vmul.f32 %v2170, 1.442695
    %v2172 = vpow.pop %v2171
    %v2173 = vadd.f32 %v2172, 1.0
    %v2174 = vrcp.pop %v2173
    %v2175 = vmul.f32 1.0, %v2174
    %v2176 = vtanh.pop %v2160
    %v2177 = vxor.u32 %v2162, 2147483648
    %v2178 = vmul.f32 %v2177, 1.442695
    %v2179 = vpow.pop %v2178
    %v2180 = vadd.f32 %v2179, 1.0
    %v2181 = vrcp.pop %v2180
    %v2182 = vmul.f32 1.0, %v2181
    %v2183 = vmul.f32 %v2175, %v1851
    %v2184 = vmul.f32 %v2169, %v2176
    %v2185 = vadd.f32 %v2183, %v2184
    %v2186 = vtanh.pop %v2185
    %v2187 = vmul.f32 %v2182, %v2186
    %2188 = vmatprep.subr.mxu0 %v368
    %2189 = vmatpush1.msra.mxu0 %v367
    %2190 = vmatprep.subr.mxu0 %v372
    %2191 = vmatpush1.msra.mxu0 %v371
    %2192 = vmatprep.subr.mxu0 %v376
    %2193 = vmatpush1.msra.mxu0 %v375
    %2194 = vmatprep.subr.mxu0 %v380
    %2195 = vmatpush1.msra.mxu0 %v379
    %2196 = vmatprep.subr.mxu0 %v384
    %2197 = vmatpush1.msra.mxu0 %v383
    %2198 = vmatprep.subr.mxu0 %v388
    %2199 = vmatpush1.msra.mxu0 %v387
    %2200 = vmatprep.subr.mxu0 %v392
    %2201 = vmatpush1.msra.mxu0 %v391
    %2202 = vmatprep.subr.mxu0 %v396
    %2203 = vmatpush1.msra.mxu0 %v395
    %2204 = vmatprep.subr.mxu0 %v400
    %2205 = vmatpush1.msra.mxu0 %v399
    %2206 = vmatprep.subr.mxu0 %v404
    %2207 = vmatpush1.msra.mxu0 %v403
    %2208 = vmatprep.subr.mxu0 %v408
    %2209 = vmatpush1.msra.mxu0 %v407
    %2210 = vmatprep.subr.mxu0 %v412
    %2211 = vmatpush1.msra.mxu0 %v411
    %2212 = vmatprep.subr.mxu0 %v416
    %2213 = vmatpush1.msra.mxu0 %v415
    %2214 = vmatprep.subr.mxu0 %v420
    %2215 = vmatpush1.msra.mxu0 %v419
    %2216 = vmatprep.subr.mxu0 %v424
    %2217 = vmatpush1.msra.mxu0 %v423
    %2218 = vmatprep.subr.mxu0 %v428
    %2219 = vmatpush1.msra.mxu0 %v427
    %2220 = vmatprep.subr.mxu0 %v432
    %2221 = vmatpush1.msra.mxu0 %v431
    %2222 = vmatprep.subr.mxu0 %v436
    %2223 = vmatpush1.msra.mxu0 %v435
    %2224 = vmatprep.subr.mxu0 %v440
    %2225 = vmatpush1.msra.mxu0 %v439
    %2226 = vmatprep.subr.mxu0 %v444
    %2227 = vmatpush1.msra.mxu0 %v443
    %2228 = vmatprep.subr.mxu0 %v448
    %2229 = vmatpush1.msra.mxu0 %v447
    %2230 = vmatprep.subr.mxu0 %v452
    %2231 = vmatpush1.msra.mxu0 %v451
    %2232 = vmatprep.subr.mxu0 %v456
    %2233 = vmatpush1.msra.mxu0 %v455
    %2234 = vmatprep.subr.mxu0 %v460
    %2235 = vmatpush1.msra.mxu0 %v459
    %2236 = vmatprep.subr.mxu0 %v464
    %2237 = vmatpush1.msra.mxu0 %v463
    %2238 = vmatprep.subr.mxu0 %v468
    %2239 = vmatpush1.msra.mxu0 %v467
    %2240 = vmatprep.subr.mxu0 %v472
    %2241 = vmatpush1.msra.mxu0 %v471
    %2242 = vmatprep.subr.mxu0 %v476
    %2243 = vmatpush1.msra.mxu0 %v475
    %2244 = vmatprep.subr.mxu0 %v480
    %2245 = vmatpush1.msra.mxu0 %v479
    %2246 = vmatprep.subr.mxu0 %v484
    %2247 = vmatpush1.msra.mxu0 %v483
    %2248 = vmatprep.subr.mxu0 %v488
    %2249 = vmatpush1.msra.mxu0 %v487
    %2250 = vmatprep.subr.mxu0 %v492
    %2251 = vmatpush1.msra.mxu0 %v491
    %2252 = vmatprep.mubr.f32.mxu0 %v2019
    %2253 = vmatmul.mubr.f32.gmra.mrb[0].mxu0 %v2187
    %v2254 = vpop.f32.mrb[0].mxu0
    %v2255 = vadd.f32 %v501, %v2254
    %v2256 = vpop.f32.mrb[0].mxu0
    %v2257 = vadd.f32 %v505, %v2256
    %2258 = vdwg.mxu0
    %2259 = vmatprep.subr.mxu0 %v370
    %2260 = vmatpush1.msra.mxu0 %v369
    %2261 = vmatprep.subr.mxu0 %v374
    %2262 = vmatpush1.msra.mxu0 %v373
    %2263 = vmatprep.subr.mxu0 %v378
    %2264 = vmatpush1.msra.mxu0 %v377
    %2265 = vmatprep.subr.mxu0 %v382
    %2266 = vmatpush1.msra.mxu0 %v381
    %2267 = vmatprep.subr.mxu0 %v386
    %2268 = vmatpush1.msra.mxu0 %v385
    %2269 = vmatprep.subr.mxu0 %v390
    %2270 = vmatpush1.msra.mxu0 %v389
    %2271 = vmatprep.subr.mxu0 %v394
    %2272 = vmatpush1.msra.mxu0 %v393
    %2273 = vmatprep.subr.mxu0 %v398
    %2274 = vmatpush1.msra.mxu0 %v397
    %2275 = vmatprep.subr.mxu0 %v402
    %2276 = vmatpush1.msra.mxu0 %v401
    %2277 = vmatprep.subr.mxu0 %v406
    %2278 = vmatpush1.msra.mxu0 %v405
    %2279 = vmatprep.subr.mxu0 %v410
    %2280 = vmatpush1.msra.mxu0 %v409
    %2281 = vmatprep.subr.mxu0 %v414
    %2282 = vmatpush1.msra.mxu0 %v413
    %2283 = vmatprep.subr.mxu0 %v418
    %2284 = vmatpush1.msra.mxu0 %v417
    %2285 = vmatprep.subr.mxu0 %v422
    %2286 = vmatpush1.msra.mxu0 %v421
    %2287 = vmatprep.subr.mxu0 %v426
    %2288 = vmatpush1.msra.mxu0 %v425
    %2289 = vmatprep.subr.mxu0 %v430
    %2290 = vmatpush1.msra.mxu0 %v429
    %2291 = vmatprep.subr.mxu0 %v434
    %2292 = vmatpush1.msra.mxu0 %v433
    %2293 = vmatprep.subr.mxu0 %v438
    %2294 = vmatpush1.msra.mxu0 %v437
    %2295 = vmatprep.subr.mxu0 %v442
    %2296 = vmatpush1.msra.mxu0 %v441
    %2297 = vmatprep.subr.mxu0 %v446
    %2298 = vmatpush1.msra.mxu0 %v445
    %2299 = vmatprep.subr.mxu0 %v450
    %2300 = vmatpush1.msra.mxu0 %v449
    %2301 = vmatprep.subr.mxu0 %v454
    %2302 = vmatpush1.msra.mxu0 %v453
    %2303 = vmatprep.subr.mxu0 %v458
    %2304 = vmatpush1.msra.mxu0 %v457
    %2305 = vmatprep.subr.mxu0 %v462
    %2306 = vmatpush1.msra.mxu0 %v461
    %2307 = vmatprep.subr.mxu0 %v466
    %2308 = vmatpush1.msra.mxu0 %v465
    %2309 = vmatprep.subr.mxu0 %v470
    %2310 = vmatpush1.msra.mxu0 %v469
    %2311 = vmatprep.subr.mxu0 %v474
    %2312 = vmatpush1.msra.mxu0 %v473
    %2313 = vmatprep.subr.mxu0 %v478
    %2314 = vmatpush1.msra.mxu0 %v477
    %2315 = vmatprep.subr.mxu0 %v482
    %2316 = vmatpush1.msra.mxu0 %v481
    %2317 = vmatprep.subr.mxu0 %v486
    %2318 = vmatpush1.msra.mxu0 %v485
    %2319 = vmatprep.subr.mxu0 %v490
    %2320 = vmatpush1.msra.mxu0 %v489
    %2321 = vmatprep.subr.mxu0 %v494
    %2322 = vmatpush1.msra.mxu0 %v493
    %2323 = vmatprep.mubr.f32.mxu0 %v2019
    %2324 = vmatmul.mubr.f32.gmra.mrb[0].mxu0 %v2187
    %v2325 = vpop.f32.mrb[0].mxu0
    %v2326 = vadd.f32 %v509, %v2325
    %v2327 = vpop.f32.mrb[0].mxu0
    %v2328 = vadd.f32 %v513, %v2327
    %2329 = vdwg.mxu0
    %v2330 = vxor.u32 %v2255, 2147483648
    %v2331 = vmul.f32 %v2330, 1.442695
    %v2332 = vpow.pop %v2331
    %v2333 = vadd.f32 %v2332, 1.0
    %v2334 = vrcp.pop %v2333
    %v2335 = vmul.f32 1.0, %v2334
    %v2336 = vxor.u32 %v2257, 2147483648
    %v2337 = vmul.f32 %v2336, 1.442695
    %v2338 = vpow.pop %v2337
    %v2339 = vadd.f32 %v2338, 1.0
    %v2340 = vrcp.pop %v2339
    %v2341 = vmul.f32 1.0, %v2340
    %v2342 = vtanh.pop %v2326
    %v2343 = vxor.u32 %v2328, 2147483648
    %v2344 = vmul.f32 %v2343, 1.442695
    %v2345 = vpow.pop %v2344
    %v2346 = vadd.f32 %v2345, 1.0
    %v2347 = vrcp.pop %v2346
    %v2348 = vmul.f32 1.0, %v2347
    %v2349 = vmul.f32 %v2341, %v2017
    %v2350 = vmul.f32 %v2335, %v2342
    %v2351 = vadd.f32 %v2349, %v2350
    %v2352 = vtanh.pop %v2351
    %v2353 = vmul.f32 %v2348, %v2352
    %s2354 = scalar_lea.vmem %s0, 48
    %v2355 = vld [vmem:[%s2354] sm:$0xff]
    %2356 = vmatprep.subr.mxu0 %v51
    %2357 = vmatpush1.msra.mxu0 %v50
    %2358 = vmatprep.subr.mxu0 %v55
    %2359 = vmatpush1.msra.mxu0 %v54
    %2360 = vmatprep.subr.mxu0 %v59
    %2361 = vmatpush1.msra.mxu0 %v58
    %2362 = vmatprep.subr.mxu0 %v63
    %2363 = vmatpush1.msra.mxu0 %v62
    %2364 = vmatprep.subr.mxu0 %v67
    %2365 = vmatpush1.msra.mxu0 %v66
    %2366 = vmatprep.subr.mxu0 %v71
    %2367 = vmatpush1.msra.mxu0 %v70
    %2368 = vmatprep.subr.mxu0 %v75
    %2369 = vmatpush1.msra.mxu0 %v74
    %2370 = vmatprep.subr.mxu0 %v79
    %2371 = vmatpush1.msra.mxu0 %v78
    %2372 = vmatprep.subr.mxu0 %v83
    %2373 = vmatpush1.msra.mxu0 %v82
    %2374 = vmatprep.subr.mxu0 %v87
    %2375 = vmatpush1.msra.mxu0 %v86
    %2376 = vmatprep.subr.mxu0 %v91
    %2377 = vmatpush1.msra.mxu0 %v90
    %2378 = vmatprep.subr.mxu0 %v95
    %2379 = vmatpush1.msra.mxu0 %v94
    %2380 = vmatprep.subr.mxu0 %v99
    %2381 = vmatpush1.msra.mxu0 %v98
    %2382 = vmatprep.subr.mxu0 %v103
    %2383 = vmatpush1.msra.mxu0 %v102
    %2384 = vmatprep.subr.mxu0 %v107
    %2385 = vmatpush1.msra.mxu0 %v106
    %2386 = vmatprep.subr.mxu0 %v111
    %2387 = vmatpush1.msra.mxu0 %v110
    %2388 = vmatprep.subr.mxu0 %v115
    %2389 = vmatpush1.msra.mxu0 %v114
    %2390 = vmatprep.subr.mxu0 %v119
    %2391 = vmatpush1.msra.mxu0 %v118
    %2392 = vmatprep.subr.mxu0 %v123
    %2393 = vmatpush1.msra.mxu0 %v122
    %2394 = vmatprep.subr.mxu0 %v127
    %2395 = vmatpush1.msra.mxu0 %v126
    %2396 = vmatprep.subr.mxu0 %v131
    %2397 = vmatpush1.msra.mxu0 %v130
    %2398 = vmatprep.subr.mxu0 %v135
    %2399 = vmatpush1.msra.mxu0 %v134
    %2400 = vmatprep.subr.mxu0 %v139
    %2401 = vmatpush1.msra.mxu0 %v138
    %2402 = vmatprep.subr.mxu0 %v143
    %2403 = vmatpush1.msra.mxu0 %v142
    %2404 = vmatprep.subr.mxu0 %v147
    %2405 = vmatpush1.msra.mxu0 %v146
    %2406 = vmatprep.subr.mxu0 %v151
    %2407 = vmatpush1.msra.mxu0 %v150
    %2408 = vmatprep.subr.mxu0 %v155
    %2409 = vmatpush1.msra.mxu0 %v154
    %2410 = vmatprep.subr.mxu0 %v159
    %2411 = vmatpush1.msra.mxu0 %v158
    %2412 = vmatprep.subr.mxu0 %v163
    %2413 = vmatpush1.msra.mxu0 %v162
    %2414 = vmatprep.subr.mxu0 %v167
    %2415 = vmatpush1.msra.mxu0 %v166
    %2416 = vmatprep.subr.mxu0 %v171
    %2417 = vmatpush1.msra.mxu0 %v170
    %2418 = vmatprep.subr.mxu0 %v175
    %2419 = vmatpush1.msra.mxu0 %v174
    %2420 = vmatprep.mubr.f32.mxu0 %v2187
    %2421 = vmatmul.mubr.f32.gmra.mrb[0].mxu0 %v2355
    %v2422 = vpop.f32.mrb[0].mxu0
    %v2423 = vadd.f32 %v183, %v2422
    %v2424 = vpop.f32.mrb[0].mxu0
    %v2425 = vadd.f32 %v187, %v2424
    %2426 = vdwg.mxu0
    %2427 = vmatprep.subr.mxu0 %v53
    %2428 = vmatpush1.msra.mxu0 %v52
    %2429 = vmatprep.subr.mxu0 %v57
    %2430 = vmatpush1.msra.mxu0 %v56
    %2431 = vmatprep.subr.mxu0 %v61
    %2432 = vmatpush1.msra.mxu0 %v60
    %2433 = vmatprep.subr.mxu0 %v65
    %2434 = vmatpush1.msra.mxu0 %v64
    %2435 = vmatprep.subr.mxu0 %v69
    %2436 = vmatpush1.msra.mxu0 %v68
    %2437 = vmatprep.subr.mxu0 %v73
    %2438 = vmatpush1.msra.mxu0 %v72
    %2439 = vmatprep.subr.mxu0 %v77
    %2440 = vmatpush1.msra.mxu0 %v76
    %2441 = vmatprep.subr.mxu0 %v81
    %2442 = vmatpush1.msra.mxu0 %v80
    %2443 = vmatprep.subr.mxu0 %v85
    %2444 = vmatpush1.msra.mxu0 %v84
    %2445 = vmatprep.subr.mxu0 %v89
    %2446 = vmatpush1.msra.mxu0 %v88
    %2447 = vmatprep.subr.mxu0 %v93
    %2448 = vmatpush1.msra.mxu0 %v92
    %2449 = vmatprep.subr.mxu0 %v97
    %2450 = vmatpush1.msra.mxu0 %v96
    %2451 = vmatprep.subr.mxu0 %v101
    %2452 = vmatpush1.msra.mxu0 %v100
    %2453 = vmatprep.subr.mxu0 %v105
    %2454 = vmatpush1.msra.mxu0 %v104
    %2455 = vmatprep.subr.mxu0 %v109
    %2456 = vmatpush1.msra.mxu0 %v108
    %2457 = vmatprep.subr.mxu0 %v113
    %2458 = vmatpush1.msra.mxu0 %v112
    %2459 = vmatprep.subr.mxu0 %v117
    %2460 = vmatpush1.msra.mxu0 %v116
    %2461 = vmatprep.subr.mxu0 %v121
    %2462 = vmatpush1.msra.mxu0 %v120
    %2463 = vmatprep.subr.mxu0 %v125
    %2464 = vmatpush1.msra.mxu0 %v124
    %2465 = vmatprep.subr.mxu0 %v129
    %2466 = vmatpush1.msra.mxu0 %v128
    %2467 = vmatprep.subr.mxu0 %v133
    %2468 = vmatpush1.msra.mxu0 %v132
    %2469 = vmatprep.subr.mxu0 %v137
    %2470 = vmatpush1.msra.mxu0 %v136
    %2471 = vmatprep.subr.mxu0 %v141
    %2472 = vmatpush1.msra.mxu0 %v140
    %2473 = vmatprep.subr.mxu0 %v145
    %2474 = vmatpush1.msra.mxu0 %v144
    %2475 = vmatprep.subr.mxu0 %v149
    %2476 = vmatpush1.msra.mxu0 %v148
    %2477 = vmatprep.subr.mxu0 %v153
    %2478 = vmatpush1.msra.mxu0 %v152
    %2479 = vmatprep.subr.mxu0 %v157
    %2480 = vmatpush1.msra.mxu0 %v156
    %2481 = vmatprep.subr.mxu0 %v161
    %2482 = vmatpush1.msra.mxu0 %v160
    %2483 = vmatprep.subr.mxu0 %v165
    %2484 = vmatpush1.msra.mxu0 %v164
    %2485 = vmatprep.subr.mxu0 %v169
    %2486 = vmatpush1.msra.mxu0 %v168
    %2487 = vmatprep.subr.mxu0 %v173
    %2488 = vmatpush1.msra.mxu0 %v172
    %2489 = vmatprep.subr.mxu0 %v177
    %2490 = vmatpush1.msra.mxu0 %v176
    %2491 = vmatprep.mubr.f32.mxu0 %v2187
    %2492 = vmatmul.mubr.f32.gmra.mrb[0].mxu0 %v2355
    %v2493 = vpop.f32.mrb[0].mxu0
    %v2494 = vadd.f32 %v191, %v2493
    %v2495 = vpop.f32.mrb[0].mxu0
    %v2496 = vadd.f32 %v195, %v2495
    %2497 = vdwg.mxu0
    %v2498 = vxor.u32 %v2423, 2147483648
    %v2499 = vmul.f32 %v2498, 1.442695
    %v2500 = vpow.pop %v2499
    %v2501 = vadd.f32 %v2500, 1.0
    %v2502 = vrcp.pop %v2501
    %v2503 = vmul.f32 1.0, %v2502
    %v2504 = vxor.u32 %v2425, 2147483648
    %v2505 = vmul.f32 %v2504, 1.442695
    %v2506 = vpow.pop %v2505
    %v2507 = vadd.f32 %v2506, 1.0
    %v2508 = vrcp.pop %v2507
    %v2509 = vmul.f32 1.0, %v2508
    %v2510 = vtanh.pop %v2494
    %v2511 = vxor.u32 %v2496, 2147483648
    %v2512 = vmul.f32 %v2511, 1.442695
    %v2513 = vpow.pop %v2512
    %v2514 = vadd.f32 %v2513, 1.0
    %v2515 = vrcp.pop %v2514
    %v2516 = vmul.f32 1.0, %v2515
    %v2517 = vmul.f32 %v2509, %v2185
    %v2518 = vmul.f32 %v2503, %v2510
    %v2519 = vadd.f32 %v2517, %v2518
    %v2520 = vtanh.pop %v2519
    %v2521 = vmul.f32 %v2516, %v2520
    %2522 = vmatprep.subr.mxu0 %v368
    %2523 = vmatpush1.msra.mxu0 %v367
    %2524 = vmatprep.subr.mxu0 %v372
    %2525 = vmatpush1.msra.mxu0 %v371
    %2526 = vmatprep.subr.mxu0 %v376
    %2527 = vmatpush1.msra.mxu0 %v375
    %2528 = vmatprep.subr.mxu0 %v380
    %2529 = vmatpush1.msra.mxu0 %v379
    %2530 = vmatprep.subr.mxu0 %v384
    %2531 = vmatpush1.msra.mxu0 %v383
    %2532 = vmatprep.subr.mxu0 %v388
    %2533 = vmatpush1.msra.mxu0 %v387
    %2534 = vmatprep.subr.mxu0 %v392
    %2535 = vmatpush1.msra.mxu0 %v391
    %2536 = vmatprep.subr.mxu0 %v396
    %2537 = vmatpush1.msra.mxu0 %v395
    %2538 = vmatprep.subr.mxu0 %v400
    %2539 = vmatpush1.msra.mxu0 %v399
    %2540 = vmatprep.subr.mxu0 %v404
    %2541 = vmatpush1.msra.mxu0 %v403
    %2542 = vmatprep.subr.mxu0 %v408
    %2543 = vmatpush1.msra.mxu0 %v407
    %2544 = vmatprep.subr.mxu0 %v412
    %2545 = vmatpush1.msra.mxu0 %v411
    %2546 = vmatprep.subr.mxu0 %v416
    %2547 = vmatpush1.msra.mxu0 %v415
    %2548 = vmatprep.subr.mxu0 %v420
    %2549 = vmatpush1.msra.mxu0 %v419
    %2550 = vmatprep.subr.mxu0 %v424
    %2551 = vmatpush1.msra.mxu0 %v423
    %2552 = vmatprep.subr.mxu0 %v428
    %2553 = vmatpush1.msra.mxu0 %v427
    %2554 = vmatprep.subr.mxu0 %v432
    %2555 = vmatpush1.msra.mxu0 %v431
    %2556 = vmatprep.subr.mxu0 %v436
    %2557 = vmatpush1.msra.mxu0 %v435
    %2558 = vmatprep.subr.mxu0 %v440
    %2559 = vmatpush1.msra.mxu0 %v439
    %2560 = vmatprep.subr.mxu0 %v444
    %2561 = vmatpush1.msra.mxu0 %v443
    %2562 = vmatprep.subr.mxu0 %v448
    %2563 = vmatpush1.msra.mxu0 %v447
    %2564 = vmatprep.subr.mxu0 %v452
    %2565 = vmatpush1.msra.mxu0 %v451
    %2566 = vmatprep.subr.mxu0 %v456
    %2567 = vmatpush1.msra.mxu0 %v455
    %2568 = vmatprep.subr.mxu0 %v460
    %2569 = vmatpush1.msra.mxu0 %v459
    %2570 = vmatprep.subr.mxu0 %v464
    %2571 = vmatpush1.msra.mxu0 %v463
    %2572 = vmatprep.subr.mxu0 %v468
    %2573 = vmatpush1.msra.mxu0 %v467
    %2574 = vmatprep.subr.mxu0 %v472
    %2575 = vmatpush1.msra.mxu0 %v471
    %2576 = vmatprep.subr.mxu0 %v476
    %2577 = vmatpush1.msra.mxu0 %v475
    %2578 = vmatprep.subr.mxu0 %v480
    %2579 = vmatpush1.msra.mxu0 %v479
    %2580 = vmatprep.subr.mxu0 %v484
    %2581 = vmatpush1.msra.mxu0 %v483
    %2582 = vmatprep.subr.mxu0 %v488
    %2583 = vmatpush1.msra.mxu0 %v487
    %2584 = vmatprep.subr.mxu0 %v492
    %2585 = vmatpush1.msra.mxu0 %v491
    %2586 = vmatprep.mubr.f32.mxu0 %v2353
    %2587 = vmatmul.mubr.f32.gmra.mrb[0].mxu0 %v2521
    %v2588 = vpop.f32.mrb[0].mxu0
    %v2589 = vadd.f32 %v501, %v2588
    %v2590 = vpop.f32.mrb[0].mxu0
    %v2591 = vadd.f32 %v505, %v2590
    %2592 = vdwg.mxu0
    %2593 = vmatprep.subr.mxu0 %v370
    %2594 = vmatpush1.msra.mxu0 %v369
    %2595 = vmatprep.subr.mxu0 %v374
    %2596 = vmatpush1.msra.mxu0 %v373
    %2597 = vmatprep.subr.mxu0 %v378
    %2598 = vmatpush1.msra.mxu0 %v377
    %2599 = vmatprep.subr.mxu0 %v382
    %2600 = vmatpush1.msra.mxu0 %v381
    %2601 = vmatprep.subr.mxu0 %v386
    %2602 = vmatpush1.msra.mxu0 %v385
    %2603 = vmatprep.subr.mxu0 %v390
    %2604 = vmatpush1.msra.mxu0 %v389
    %2605 = vmatprep.subr.mxu0 %v394
    %2606 = vmatpush1.msra.mxu0 %v393
    %2607 = vmatprep.subr.mxu0 %v398
    %2608 = vmatpush1.msra.mxu0 %v397
    %2609 = vmatprep.subr.mxu0 %v402
    %2610 = vmatpush1.msra.mxu0 %v401
    %2611 = vmatprep.subr.mxu0 %v406
    %2612 = vmatpush1.msra.mxu0 %v405
    %2613 = vmatprep.subr.mxu0 %v410
    %2614 = vmatpush1.msra.mxu0 %v409
    %2615 = vmatprep.subr.mxu0 %v414
    %2616 = vmatpush1.msra.mxu0 %v413
    %2617 = vmatprep.subr.mxu0 %v418
    %2618 = vmatpush1.msra.mxu0 %v417
    %2619 = vmatprep.subr.mxu0 %v422
    %2620 = vmatpush1.msra.mxu0 %v421
    %2621 = vmatprep.subr.mxu0 %v426
    %2622 = vmatpush1.msra.mxu0 %v425
    %2623 = vmatprep.subr.mxu0 %v430
    %2624 = vmatpush1.msra.mxu0 %v429
    %2625 = vmatprep.subr.mxu0 %v434
    %2626 = vmatpush1.msra.mxu0 %v433
    %2627 = vmatprep.subr.mxu0 %v438
    %2628 = vmatpush1.msra.mxu0 %v437
    %2629 = vmatprep.subr.mxu0 %v442
    %2630 = vmatpush1.msra.mxu0 %v441
    %2631 = vmatprep.subr.mxu0 %v446
    %2632 = vmatpush1.msra.mxu0 %v445
    %2633 = vmatprep.subr.mxu0 %v450
    %2634 = vmatpush1.msra.mxu0 %v449
    %2635 = vmatprep.subr.mxu0 %v454
    %2636 = vmatpush1.msra.mxu0 %v453
    %2637 = vmatprep.subr.mxu0 %v458
    %2638 = vmatpush1.msra.mxu0 %v457
    %2639 = vmatprep.subr.mxu0 %v462
    %2640 = vmatpush1.msra.mxu0 %v461
    %2641 = vmatprep.subr.mxu0 %v466
    %2642 = vmatpush1.msra.mxu0 %v465
    %2643 = vmatprep.subr.mxu0 %v470
    %2644 = vmatpush1.msra.mxu0 %v469
    %2645 = vmatprep.subr.mxu0 %v474
    %2646 = vmatpush1.msra.mxu0 %v473
    %2647 = vmatprep.subr.mxu0 %v478
    %2648 = vmatpush1.msra.mxu0 %v477
    %2649 = vmatprep.subr.mxu0 %v482
    %2650 = vmatpush1.msra.mxu0 %v481
    %2651 = vmatprep.subr.mxu0 %v486
    %2652 = vmatpush1.msra.mxu0 %v485
    %2653 = vmatprep.subr.mxu0 %v490
    %2654 = vmatpush1.msra.mxu0 %v489
    %2655 = vmatprep.subr.mxu0 %v494
    %2656 = vmatpush1.msra.mxu0 %v493
    %2657 = vmatprep.mubr.f32.mxu0 %v2353
    %2658 = vmatmul.mubr.f32.gmra.mrb[0].mxu0 %v2521
    %v2659 = vpop.f32.mrb[0].mxu0
    %v2660 = vadd.f32 %v509, %v2659
    %v2661 = vpop.f32.mrb[0].mxu0
    %v2662 = vadd.f32 %v513, %v2661
    %2663 = vdwg.mxu0
    %v2664 = vxor.u32 %v2589, 2147483648
    %v2665 = vmul.f32 %v2664, 1.442695
    %v2666 = vpow.pop %v2665
    %v2667 = vadd.f32 %v2666, 1.0
    %v2668 = vrcp.pop %v2667
    %v2669 = vmul.f32 1.0, %v2668
    %v2670 = vxor.u32 %v2591, 2147483648
    %v2671 = vmul.f32 %v2670, 1.442695
    %v2672 = vpow.pop %v2671
    %v2673 = vadd.f32 %v2672, 1.0
    %v2674 = vrcp.pop %v2673
    %v2675 = vmul.f32 1.0, %v2674
    %v2676 = vtanh.pop %v2660
    %v2677 = vxor.u32 %v2662, 2147483648
    %v2678 = vmul.f32 %v2677, 1.442695
    %v2679 = vpow.pop %v2678
    %v2680 = vadd.f32 %v2679, 1.0
    %v2681 = vrcp.pop %v2680
    %v2682 = vmul.f32 1.0, %v2681
    %v2683 = vmul.f32 %v2675, %v2351
    %v2684 = vmul.f32 %v2669, %v2676
    %v2685 = vadd.f32 %v2683, %v2684
    %v2686 = vtanh.pop %v2685
    %v2687 = vmul.f32 %v2682, %v2686
    %s2688 = scalar_lea.vmem %s0, 56
    %v2689 = vld [vmem:[%s2688] sm:$0xff]
    %2690 = vmatprep.subr.mxu0 %v51
    %2691 = vmatpush1.msra.mxu0 %v50
    %2692 = vmatprep.subr.mxu0 %v55
    %2693 = vmatpush1.msra.mxu0 %v54
    %2694 = vmatprep.subr.mxu0 %v59
    %2695 = vmatpush1.msra.mxu0 %v58
    %2696 = vmatprep.subr.mxu0 %v63
    %2697 = vmatpush1.msra.mxu0 %v62
    %2698 = vmatprep.subr.mxu0 %v67
    %2699 = vmatpush1.msra.mxu0 %v66
    %2700 = vmatprep.subr.mxu0 %v71
    %2701 = vmatpush1.msra.mxu0 %v70
    %2702 = vmatprep.subr.mxu0 %v75
    %2703 = vmatpush1.msra.mxu0 %v74
    %2704 = vmatprep.subr.mxu0 %v79
    %2705 = vmatpush1.msra.mxu0 %v78
    %2706 = vmatprep.subr.mxu0 %v83
    %2707 = vmatpush1.msra.mxu0 %v82
    %2708 = vmatprep.subr.mxu0 %v87
    %2709 = vmatpush1.msra.mxu0 %v86
    %2710 = vmatprep.subr.mxu0 %v91
    %2711 = vmatpush1.msra.mxu0 %v90
    %2712 = vmatprep.subr.mxu0 %v95
    %2713 = vmatpush1.msra.mxu0 %v94
    %2714 = vmatprep.subr.mxu0 %v99
    %2715 = vmatpush1.msra.mxu0 %v98
    %2716 = vmatprep.subr.mxu0 %v103
    %2717 = vmatpush1.msra.mxu0 %v102
    %2718 = vmatprep.subr.mxu0 %v107
    %2719 = vmatpush1.msra.mxu0 %v106
    %2720 = vmatprep.subr.mxu0 %v111
    %2721 = vmatpush1.msra.mxu0 %v110
    %2722 = vmatprep.subr.mxu0 %v115
    %2723 = vmatpush1.msra.mxu0 %v114
    %2724 = vmatprep.subr.mxu0 %v119
    %2725 = vmatpush1.msra.mxu0 %v118
    %2726 = vmatprep.subr.mxu0 %v123
    %2727 = vmatpush1.msra.mxu0 %v122
    %2728 = vmatprep.subr.mxu0 %v127
    %2729 = vmatpush1.msra.mxu0 %v126
    %2730 = vmatprep.subr.mxu0 %v131
    %2731 = vmatpush1.msra.mxu0 %v130
    %2732 = vmatprep.subr.mxu0 %v135
    %2733 = vmatpush1.msra.mxu0 %v134
    %2734 = vmatprep.subr.mxu0 %v139
    %2735 = vmatpush1.msra.mxu0 %v138
    %2736 = vmatprep.subr.mxu0 %v143
    %2737 = vmatpush1.msra.mxu0 %v142
    %2738 = vmatprep.subr.mxu0 %v147
    %2739 = vmatpush1.msra.mxu0 %v146
    %2740 = vmatprep.subr.mxu0 %v151
    %2741 = vmatpush1.msra.mxu0 %v150
    %2742 = vmatprep.subr.mxu0 %v155
    %2743 = vmatpush1.msra.mxu0 %v154
    %2744 = vmatprep.subr.mxu0 %v159
    %2745 = vmatpush1.msra.mxu0 %v158
    %2746 = vmatprep.subr.mxu0 %v163
    %2747 = vmatpush1.msra.mxu0 %v162
    %2748 = vmatprep.subr.mxu0 %v167
    %2749 = vmatpush1.msra.mxu0 %v166
    %2750 = vmatprep.subr.mxu0 %v171
    %2751 = vmatpush1.msra.mxu0 %v170
    %2752 = vmatprep.subr.mxu0 %v175
    %2753 = vmatpush1.msra.mxu0 %v174
    %2754 = vmatprep.mubr.f32.mxu0 %v2521
    %2755 = vmatmul.mubr.f32.gmra.mrb[0].mxu0 %v2689
    %v2756 = vpop.f32.mrb[0].mxu0
    %v2757 = vadd.f32 %v183, %v2756
    %v2758 = vpop.f32.mrb[0].mxu0
    %v2759 = vadd.f32 %v187, %v2758
    %2760 = vdwg.mxu0
    %2761 = vmatprep.subr.mxu0 %v53
    %2762 = vmatpush1.msra.mxu0 %v52
    %2763 = vmatprep.subr.mxu0 %v57
    %2764 = vmatpush1.msra.mxu0 %v56
    %2765 = vmatprep.subr.mxu0 %v61
    %2766 = vmatpush1.msra.mxu0 %v60
    %2767 = vmatprep.subr.mxu0 %v65
    %2768 = vmatpush1.msra.mxu0 %v64
    %2769 = vmatprep.subr.mxu0 %v69
    %2770 = vmatpush1.msra.mxu0 %v68
    %2771 = vmatprep.subr.mxu0 %v73
    %2772 = vmatpush1.msra.mxu0 %v72
    %2773 = vmatprep.subr.mxu0 %v77
    %2774 = vmatpush1.msra.mxu0 %v76
    %2775 = vmatprep.subr.mxu0 %v81
    %2776 = vmatpush1.msra.mxu0 %v80
    %2777 = vmatprep.subr.mxu0 %v85
    %2778 = vmatpush1.msra.mxu0 %v84
    %2779 = vmatprep.subr.mxu0 %v89
    %2780 = vmatpush1.msra.mxu0 %v88
    %2781 = vmatprep.subr.mxu0 %v93
    %2782 = vmatpush1.msra.mxu0 %v92
    %2783 = vmatprep.subr.mxu0 %v97
    %2784 = vmatpush1.msra.mxu0 %v96
    %2785 = vmatprep.subr.mxu0 %v101
    %2786 = vmatpush1.msra.mxu0 %v100
    %2787 = vmatprep.subr.mxu0 %v105
    %2788 = vmatpush1.msra.mxu0 %v104
    %2789 = vmatprep.subr.mxu0 %v109
    %2790 = vmatpush1.msra.mxu0 %v108
    %2791 = vmatprep.subr.mxu0 %v113
    %2792 = vmatpush1.msra.mxu0 %v112
    %2793 = vmatprep.subr.mxu0 %v117
    %2794 = vmatpush1.msra.mxu0 %v116
    %2795 = vmatprep.subr.mxu0 %v121
    %2796 = vmatpush1.msra.mxu0 %v120
    %2797 = vmatprep.subr.mxu0 %v125
    %2798 = vmatpush1.msra.mxu0 %v124
    %2799 = vmatprep.subr.mxu0 %v129
    %2800 = vmatpush1.msra.mxu0 %v128
    %2801 = vmatprep.subr.mxu0 %v133
    %2802 = vmatpush1.msra.mxu0 %v132
    %2803 = vmatprep.subr.mxu0 %v137
    %2804 = vmatpush1.msra.mxu0 %v136
    %2805 = vmatprep.subr.mxu0 %v141
    %2806 = vmatpush1.msra.mxu0 %v140
    %2807 = vmatprep.subr.mxu0 %v145
    %2808 = vmatpush1.msra.mxu0 %v144
    %2809 = vmatprep.subr.mxu0 %v149
    %2810 = vmatpush1.msra.mxu0 %v148
    %2811 = vmatprep.subr.mxu0 %v153
    %2812 = vmatpush1.msra.mxu0 %v152
    %2813 = vmatprep.subr.mxu0 %v157
    %2814 = vmatpush1.msra.mxu0 %v156
    %2815 = vmatprep.subr.mxu0 %v161
    %2816 = vmatpush1.msra.mxu0 %v160
    %2817 = vmatprep.subr.mxu0 %v165
    %2818 = vmatpush1.msra.mxu0 %v164
    %2819 = vmatprep.subr.mxu0 %v169
    %2820 = vmatpush1.msra.mxu0 %v168
    %2821 = vmatprep.subr.mxu0 %v173
    %2822 = vmatpush1.msra.mxu0 %v172
    %2823 = vmatprep.subr.mxu0 %v177
    %2824 = vmatpush1.msra.mxu0 %v176
    %2825 = vmatprep.mubr.f32.mxu0 %v2521
    %2826 = vmatmul.mubr.f32.gmra.mrb[0].mxu0 %v2689
    %v2827 = vpop.f32.mrb[0].mxu0
    %v2828 = vadd.f32 %v191, %v2827
    %v2829 = vpop.f32.mrb[0].mxu0
    %v2830 = vadd.f32 %v195, %v2829
    %2831 = vdwg.mxu0
    %v2832 = vxor.u32 %v2757, 2147483648
    %v2833 = vmul.f32 %v2832, 1.442695
    %v2834 = vpow.pop %v2833
    %v2835 = vadd.f32 %v2834, 1.0
    %v2836 = vrcp.pop %v2835
    %v2837 = vmul.f32 1.0, %v2836
    %v2838 = vxor.u32 %v2759, 2147483648
    %v2839 = vmul.f32 %v2838, 1.442695
    %v2840 = vpow.pop %v2839
    %v2841 = vadd.f32 %v2840, 1.0
    %v2842 = vrcp.pop %v2841
    %v2843 = vmul.f32 1.0, %v2842
    %v2844 = vtanh.pop %v2828
    %v2845 = vxor.u32 %v2830, 2147483648
    %v2846 = vmul.f32 %v2845, 1.442695
    %v2847 = vpow.pop %v2846
    %v2848 = vadd.f32 %v2847, 1.0
    %v2849 = vrcp.pop %v2848
    %v2850 = vmul.f32 1.0, %v2849
    %v2851 = vmul.f32 %v2843, %v2519
    %v2852 = vmul.f32 %v2837, %v2844
    %v2853 = vadd.f32 %v2851, %v2852
    %v2854 = vtanh.pop %v2853
    %v2855 = vmul.f32 %v2850, %v2854
    %2856 = vmatprep.subr.mxu0 %v368
    %2857 = vmatpush1.msra.mxu0 %v367
    %2858 = vmatprep.subr.mxu0 %v372
    %2859 = vmatpush1.msra.mxu0 %v371
    %2860 = vmatprep.subr.mxu0 %v376
    %2861 = vmatpush1.msra.mxu0 %v375
    %2862 = vmatprep.subr.mxu0 %v380
    %2863 = vmatpush1.msra.mxu0 %v379
    %2864 = vmatprep.subr.mxu0 %v384
    %2865 = vmatpush1.msra.mxu0 %v383
    %2866 = vmatprep.subr.mxu0 %v388
    %2867 = vmatpush1.msra.mxu0 %v387
    %2868 = vmatprep.subr.mxu0 %v392
    %2869 = vmatpush1.msra.mxu0 %v391
    %2870 = vmatprep.subr.mxu0 %v396
    %2871 = vmatpush1.msra.mxu0 %v395
    %2872 = vmatprep.subr.mxu0 %v400
    %2873 = vmatpush1.msra.mxu0 %v399
    %2874 = vmatprep.subr.mxu0 %v404
    %2875 = vmatpush1.msra.mxu0 %v403
    %2876 = vmatprep.subr.mxu0 %v408
    %2877 = vmatpush1.msra.mxu0 %v407
    %2878 = vmatprep.subr.mxu0 %v412
    %2879 = vmatpush1.msra.mxu0 %v411
    %2880 = vmatprep.subr.mxu0 %v416
    %2881 = vmatpush1.msra.mxu0 %v415
    %2882 = vmatprep.subr.mxu0 %v420
    %2883 = vmatpush1.msra.mxu0 %v419
    %2884 = vmatprep.subr.mxu0 %v424
    %2885 = vmatpush1.msra.mxu0 %v423
    %2886 = vmatprep.subr.mxu0 %v428
    %2887 = vmatpush1.msra.mxu0 %v427
    %2888 = vmatprep.subr.mxu0 %v432
    %2889 = vmatpush1.msra.mxu0 %v431
    %2890 = vmatprep.subr.mxu0 %v436
    %2891 = vmatpush1.msra.mxu0 %v435
    %2892 = vmatprep.subr.mxu0 %v440
    %2893 = vmatpush1.msra.mxu0 %v439
    %2894 = vmatprep.subr.mxu0 %v444
    %2895 = vmatpush1.msra.mxu0 %v443
    %2896 = vmatprep.subr.mxu0 %v448
    %2897 = vmatpush1.msra.mxu0 %v447
    %2898 = vmatprep.subr.mxu0 %v452
    %2899 = vmatpush1.msra.mxu0 %v451
    %2900 = vmatprep.subr.mxu0 %v456
    %2901 = vmatpush1.msra.mxu0 %v455
    %2902 = vmatprep.subr.mxu0 %v460
    %2903 = vmatpush1.msra.mxu0 %v459
    %2904 = vmatprep.subr.mxu0 %v464
    %2905 = vmatpush1.msra.mxu0 %v463
    %2906 = vmatprep.subr.mxu0 %v468
    %2907 = vmatpush1.msra.mxu0 %v467
    %2908 = vmatprep.subr.mxu0 %v472
    %2909 = vmatpush1.msra.mxu0 %v471
    %2910 = vmatprep.subr.mxu0 %v476
    %2911 = vmatpush1.msra.mxu0 %v475
    %2912 = vmatprep.subr.mxu0 %v480
    %2913 = vmatpush1.msra.mxu0 %v479
    %2914 = vmatprep.subr.mxu0 %v484
    %2915 = vmatpush1.msra.mxu0 %v483
    %2916 = vmatprep.subr.mxu0 %v488
    %2917 = vmatpush1.msra.mxu0 %v487
    %2918 = vmatprep.subr.mxu0 %v492
    %2919 = vmatpush1.msra.mxu0 %v491
    %2920 = vmatprep.mubr.f32.mxu0 %v2687
    %2921 = vmatmul.mubr.f32.gmra.mrb[0].mxu0 %v2855
    %v2922 = vpop.f32.mrb[0].mxu0
    %v2923 = vadd.f32 %v501, %v2922
    %v2924 = vpop.f32.mrb[0].mxu0
    %v2925 = vadd.f32 %v505, %v2924
    %2926 = vdwg.mxu0
    %2927 = vmatprep.subr.mxu0 %v370
    %2928 = vmatpush1.msra.mxu0 %v369
    %2929 = vmatprep.subr.mxu0 %v374
    %2930 = vmatpush1.msra.mxu0 %v373
    %2931 = vmatprep.subr.mxu0 %v378
    %2932 = vmatpush1.msra.mxu0 %v377
    %2933 = vmatprep.subr.mxu0 %v382
    %2934 = vmatpush1.msra.mxu0 %v381
    %2935 = vmatprep.subr.mxu0 %v386
    %2936 = vmatpush1.msra.mxu0 %v385
    %2937 = vmatprep.subr.mxu0 %v390
    %2938 = vmatpush1.msra.mxu0 %v389
    %2939 = vmatprep.subr.mxu0 %v394
    %2940 = vmatpush1.msra.mxu0 %v393
    %2941 = vmatprep.subr.mxu0 %v398
    %2942 = vmatpush1.msra.mxu0 %v397
    %2943 = vmatprep.subr.mxu0 %v402
    %2944 = vmatpush1.msra.mxu0 %v401
    %2945 = vmatprep.subr.mxu0 %v406
    %2946 = vmatpush1.msra.mxu0 %v405
    %2947 = vmatprep.subr.mxu0 %v410
    %2948 = vmatpush1.msra.mxu0 %v409
    %2949 = vmatprep.subr.mxu0 %v414
    %2950 = vmatpush1.msra.mxu0 %v413
    %2951 = vmatprep.subr.mxu0 %v418
    %2952 = vmatpush1.msra.mxu0 %v417
    %2953 = vmatprep.subr.mxu0 %v422
    %2954 = vmatpush1.msra.mxu0 %v421
    %2955 = vmatprep.subr.mxu0 %v426
    %2956 = vmatpush1.msra.mxu0 %v425
    %2957 = vmatprep.subr.mxu0 %v430
    %2958 = vmatpush1.msra.mxu0 %v429
    %2959 = vmatprep.subr.mxu0 %v434
    %2960 = vmatpush1.msra.mxu0 %v433
    %2961 = vmatprep.subr.mxu0 %v438
    %2962 = vmatpush1.msra.mxu0 %v437
    %2963 = vmatprep.subr.mxu0 %v442
    %2964 = vmatpush1.msra.mxu0 %v441
    %2965 = vmatprep.subr.mxu0 %v446
    %2966 = vmatpush1.msra.mxu0 %v445
    %2967 = vmatprep.subr.mxu0 %v450
    %2968 = vmatpush1.msra.mxu0 %v449
    %2969 = vmatprep.subr.mxu0 %v454
    %2970 = vmatpush1.msra.mxu0 %v453
    %2971 = vmatprep.subr.mxu0 %v458
    %2972 = vmatpush1.msra.mxu0 %v457
    %2973 = vmatprep.subr.mxu0 %v462
    %2974 = vmatpush1.msra.mxu0 %v461
    %2975 = vmatprep.subr.mxu0 %v466
    %2976 = vmatpush1.msra.mxu0 %v465
    %2977 = vmatprep.subr.mxu0 %v470
    %2978 = vmatpush1.msra.mxu0 %v469
    %2979 = vmatprep.subr.mxu0 %v474
    %2980 = vmatpush1.msra.mxu0 %v473
    %2981 = vmatprep.subr.mxu0 %v478
    %2982 = vmatpush1.msra.mxu0 %v477
    %2983 = vmatprep.subr.mxu0 %v482
    %2984 = vmatpush1.msra.mxu0 %v481
    %2985 = vmatprep.subr.mxu0 %v486
    %2986 = vmatpush1.msra.mxu0 %v485
    %2987 = vmatprep.subr.mxu0 %v490
    %2988 = vmatpush1.msra.mxu0 %v489
    %2989 = vmatprep.subr.mxu0 %v494
    %2990 = vmatpush1.msra.mxu0 %v493
    %2991 = vmatprep.mubr.f32.mxu0 %v2687
    %2992 = vmatmul.mubr.f32.gmra.mrb[0].mxu0 %v2855
    %v2993 = vpop.f32.mrb[0].mxu0
    %v2994 = vadd.f32 %v509, %v2993
    %v2995 = vpop.f32.mrb[0].mxu0
    %v2996 = vadd.f32 %v513, %v2995
    %2997 = vdwg.mxu0
    %v2998 = vxor.u32 %v2923, 2147483648
    %v2999 = vmul.f32 %v2998, 1.442695
    %v3000 = vpow.pop %v2999
    %v3001 = vadd.f32 %v3000, 1.0
    %v3002 = vrcp.pop %v3001
    %v3003 = vmul.f32 1.0, %v3002
    %v3004 = vxor.u32 %v2925, 2147483648
    %v3005 = vmul.f32 %v3004, 1.442695
    %v3006 = vpow.pop %v3005
    %v3007 = vadd.f32 %v3006, 1.0
    %v3008 = vrcp.pop %v3007
    %v3009 = vmul.f32 1.0, %v3008
    %v3010 = vtanh.pop %v2994
    %v3011 = vxor.u32 %v2996, 2147483648
    %v3012 = vmul.f32 %v3011, 1.442695
    %v3013 = vpow.pop %v3012
    %v3014 = vadd.f32 %v3013, 1.0
    %v3015 = vrcp.pop %v3014
    %v3016 = vmul.f32 1.0, %v3015
    %v3017 = vmul.f32 %v3009, %v2685
    %v3018 = vmul.f32 %v3003, %v3010
    %v3019 = vadd.f32 %v3017, %v3018
    %v3020 = vtanh.pop %v3019
    %v3021 = vmul.f32 %v3016, %v3020
    %3022 = vst [vmem:[%s8] sm:$0xff] %v2855
    %3023 = vst [vmem:[%s9] sm:$0xff] %v2853
    %s3024 = scalar_lea.vmem %s8, 8
    %3025 = vst [vmem:[%s3024] sm:$0xff] %v3021
    %s3026 = scalar_lea.vmem %s9, 8
    %3027 = vst [vmem:[%s3026] sm:$0xff] %v3019
    %v3028 = vmax.f32 %v3021, 0.0
    %v3029 = vld [vmem:[%s3] sm:$0xff]
    %v3030 = vld [vmem:[%s3 + $0x8] sm:$0xff]
    %v3031 = vld [vmem:[%s3 + $0x10] sm:$0xff]
    %v3032 = vld [vmem:[%s3 + $0x18] sm:$0xff]
    %v3033 = vld [vmem:[%s3 + $0x20] sm:$0xff]
    %v3034 = vld [vmem:[%s3 + $0x28] sm:$0xff]
    %v3035 = vld [vmem:[%s3 + $0x30] sm:$0xff]
    %v3036 = vld [vmem:[%s3 + $0x38] sm:$0xff]
    %v3037 = vld [vmem:[%s3 + $0x40] sm:$0xff]
    %v3038 = vld [vmem:[%s3 + $0x48] sm:$0xff]
    %v3039 = vld [vmem:[%s3 + $0x50] sm:$0xff]
    %v3040 = vld [vmem:[%s3 + $0x58] sm:$0xff]
    %v3041 = vld [vmem:[%s3 + $0x60] sm:$0xff]
    %v3042 = vld [vmem:[%s3 + $0x68] sm:$0xff]
    %v3043 = vld [vmem:[%s3 + $0x70] sm:$0xff]
    %v3044 = vld [vmem:[%s3 + $0x78] sm:$0xff]
    %v3045 = vld [vmem:[%s4] sm:$0x1]
    %v3047 = vlaneseq
    %v3048 = vshrl.u32 %v3047, 7
    %v3049 = vsub.s32 0, %v3048
    %v3050 = vrot.slane %v3045, %v3049
    %3052 = vmatprep.subr.mxu0 0.0
    %3053 = vmatpush1.msra.mxu0 %v3029
    %3054 = vmatprep.subr.mxu0 0.0
    %3055 = vmatpush1.msra.mxu0 %v3030
    %3056 = vmatprep.subr.mxu0 0.0
    %3057 = vmatpush1.msra.mxu0 %v3031
    %3058 = vmatprep.subr.mxu0 0.0
    %3059 = vmatpush1.msra.mxu0 %v3032
    %3060 = vmatprep.subr.mxu0 0.0
    %3061 = vmatpush1.msra.mxu0 %v3033
    %3062 = vmatprep.subr.mxu0 0.0
    %3063 = vmatpush1.msra.mxu0 %v3034
    %3064 = vmatprep.subr.mxu0 0.0
    %3065 = vmatpush1.msra.mxu0 %v3035
    %3066 = vmatprep.subr.mxu0 0.0
    %3067 = vmatpush1.msra.mxu0 %v3036
    %3068 = vmatprep.subr.mxu0 0.0
    %3069 = vmatpush1.msra.mxu0 %v3037
    %3070 = vmatprep.subr.mxu0 0.0
    %3071 = vmatpush1.msra.mxu0 %v3038
    %3072 = vmatprep.subr.mxu0 0.0
    %3073 = vmatpush1.msra.mxu0 %v3039
    %3074 = vmatprep.subr.mxu0 0.0
    %3075 = vmatpush1.msra.mxu0 %v3040
    %3076 = vmatprep.subr.mxu0 0.0
    %3077 = vmatpush1.msra.mxu0 %v3041
    %3078 = vmatprep.subr.mxu0 0.0
    %3079 = vmatpush1.msra.mxu0 %v3042
    %3080 = vmatprep.subr.mxu0 0.0
    %3081 = vmatpush1.msra.mxu0 %v3043
    %3082 = vmatprep.subr.mxu0 0.0
    %3083 = vmatpush1.msra.mxu0 %v3044
    %3084 = vmatprep.subr.mxu0 0.0
    %3085 = vmatpush1.msra.mxu0 0.0
    %3086 = vmatprep.subr.mxu0 0.0
    %3087 = vmatpush1.msra.mxu0 0.0
    %3088 = vmatprep.subr.mxu0 0.0
    %3089 = vmatpush1.msra.mxu0 0.0
    %3090 = vmatprep.subr.mxu0 0.0
    %3091 = vmatpush1.msra.mxu0 0.0
    %3092 = vmatprep.subr.mxu0 0.0
    %3093 = vmatpush1.msra.mxu0 0.0
    %3094 = vmatprep.subr.mxu0 0.0
    %3095 = vmatpush1.msra.mxu0 0.0
    %3096 = vmatprep.subr.mxu0 0.0
    %3097 = vmatpush1.msra.mxu0 0.0
    %3098 = vmatprep.subr.mxu0 0.0
    %3099 = vmatpush1.msra.mxu0 0.0
    %3100 = vmatprep.subr.mxu0 0.0
    %3101 = vmatpush1.msra.mxu0 0.0
    %3102 = vmatprep.subr.mxu0 0.0
    %3103 = vmatpush1.msra.mxu0 0.0
    %3104 = vmatprep.subr.mxu0 0.0
    %3105 = vmatpush1.msra.mxu0 0.0
    %3106 = vmatprep.subr.mxu0 0.0
    %3107 = vmatpush1.msra.mxu0 0.0
    %3108 = vmatprep.subr.mxu0 0.0
    %3109 = vmatpush1.msra.mxu0 0.0
    %3110 = vmatprep.subr.mxu0 0.0
    %3111 = vmatpush1.msra.mxu0 0.0
    %3112 = vmatprep.subr.mxu0 0.0
    %3113 = vmatpush1.msra.mxu0 0.0
    %3114 = vmatprep.subr.mxu0 0.0
    %3115 = vmatpush1.msra.mxu0 0.0
    %3116 = vmatprep.mubr.f32.mxu0 0.0
    %3117 = vmatmul.mubr.f32.gmra.mrb[0].mxu0 %v3028
    %v3118 = vpop.f32.mrb[0].mxu0
    %v3119 = vadd.f32 %v3050, %v3118
    %v3120 = vpop.f32.mrb[0].mxu0
    %3121 = vdwg.mxu0
    %3122 = vst [vmem:[%s7] sm:$0xff] %v3119
    // Predicated region
    $region34: #{lstm_net_forward.1} parent=1 // pred_check
      _
    $region35: #{lstm_net_forward.1} parent=1 // pred_check_branch
      %3124 = sbr.rel (0) target = $region37
    $region36: #{lstm_net_forward.1} parent=1 // pred_region
      _
    $region37: #{lstm_net_forward.1} parent=1 // pred_fallthru
      _
    // Predicated region
    $region38: #{lstm_net_forward.1} parent=1 // pred_check
      _
    $region39: #{lstm_net_forward.1} parent=1 // pred_check_branch
      %3126 = sbr.rel (0) target = $region41
    $region40: #{lstm_net_forward.1} parent=1 // pred_region
      _
    $region41: #{lstm_net_forward.1} parent=1 // pred_fallthru
      _
    // Predicated region
    $region42: #{lstm_net_forward.1} parent=1 // pred_check
      _
    $region43: #{lstm_net_forward.1} parent=1 // pred_check_branch
      %3128 = sbr.rel (0) target = $region45
    $region44: #{lstm_net_forward.1} parent=1 // pred_region
      _
    $region45: #{lstm_net_forward.1} parent=1 // pred_fallthru
      _
    // Predicated region
    $region46: #{lstm_net_forward.1} parent=1 // pred_check
      _
    $region47: #{lstm_net_forward.1} parent=1 // pred_check_branch
      %3130 = sbr.rel (0) target = $region49
    $region48: #{lstm_net_forward.1} parent=1 // pred_region
      _
    $region49: #{lstm_net_forward.1} parent=1 // pred_fallthru
      _
    // Predicated region
    $region50: #{lstm_net_forward.1} parent=1 // pred_check
      _
    $region51: #{lstm_net_forward.1} parent=1 // pred_check_branch
      %3132 = sbr.rel (0) target = $region53
    $region52: #{lstm_net_forward.1} parent=1 // pred_region
      _
    $region53: #{lstm_net_forward.1} parent=1 // pred_fallthru
      _
    // Predicated region
    $region54: #{lstm_net_forward.1} parent=1 // pred_check
      _
    $region55: #{lstm_net_forward.1} parent=1 // pred_check_branch
      %3134 = sbr.rel (0) target = $region57
    $region56: #{lstm_net_forward.1} parent=1 // pred_region
      _
    $region57: #{lstm_net_forward.1} parent=1 // pred_fallthru
      _
    %3135 = vsyncpa [#allocation3], 1

</llo_original>
